<compile_context>
chip_gen: v7x
topology: tpu7x:2x2x1
jax: 0.10.0
libtpu: 0.0.40
codegen_flags: <defaults>
</compile_context>

<pallas_src>
import functools

import jax
import jax.numpy as jnp
from jax import lax
from jax.experimental import pallas as pl
from jax.experimental.pallas import tpu as pltpu

LANE = 128  # lane width; the feature dim (32) is zero-padded up to a multiple of this


# ----------------------------- small shared helpers ---------------------------------

def _vmem():
    return pl.BlockSpec(memory_space=pltpu.MemorySpace.VMEM)


def _elu(z):
    # nn.ELU(alpha=1); exp only ever sees z<=0 so it cannot overflow.
    return jnp.where(z > 0.0, z, jnp.exp(jnp.minimum(z, 0.0)) - 1.0)


def _sigmoid(z):
    # Scores are O(1); the simple form is fine in f32 (very negative z -> 0).
    return 1.0 / (1.0 + jnp.exp(-z))


def _gcn_tail(gh, wt_bf16, b):
    # ELU(gh @ W^T + b): bf16 MXU operands, f32 accumulation, f32 elementwise.
    z = jnp.dot(gh.astype(jnp.bfloat16), wt_bf16,
                preferred_element_type=jnp.float32) + b
    return _elu(z)


def _topk_select(scores, kk):
    """In-kernel top-k over a (1, n) f32 score row via iterative argmax.

    Returns (sel, selT): sel is (kk, n) one-hot rows (row t selects the t-th largest
    score, smallest index on ties); selT is its (n, kk) transpose, built directly with
    iotas (lane-dense, no transpose op).  Tie ordering may differ from torch.topk, but
    the final network outputs are invariant to the ordering (pooling is a node
    relabeling that the unpool scatter undoes).
    """
    n = scores.shape[1]
    lane_f = lax.broadcasted_iota(jnp.int32, (1, n), 1).astype(jnp.float32)
    row_k = lax.broadcasted_iota(jnp.int32, (kk, n), 0)
    col_k = lax.broadcasted_iota(jnp.int32, (n, kk), 1)
    row_nf = lax.broadcasted_iota(jnp.int32, (n, kk), 0).astype(jnp.float32)
    sel = jnp.zeros((kk, n), jnp.float32)
    selT = jnp.zeros((n, kk), jnp.float32)
    s = scores
    # TODO(synk): for chunk_size~250 (kk up to ~225) move this static unroll to a
    # lax.fori_loop writing one-hot rows into a VMEM scratch ref.
    for t in range(kk):
        m = jnp.max(s, axis=1, keepdims=True)                                 # (1, 1)
        idx = jnp.min(jnp.where(s >= m, lane_f, jnp.float32(n)),
                      axis=1, keepdims=True)                                  # (1, 1)
        onehot = (lane_f == idx).astype(jnp.float32)                          # (1, n)
        sel = jnp.where(row_k == t, onehot, sel)
        selT = jnp.where((col_k == t) & (row_nf == idx), jnp.float32(1.0), selT)
        s = jnp.where(onehot > 0.5, jnp.float32(-1e30), s)
    return sel, selT


# --------------------------------- fused kernel --------------------------------------

def _make_kernel(sizes, dpad):
    """Whole GraphUnet forward (down + bottom + up) as one kernel body."""
    l_n = len(sizes) - 1
    bf16 = jnp.bfloat16

    def kernel(x_ref, dwt_ref, db_ref, pw_ref, pb_ref, uwt_ref, ub_ref,
               bwt_ref, bb_ref, *out_refs):
        h = x_ref[...]                     # (n0, dpad) f32; lane padding is exactly 0
        org_h = h

        # `g is None` encodes "exactly the identity adjacency" (the only adjacency the
        # module ever constructs).  With an identity base: g @ h == h,
        # bin_square(I) == I and sel @ I @ sel^T == I_kk with unit row sums, so the
        # pooled adjacency stays exactly the identity at every level and all (n, n)
        # adjacency matmuls are skipped.
        g = None
        adj, selTs, down_outs = [], [], []

        # ------------------------------- down path -------------------------------
        for i in range(l_n):
            gh = (h if g is None
                  else jnp.dot(g.astype(bf16), h.astype(bf16),
                               preferred_element_type=jnp.float32))
            h = _gcn_tail(gh, dwt_ref[i], db_ref[i])             # (sizes[i], dpad) f32
            adj.append(g)
            down_outs.append(h)

            # Pool scores kept fully in f32 so top-k selection matches the reference.
            z = lax.dot_general(pw_ref[i], h, (((1,), (1,)), ((), ())),
                                preferred_element_type=jnp.float32) + pb_ref[i]
            scores = _sigmoid(z)                                  # (1, sizes[i]) f32
            kk = sizes[i + 1]
            sel, selT = _topk_select(scores, kk)
            selTs.append(selT)

            # new_h = h[idx] * values  ==  (sel @ h) * vals   (vals exact in f32)
            vals = jnp.sum(sel * scores, axis=1, keepdims=True)   # (kk, 1) f32
            new_h = jnp.dot(sel.astype(bf16), h.astype(bf16),
                            preferred_element_type=jnp.float32) * vals

            if g is None:
                g = None   # pooled adjacency stays exactly the identity (see above)
            else:
                # General adjacency path (NOT exercised: generate_adj_matrix only
                # builds torch.eye).  un_g = bool(bool(g) @ bool(g)); restrict; norm_g.
                ung = (g != 0.0).astype(bf16)
                ung = (jnp.dot(ung, ung, preferred_element_type=jnp.float32)
                       != 0.0).astype(bf16)
                sub = jnp.dot(sel.astype(bf16), ung,
                              preferred_element_type=jnp.float32)          # (kk, n)
                sub = jnp.dot(sub.astype(bf16), selT.astype(bf16),
                              preferred_element_type=jnp.float32)          # (kk, kk)
                # norm_g quirk (kept on purpose): PyTorch divides column j by the row
                # sum of row j; sub is symmetric here, so column sums == row sums and a
                # sublane reduce suffices.  Divides by zero (NaN) if a node is isolated,
                # which only a self-loop base adjacency prevents.
                deg = jnp.sum(sub, axis=0, keepdims=True)                   # (1, kk)
                g = sub * pl.reciprocal(deg, approx=True)
            h = new_h

        # ------------------------------- bottom GCN -------------------------------
        gh = (h if g is None
              else jnp.dot(g.astype(bf16), h.astype(bf16),
                           preferred_element_type=jnp.float32))
        h = _gcn_tail(gh, bwt_ref[...], bb_ref[...])

        # -------------------------------- up path ---------------------------------
        for i in range(l_n):
            up_idx = l_n - 1 - i
            selT = selTs[up_idx]           # (sizes[up_idx], sizes[up_idx+1]) one-hot
            g_up = adj[up_idx]
            # Unpool: new_h = zeros; new_h[idx] = h   ==   selT @ h (one-hot scatter).
            h_full = jnp.dot(selT.astype(bf16), h.astype(bf16),
                             preferred_element_type=jnp.float32)
            gh = (h_full if g_up is None
                  else jnp.dot(g_up.astype(bf16), h_full.astype(bf16),
                               preferred_element_type=jnp.float32))
            h = _gcn_tail(gh, uwt_ref[i], ub_ref[i]) + down_outs[up_idx]
            out_refs[i][...] = h
        out_refs[l_n][...] = h + org_h

    return kernel


def _cost_estimate(sizes, dpad):
    l_n = len(sizes) - 1
    ns = list(sizes[:l_n]) + [sizes[l_n]] + list(reversed(sizes[:l_n]))
    flops = sum(2 * n * dpad * dpad for n in ns)                       # GCN weight matmuls
    flops += 2 * sum(2 * sizes[i + 1] * sizes[i] * dpad for i in range(l_n))  # gather/scatter
    transcend = sum(n * dpad for n in ns) + sum(sizes[:l_n])           # ELU + sigmoid
    w_bytes = (2 * l_n + 1) * dpad * dpad * 2 + (3 * l_n + 1) * dpad * 4 + l_n * 4
    io_bytes = 4 * dpad * (2 * sizes[0] + sum(sizes[:l_n]))
    return pl.CostEstimate(flops=int(flops), transcendentals=int(transcend),
                           bytes_accessed=int(w_bytes + io_bytes))


# ------------------------------------ forward ----------------------------------------

def graph_unet_forward(x, params, ks):
    n0, dim = x.shape
    dpad = params["down_wt"].shape[-1]
    assert dim <= dpad
    l_n = len(ks)

    # Static per-level node counts (shapes must be static on TPU).
    sizes = [n0]
    for k in ks:
        sizes.append(max(2, int(k * sizes[-1])))

    # Lane-dense padded features; padding stays exactly zero through the whole net
    # (weights / biases are zero-padded, ELU(0) = 0, one-hot gathers preserve zeros).
    h0 = jnp.zeros((n0, dpad), jnp.float32).at[:, :dim].set(x.astype(jnp.float32))

    out_shapes = tuple(
        jax.ShapeDtypeStruct((sizes[l_n - 1 - i], dpad), jnp.float32) for i in range(l_n)
    ) + (jax.ShapeDtypeStruct((n0, dpad), jnp.float32),)

    hs_padded = pl.pallas_call(
        _make_kernel(tuple(sizes), dpad),
        out_shape=out_shapes,
        in_specs=[_vmem() for _ in range(9)],
        out_specs=tuple(_vmem() for _ in out_shapes),
        compiler_params=pltpu.CompilerParams(vmem_limit_bytes=8 * 1024 * 1024),
        cost_estimate=_cost_estimate(sizes, dpad),
    )(h0,
      params["down_wt"], params["down_b"],
      params["pool_w"], params["pool_b"],
      params["up_wt"], params["up_b"],
      params["bottom_wt"], params["bottom_b"])

    # Strip the lane padding that was carried through the net.
    return [hp[:, :dim] for hp in hs_padded]


# ------------------------------ parameter init / prep ---------------------------------

def init_params(key, chunk_size, dim, l_n):
    """Random params, pre-transposed / pre-padded / pre-cast (bf16 MXU weights) once."""
    dpad = ((dim + LANE - 1) // LANE) * LANE
    n_keys = 6 * l_n + 3   # (down + pool + up) * 2 keys each per level + bottom * 2 + A
    keys = iter(jax.random.split(key, n_keys))

    def linear(out_dim, in_dim, scale=0.1):
        w = scale * jax.random.normal(next(keys), (out_dim, in_dim), jnp.float32)
        b = scale * jax.random.normal(next(keys), (out_dim,), jnp.float32)
        return w, b

    def pad_wt(w):    # (dim, dim) -> W^T zero-padded to (dpad, dpad), bf16 (MXU operand)
        wt = jnp.zeros((dpad, dpad), jnp.float32).at[:dim, :dim].set(w.T)
        return wt.astype(jnp.bfloat16)

    def pad_b(b):     # (dim,) -> (1, dpad) f32 row
        return jnp.zeros((1, dpad), jnp.float32).at[0, :dim].set(b)

    down_wt, down_b, pool_w, pool_b, up_wt, up_b = [], [], [], [], [], []
    for _ in range(l_n):
        w, b = linear(dim, dim)
        down_wt.append(pad_wt(w)); down_b.append(pad_b(b))
        wp, bp = linear(1, dim)
        pool_w.append(jnp.zeros((1, dpad), jnp.float32).at[0, :dim].set(wp[0]))
        pool_b.append(bp.reshape(1, 1).astype(jnp.float32))
        w, b = linear(dim, dim)
        up_wt.append(pad_wt(w)); up_b.append(pad_b(b))
    wb, bb = linear(dim, dim)

    params = {
        "down_wt": jnp.stack(down_wt),   # (l_n, dpad, dpad) bf16
        "down_b":  jnp.stack(down_b),    # (l_n, 1, dpad)    f32
        "pool_w":  jnp.stack(pool_w),    # (l_n, 1, dpad)    f32 (score path stays f32)
        "pool_b":  jnp.stack(pool_b),    # (l_n, 1, 1)       f32
        "up_wt":   jnp.stack(up_wt),     # (l_n, dpad, dpad) bf16
        "up_b":    jnp.stack(up_b),      # (l_n, 1, dpad)    f32
        "bottom_wt": pad_wt(wb),         # (dpad, dpad)      bf16
        "bottom_b":  pad_b(bb),          # (1, dpad)         f32
    }
    # A: (chunk_size, chunk_size), Xavier-normal-like; unused by forward (as in source).
    std = (2.0 / (chunk_size + chunk_size)) ** 0.5
    params["A"] = std * jax.random.normal(next(keys), (chunk_size, chunk_size),
                                          jnp.float32)
    return params


# ----------------------------------------- main ----------------------------------------

if __name__ == "__main__":
    chunk_size = 16    # small synthetic size (original default 250)
    dim = 32
    ks = [0.9, 0.8, 0.7]

    key = jax.random.PRNGKey(0)
    k_x, k_p = jax.random.split(key)
    x = jax.random.normal(k_x, (chunk_size, dim), jnp.float32)
    params = init_params(k_p, chunk_size, dim, len(ks))

    fwd = jax.jit(functools.partial(graph_unet_forward, ks=tuple(ks)))
    hs = jax.block_until_ready(fwd(x, params))

    # Expected shapes: up outputs grow back toward chunk_size, final is chunk_size.
    sizes = [chunk_size]
    for k in ks:
        sizes.append(max(2, int(k * sizes[-1])))
    expected = [(sizes[len(ks) - 1 - i], dim) for i in range(len(ks))] + [(chunk_size, dim)]

    assert len(hs) == len(ks) + 1
    for h, shp in zip(hs, expected):
        assert h.shape == shp, (h.shape, shp)
        assert bool(jnp.all(jnp.isfinite(h)))
    print("KERNEL_OK")
</pallas_src>

<mosaic_0001>
module attributes {stable_mosaic.version = 11 : i64} {
  func.func @kernel(%arg0: memref<16x128xf32, #tpu.memory_space<vmem>>, %arg1: memref<3x128x128xbf16, #tpu.memory_space<vmem>>, %arg2: memref<3x1x128xf32, #tpu.memory_space<vmem>>, %arg3: memref<3x1x128xf32, #tpu.memory_space<vmem>>, %arg4: memref<3x1x1xf32, #tpu.memory_space<vmem>>, %arg5: memref<3x128x128xbf16, #tpu.memory_space<vmem>>, %arg6: memref<3x1x128xf32, #tpu.memory_space<vmem>>, %arg7: memref<128x128xbf16, #tpu.memory_space<vmem>>, %arg8: memref<1x128xf32, #tpu.memory_space<vmem>>, %arg9: memref<11x128xf32, #tpu.memory_space<vmem>>, %arg10: memref<14x128xf32, #tpu.memory_space<vmem>>, %arg11: memref<16x128xf32, #tpu.memory_space<vmem>>, %arg12: memref<16x128xf32, #tpu.memory_space<vmem>>) attributes {dimension_semantics = [], scalar_prefetch = 0 : i64, scratch_operands = 0 : i64, tpu.core_type = #tpu.core_type<tc>} {
    %c0 = arith.constant 0 : index
    %c0_0 = arith.constant 0 : index
    %0 = vector.load %arg0[%c0, %c0_0] : memref<16x128xf32, #tpu.memory_space<vmem>>, vector<16x128xf32>
    %c0_1 = arith.constant 0 : index
    %c0_2 = arith.constant 0 : index
    %c0_3 = arith.constant 0 : index
    %1 = vector.load %arg1[%c0_1, %c0_2, %c0_3] : memref<3x128x128xbf16, #tpu.memory_space<vmem>>, vector<1x128x128xbf16>
    %2 = vector.shape_cast %1 : vector<1x128x128xbf16> to vector<128x128xbf16>
    %c0_4 = arith.constant 0 : index
    %c0_5 = arith.constant 0 : index
    %c0_6 = arith.constant 0 : index
    %3 = vector.load %arg2[%c0_4, %c0_5, %c0_6] : memref<3x1x128xf32, #tpu.memory_space<vmem>>, vector<1x1x128xf32>
    %4 = vector.shape_cast %3 : vector<1x1x128xf32> to vector<1x128xf32>
    %5 = arith.truncf %0 : vector<16x128xf32> to vector<16x128xbf16>
    %cst = arith.constant dense<0.000000e+00> : vector<16x128xf32>
    %6 = tpu.matmul %5, %2, %cst {dimension_numbers = #tpu.dot_dimension_numbers<[1], [0], [0], [1], [0, 0, 1, 1], [], []>} : vector<16x128xbf16>, vector<128x128xbf16>, vector<16x128xf32> -> vector<16x128xf32>
    %7 = vector.broadcast %4 : vector<1x128xf32> to vector<16x128xf32>
    %8 = arith.addf %6, %7 : vector<16x128xf32>
    %cst_7 = arith.constant 0.000000e+00 : f32
    %9 = vector.broadcast %cst_7 : f32 to vector<16x128xf32>
    %10 = arith.cmpf ogt, %8, %9 : vector<16x128xf32>
    %cst_8 = arith.constant 0.000000e+00 : f32
    %11 = vector.broadcast %cst_8 : f32 to vector<16x128xf32>
    %12 = arith.minimumf %8, %11 : vector<16x128xf32>
    %13 = math.exp %12 : vector<16x128xf32>
    %cst_9 = arith.constant 1.000000e+00 : f32
    %14 = vector.broadcast %cst_9 : f32 to vector<16x128xf32>
    %15 = arith.subf %13, %14 : vector<16x128xf32>
    %16 = arith.select %10, %8, %15 : vector<16x128xi1>, vector<16x128xf32>
    %c0_10 = arith.constant 0 : index
    %c0_11 = arith.constant 0 : index
    %c0_12 = arith.constant 0 : index
    %17 = vector.load %arg3[%c0_10, %c0_11, %c0_12] : memref<3x1x128xf32, #tpu.memory_space<vmem>>, vector<1x1x128xf32>
    %18 = vector.shape_cast %17 : vector<1x1x128xf32> to vector<1x128xf32>
    %cst_13 = arith.constant dense<0.000000e+00> : vector<1x16xf32>
    %19 = tpu.matmul %18, %16, %cst_13 {dimension_numbers = #tpu.dot_dimension_numbers<[1], [1], [0], [0], [0, 0, 1, 0], [], []>} : vector<1x128xf32>, vector<16x128xf32>, vector<1x16xf32> -> vector<1x16xf32>
    %c0_14 = arith.constant 0 : index
    %c0_15 = arith.constant 0 : index
    %c0_16 = arith.constant 0 : index
    %20 = vector.load %arg4[%c0_14, %c0_15, %c0_16] : memref<3x1x1xf32, #tpu.memory_space<vmem>>, vector<1x1x1xf32>
    %21 = vector.shape_cast %20 : vector<1x1x1xf32> to vector<1x1xf32>
    %22 = vector.broadcast %21 : vector<1x1xf32> to vector<1x16xf32>
    %23 = arith.addf %19, %22 : vector<1x16xf32>
    %cst_17 = arith.constant 0.000000e+00 : f32
    %24 = vector.broadcast %cst_17 : f32 to vector<1x16xf32>
    %25 = arith.subf %24, %23 : vector<1x16xf32>
    %26 = math.exp %25 : vector<1x16xf32>
    %cst_18 = arith.constant 1.000000e+00 : f32
    %27 = vector.broadcast %cst_18 : f32 to vector<1x16xf32>
    %28 = arith.addf %27, %26 : vector<1x16xf32>
    %cst_19 = arith.constant 1.000000e+00 : f32
    %29 = vector.broadcast %cst_19 : f32 to vector<1x16xf32>
    %30 = arith.divf %29, %28 : vector<1x16xf32>
    %31 = tpu.iota {dimensions = array<i32: 1>} : vector<1x16xi32>
    %32 = arith.sitofp %31 : vector<1x16xi32> to vector<1x16xf32>
    %33 = tpu.iota {dimensions = array<i32: 0>} : vector<14x16xi32>
    %34 = tpu.iota {dimensions = array<i32: 1>} : vector<16x14xi32>
    %35 = tpu.iota {dimensions = array<i32: 0>} : vector<16x14xi32>
    %36 = arith.sitofp %35 : vector<16x14xi32> to vector<16x14xf32>
    %cst_20 = arith.constant 0.000000e+00 : f32
    %37 = vector.broadcast %cst_20 : f32 to vector<14x16xf32>
    %cst_21 = arith.constant 0.000000e+00 : f32
    %38 = vector.broadcast %cst_21 : f32 to vector<16x14xf32>
    %cst_22 = arith.constant dense<0xFF800000> : vector<1xf32>
    %39 = vector.multi_reduction <maximumf>, %30, %cst_22 [1] : vector<1x16xf32> to vector<1xf32>
    %40 = vector.shape_cast %39 : vector<1xf32> to vector<1x1xf32>
    %41 = vector.broadcast %40 : vector<1x1xf32> to vector<1x16xf32>
    %42 = arith.cmpf oge, %30, %41 : vector<1x16xf32>
    %cst_23 = arith.constant 1.600000e+01 : f32
    %43 = vector.broadcast %cst_23 : f32 to vector<1x16xf32>
    %44 = arith.select %42, %32, %43 : vector<1x16xi1>, vector<1x16xf32>
    %cst_24 = arith.constant dense<0x7F800000> : vector<1xf32>
    %45 = vector.multi_reduction <minimumf>, %44, %cst_24 [1] : vector<1x16xf32> to vector<1xf32>
    %46 = vector.shape_cast %45 : vector<1xf32> to vector<1x1xf32>
    %47 = vector.broadcast %46 : vector<1x1xf32> to vector<1x16xf32>
    %48 = arith.cmpf oeq, %32, %47 : vector<1x16xf32>
    %49 = arith.extui %48 : vector<1x16xi1> to vector<1x16xi32>
    %50 = arith.sitofp %49 : vector<1x16xi32> to vector<1x16xf32>
    %c0_i32 = arith.constant 0 : i32
    %51 = vector.broadcast %c0_i32 : i32 to vector<14x16xi32>
    %52 = arith.cmpi eq, %33, %51 : vector<14x16xi32>
    %53 = vector.shape_cast %50 : vector<1x16xf32> to vector<1x16xf32>
    %54 = vector.broadcast %53 : vector<1x16xf32> to vector<14x16xf32>
    %55 = arith.select %52, %54, %37 : vector<14x16xi1>, vector<14x16xf32>
    %c0_i32_25 = arith.constant 0 : i32
    %56 = vector.broadcast %c0_i32_25 : i32 to vector<16x14xi32>
    %57 = arith.cmpi eq, %34, %56 : vector<16x14xi32>
    %58 = vector.broadcast %46 : vector<1x1xf32> to vector<16x14xf32>
    %59 = arith.cmpf oeq, %36, %58 : vector<16x14xf32>
    %60 = arith.andi %57, %59 : vector<16x14xi1>
    %cst_26 = arith.constant 1.000000e+00 : f32
    %61 = vector.broadcast %cst_26 : f32 to vector<16x14xf32>
    %62 = arith.select %60, %61, %38 : vector<16x14xi1>, vector<16x14xf32>
    %cst_27 = arith.constant 5.000000e-01 : f32
    %63 = vector.broadcast %cst_27 : f32 to vector<1x16xf32>
    %64 = arith.cmpf ogt, %50, %63 : vector<1x16xf32>
    %cst_28 = arith.constant -1.000000e+30 : f32
    %65 = vector.broadcast %cst_28 : f32 to vector<1x16xf32>
    %66 = arith.select %64, %65, %30 : vector<1x16xi1>, vector<1x16xf32>
    %cst_29 = arith.constant dense<0xFF800000> : vector<1xf32>
    %67 = vector.multi_reduction <maximumf>, %66, %cst_29 [1] : vector<1x16xf32> to vector<1xf32>
    %68 = vector.shape_cast %67 : vector<1xf32> to vector<1x1xf32>
    %69 = vector.broadcast %68 : vector<1x1xf32> to vector<1x16xf32>
    %70 = arith.cmpf oge, %66, %69 : vector<1x16xf32>
    %cst_30 = arith.constant 1.600000e+01 : f32
    %71 = vector.broadcast %cst_30 : f32 to vector<1x16xf32>
    %72 = arith.select %70, %32, %71 : vector<1x16xi1>, vector<1x16xf32>
    %cst_31 = arith.constant dense<0x7F800000> : vector<1xf32>
    %73 = vector.multi_reduction <minimumf>, %72, %cst_31 [1] : vector<1x16xf32> to vector<1xf32>
    %74 = vector.shape_cast %73 : vector<1xf32> to vector<1x1xf32>
    %75 = vector.broadcast %74 : vector<1x1xf32> to vector<1x16xf32>
    %76 = arith.cmpf oeq, %32, %75 : vector<1x16xf32>
    %77 = arith.extui %76 : vector<1x16xi1> to vector<1x16xi32>
    %78 = arith.sitofp %77 : vector<1x16xi32> to vector<1x16xf32>
    %c1_i32 = arith.constant 1 : i32
    %79 = vector.broadcast %c1_i32 : i32 to vector<14x16xi32>
    %80 = arith.cmpi eq, %33, %79 : vector<14x16xi32>
    %81 = vector.shape_cast %78 : vector<1x16xf32> to vector<1x16xf32>
    %82 = vector.broadcast %81 : vector<1x16xf32> to vector<14x16xf32>
    %83 = arith.select %80, %82, %55 : vector<14x16xi1>, vector<14x16xf32>
    %c1_i32_32 = arith.constant 1 : i32
    %84 = vector.broadcast %c1_i32_32 : i32 to vector<16x14xi32>
    %85 = arith.cmpi eq, %34, %84 : vector<16x14xi32>
    %86 = vector.broadcast %74 : vector<1x1xf32> to vector<16x14xf32>
    %87 = arith.cmpf oeq, %36, %86 : vector<16x14xf32>
    %88 = arith.andi %85, %87 : vector<16x14xi1>
    %cst_33 = arith.constant 1.000000e+00 : f32
    %89 = vector.broadcast %cst_33 : f32 to vector<16x14xf32>
    %90 = arith.select %88, %89, %62 : vector<16x14xi1>, vector<16x14xf32>
    %cst_34 = arith.constant 5.000000e-01 : f32
    %91 = vector.broadcast %cst_34 : f32 to vector<1x16xf32>
    %92 = arith.cmpf ogt, %78, %91 : vector<1x16xf32>
    %cst_35 = arith.constant -1.000000e+30 : f32
    %93 = vector.broadcast %cst_35 : f32 to vector<1x16xf32>
    %94 = arith.select %92, %93, %66 : vector<1x16xi1>, vector<1x16xf32>
    %cst_36 = arith.constant dense<0xFF800000> : vector<1xf32>
    %95 = vector.multi_reduction <maximumf>, %94, %cst_36 [1] : vector<1x16xf32> to vector<1xf32>
    %96 = vector.shape_cast %95 : vector<1xf32> to vector<1x1xf32>
    %97 = vector.broadcast %96 : vector<1x1xf32> to vector<1x16xf32>
    %98 = arith.cmpf oge, %94, %97 : vector<1x16xf32>
    %cst_37 = arith.constant 1.600000e+01 : f32
    %99 = vector.broadcast %cst_37 : f32 to vector<1x16xf32>
    %100 = arith.select %98, %32, %99 : vector<1x16xi1>, vector<1x16xf32>
    %cst_38 = arith.constant dense<0x7F800000> : vector<1xf32>
    %101 = vector.multi_reduction <minimumf>, %100, %cst_38 [1] : vector<1x16xf32> to vector<1xf32>
    %102 = vector.shape_cast %101 : vector<1xf32> to vector<1x1xf32>
    %103 = vector.broadcast %102 : vector<1x1xf32> to vector<1x16xf32>
    %104 = arith.cmpf oeq, %32, %103 : vector<1x16xf32>
    %105 = arith.extui %104 : vector<1x16xi1> to vector<1x16xi32>
    %106 = arith.sitofp %105 : vector<1x16xi32> to vector<1x16xf32>
    %c2_i32 = arith.constant 2 : i32
    %107 = vector.broadcast %c2_i32 : i32 to vector<14x16xi32>
    %108 = arith.cmpi eq, %33, %107 : vector<14x16xi32>
    %109 = vector.shape_cast %106 : vector<1x16xf32> to vector<1x16xf32>
    %110 = vector.broadcast %109 : vector<1x16xf32> to vector<14x16xf32>
    %111 = arith.select %108, %110, %83 : vector<14x16xi1>, vector<14x16xf32>
    %c2_i32_39 = arith.constant 2 : i32
    %112 = vector.broadcast %c2_i32_39 : i32 to vector<16x14xi32>
    %113 = arith.cmpi eq, %34, %112 : vector<16x14xi32>
    %114 = vector.broadcast %102 : vector<1x1xf32> to vector<16x14xf32>
    %115 = arith.cmpf oeq, %36, %114 : vector<16x14xf32>
    %116 = arith.andi %113, %115 : vector<16x14xi1>
    %cst_40 = arith.constant 1.000000e+00 : f32
    %117 = vector.broadcast %cst_40 : f32 to vector<16x14xf32>
    %118 = arith.select %116, %117, %90 : vector<16x14xi1>, vector<16x14xf32>
    %cst_41 = arith.constant 5.000000e-01 : f32
    %119 = vector.broadcast %cst_41 : f32 to vector<1x16xf32>
    %120 = arith.cmpf ogt, %106, %119 : vector<1x16xf32>
    %cst_42 = arith.constant -1.000000e+30 : f32
    %121 = vector.broadcast %cst_42 : f32 to vector<1x16xf32>
    %122 = arith.select %120, %121, %94 : vector<1x16xi1>, vector<1x16xf32>
    %cst_43 = arith.constant dense<0xFF800000> : vector<1xf32>
    %123 = vector.multi_reduction <maximumf>, %122, %cst_43 [1] : vector<1x16xf32> to vector<1xf32>
    %124 = vector.shape_cast %123 : vector<1xf32> to vector<1x1xf32>
    %125 = vector.broadcast %124 : vector<1x1xf32> to vector<1x16xf32>
    %126 = arith.cmpf oge, %122, %125 : vector<1x16xf32>
    %cst_44 = arith.constant 1.600000e+01 : f32
    %127 = vector.broadcast %cst_44 : f32 to vector<1x16xf32>
    %128 = arith.select %126, %32, %127 : vector<1x16xi1>, vector<1x16xf32>
    %cst_45 = arith.constant dense<0x7F800000> : vector<1xf32>
    %129 = vector.multi_reduction <minimumf>, %128, %cst_45 [1] : vector<1x16xf32> to vector<1xf32>
    %130 = vector.shape_cast %129 : vector<1xf32> to vector<1x1xf32>
    %131 = vector.broadcast %130 : vector<1x1xf32> to vector<1x16xf32>
    %132 = arith.cmpf oeq, %32, %131 : vector<1x16xf32>
    %133 = arith.extui %132 : vector<1x16xi1> to vector<1x16xi32>
    %134 = arith.sitofp %133 : vector<1x16xi32> to vector<1x16xf32>
    %c3_i32 = arith.constant 3 : i32
    %135 = vector.broadcast %c3_i32 : i32 to vector<14x16xi32>
    %136 = arith.cmpi eq, %33, %135 : vector<14x16xi32>
    %137 = vector.shape_cast %134 : vector<1x16xf32> to vector<1x16xf32>
    %138 = vector.broadcast %137 : vector<1x16xf32> to vector<14x16xf32>
    %139 = arith.select %136, %138, %111 : vector<14x16xi1>, vector<14x16xf32>
    %c3_i32_46 = arith.constant 3 : i32
    %140 = vector.broadcast %c3_i32_46 : i32 to vector<16x14xi32>
    %141 = arith.cmpi eq, %34, %140 : vector<16x14xi32>
    %142 = vector.broadcast %130 : vector<1x1xf32> to vector<16x14xf32>
    %143 = arith.cmpf oeq, %36, %142 : vector<16x14xf32>
    %144 = arith.andi %141, %143 : vector<16x14xi1>
    %cst_47 = arith.constant 1.000000e+00 : f32
    %145 = vector.broadcast %cst_47 : f32 to vector<16x14xf32>
    %146 = arith.select %144, %145, %118 : vector<16x14xi1>, vector<16x14xf32>
    %cst_48 = arith.constant 5.000000e-01 : f32
    %147 = vector.broadcast %cst_48 : f32 to vector<1x16xf32>
    %148 = arith.cmpf ogt, %134, %147 : vector<1x16xf32>
    %cst_49 = arith.constant -1.000000e+30 : f32
    %149 = vector.broadcast %cst_49 : f32 to vector<1x16xf32>
    %150 = arith.select %148, %149, %122 : vector<1x16xi1>, vector<1x16xf32>
    %cst_50 = arith.constant dense<0xFF800000> : vector<1xf32>
    %151 = vector.multi_reduction <maximumf>, %150, %cst_50 [1] : vector<1x16xf32> to vector<1xf32>
    %152 = vector.shape_cast %151 : vector<1xf32> to vector<1x1xf32>
    %153 = vector.broadcast %152 : vector<1x1xf32> to vector<1x16xf32>
    %154 = arith.cmpf oge, %150, %153 : vector<1x16xf32>
    %cst_51 = arith.constant 1.600000e+01 : f32
    %155 = vector.broadcast %cst_51 : f32 to vector<1x16xf32>
    %156 = arith.select %154, %32, %155 : vector<1x16xi1>, vector<1x16xf32>
    %cst_52 = arith.constant dense<0x7F800000> : vector<1xf32>
    %157 = vector.multi_reduction <minimumf>, %156, %cst_52 [1] : vector<1x16xf32> to vector<1xf32>
    %158 = vector.shape_cast %157 : vector<1xf32> to vector<1x1xf32>
    %159 = vector.broadcast %158 : vector<1x1xf32> to vector<1x16xf32>
    %160 = arith.cmpf oeq, %32, %159 : vector<1x16xf32>
    %161 = arith.extui %160 : vector<1x16xi1> to vector<1x16xi32>
    %162 = arith.sitofp %161 : vector<1x16xi32> to vector<1x16xf32>
    %c4_i32 = arith.constant 4 : i32
    %163 = vector.broadcast %c4_i32 : i32 to vector<14x16xi32>
    %164 = arith.cmpi eq, %33, %163 : vector<14x16xi32>
    %165 = vector.shape_cast %162 : vector<1x16xf32> to vector<1x16xf32>
    %166 = vector.broadcast %165 : vector<1x16xf32> to vector<14x16xf32>
    %167 = arith.select %164, %166, %139 : vector<14x16xi1>, vector<14x16xf32>
    %c4_i32_53 = arith.constant 4 : i32
    %168 = vector.broadcast %c4_i32_53 : i32 to vector<16x14xi32>
    %169 = arith.cmpi eq, %34, %168 : vector<16x14xi32>
    %170 = vector.broadcast %158 : vector<1x1xf32> to vector<16x14xf32>
    %171 = arith.cmpf oeq, %36, %170 : vector<16x14xf32>
    %172 = arith.andi %169, %171 : vector<16x14xi1>
    %cst_54 = arith.constant 1.000000e+00 : f32
    %173 = vector.broadcast %cst_54 : f32 to vector<16x14xf32>
    %174 = arith.select %172, %173, %146 : vector<16x14xi1>, vector<16x14xf32>
    %cst_55 = arith.constant 5.000000e-01 : f32
    %175 = vector.broadcast %cst_55 : f32 to vector<1x16xf32>
    %176 = arith.cmpf ogt, %162, %175 : vector<1x16xf32>
    %cst_56 = arith.constant -1.000000e+30 : f32
    %177 = vector.broadcast %cst_56 : f32 to vector<1x16xf32>
    %178 = arith.select %176, %177, %150 : vector<1x16xi1>, vector<1x16xf32>
    %cst_57 = arith.constant dense<0xFF800000> : vector<1xf32>
    %179 = vector.multi_reduction <maximumf>, %178, %cst_57 [1] : vector<1x16xf32> to vector<1xf32>
    %180 = vector.shape_cast %179 : vector<1xf32> to vector<1x1xf32>
    %181 = vector.broadcast %180 : vector<1x1xf32> to vector<1x16xf32>
    %182 = arith.cmpf oge, %178, %181 : vector<1x16xf32>
    %cst_58 = arith.constant 1.600000e+01 : f32
    %183 = vector.broadcast %cst_58 : f32 to vector<1x16xf32>
    %184 = arith.select %182, %32, %183 : vector<1x16xi1>, vector<1x16xf32>
    %cst_59 = arith.constant dense<0x7F800000> : vector<1xf32>
    %185 = vector.multi_reduction <minimumf>, %184, %cst_59 [1] : vector<1x16xf32> to vector<1xf32>
    %186 = vector.shape_cast %185 : vector<1xf32> to vector<1x1xf32>
    %187 = vector.broadcast %186 : vector<1x1xf32> to vector<1x16xf32>
    %188 = arith.cmpf oeq, %32, %187 : vector<1x16xf32>
    %189 = arith.extui %188 : vector<1x16xi1> to vector<1x16xi32>
    %190 = arith.sitofp %189 : vector<1x16xi32> to vector<1x16xf32>
    %c5_i32 = arith.constant 5 : i32
    %191 = vector.broadcast %c5_i32 : i32 to vector<14x16xi32>
    %192 = arith.cmpi eq, %33, %191 : vector<14x16xi32>
    %193 = vector.shape_cast %190 : vector<1x16xf32> to vector<1x16xf32>
    %194 = vector.broadcast %193 : vector<1x16xf32> to vector<14x16xf32>
    %195 = arith.select %192, %194, %167 : vector<14x16xi1>, vector<14x16xf32>
    %c5_i32_60 = arith.constant 5 : i32
    %196 = vector.broadcast %c5_i32_60 : i32 to vector<16x14xi32>
    %197 = arith.cmpi eq, %34, %196 : vector<16x14xi32>
    %198 = vector.broadcast %186 : vector<1x1xf32> to vector<16x14xf32>
    %199 = arith.cmpf oeq, %36, %198 : vector<16x14xf32>
    %200 = arith.andi %197, %199 : vector<16x14xi1>
    %cst_61 = arith.constant 1.000000e+00 : f32
    %201 = vector.broadcast %cst_61 : f32 to vector<16x14xf32>
    %202 = arith.select %200, %201, %174 : vector<16x14xi1>, vector<16x14xf32>
    %cst_62 = arith.constant 5.000000e-01 : f32
    %203 = vector.broadcast %cst_62 : f32 to vector<1x16xf32>
    %204 = arith.cmpf ogt, %190, %203 : vector<1x16xf32>
    %cst_63 = arith.constant -1.000000e+30 : f32
    %205 = vector.broadcast %cst_63 : f32 to vector<1x16xf32>
    %206 = arith.select %204, %205, %178 : vector<1x16xi1>, vector<1x16xf32>
    %cst_64 = arith.constant dense<0xFF800000> : vector<1xf32>
    %207 = vector.multi_reduction <maximumf>, %206, %cst_64 [1] : vector<1x16xf32> to vector<1xf32>
    %208 = vector.shape_cast %207 : vector<1xf32> to vector<1x1xf32>
    %209 = vector.broadcast %208 : vector<1x1xf32> to vector<1x16xf32>
    %210 = arith.cmpf oge, %206, %209 : vector<1x16xf32>
    %cst_65 = arith.constant 1.600000e+01 : f32
    %211 = vector.broadcast %cst_65 : f32 to vector<1x16xf32>
    %212 = arith.select %210, %32, %211 : vector<1x16xi1>, vector<1x16xf32>
    %cst_66 = arith.constant dense<0x7F800000> : vector<1xf32>
    %213 = vector.multi_reduction <minimumf>, %212, %cst_66 [1] : vector<1x16xf32> to vector<1xf32>
    %214 = vector.shape_cast %213 : vector<1xf32> to vector<1x1xf32>
    %215 = vector.broadcast %214 : vector<1x1xf32> to vector<1x16xf32>
    %216 = arith.cmpf oeq, %32, %215 : vector<1x16xf32>
    %217 = arith.extui %216 : vector<1x16xi1> to vector<1x16xi32>
    %218 = arith.sitofp %217 : vector<1x16xi32> to vector<1x16xf32>
    %c6_i32 = arith.constant 6 : i32
    %219 = vector.broadcast %c6_i32 : i32 to vector<14x16xi32>
    %220 = arith.cmpi eq, %33, %219 : vector<14x16xi32>
    %221 = vector.shape_cast %218 : vector<1x16xf32> to vector<1x16xf32>
    %222 = vector.broadcast %221 : vector<1x16xf32> to vector<14x16xf32>
    %223 = arith.select %220, %222, %195 : vector<14x16xi1>, vector<14x16xf32>
    %c6_i32_67 = arith.constant 6 : i32
    %224 = vector.broadcast %c6_i32_67 : i32 to vector<16x14xi32>
    %225 = arith.cmpi eq, %34, %224 : vector<16x14xi32>
    %226 = vector.broadcast %214 : vector<1x1xf32> to vector<16x14xf32>
    %227 = arith.cmpf oeq, %36, %226 : vector<16x14xf32>
    %228 = arith.andi %225, %227 : vector<16x14xi1>
    %cst_68 = arith.constant 1.000000e+00 : f32
    %229 = vector.broadcast %cst_68 : f32 to vector<16x14xf32>
    %230 = arith.select %228, %229, %202 : vector<16x14xi1>, vector<16x14xf32>
    %cst_69 = arith.constant 5.000000e-01 : f32
    %231 = vector.broadcast %cst_69 : f32 to vector<1x16xf32>
    %232 = arith.cmpf ogt, %218, %231 : vector<1x16xf32>
    %cst_70 = arith.constant -1.000000e+30 : f32
    %233 = vector.broadcast %cst_70 : f32 to vector<1x16xf32>
    %234 = arith.select %232, %233, %206 : vector<1x16xi1>, vector<1x16xf32>
    %cst_71 = arith.constant dense<0xFF800000> : vector<1xf32>
    %235 = vector.multi_reduction <maximumf>, %234, %cst_71 [1] : vector<1x16xf32> to vector<1xf32>
    %236 = vector.shape_cast %235 : vector<1xf32> to vector<1x1xf32>
    %237 = vector.broadcast %236 : vector<1x1xf32> to vector<1x16xf32>
    %238 = arith.cmpf oge, %234, %237 : vector<1x16xf32>
    %cst_72 = arith.constant 1.600000e+01 : f32
    %239 = vector.broadcast %cst_72 : f32 to vector<1x16xf32>
    %240 = arith.select %238, %32, %239 : vector<1x16xi1>, vector<1x16xf32>
    %cst_73 = arith.constant dense<0x7F800000> : vector<1xf32>
    %241 = vector.multi_reduction <minimumf>, %240, %cst_73 [1] : vector<1x16xf32> to vector<1xf32>
    %242 = vector.shape_cast %241 : vector<1xf32> to vector<1x1xf32>
    %243 = vector.broadcast %242 : vector<1x1xf32> to vector<1x16xf32>
    %244 = arith.cmpf oeq, %32, %243 : vector<1x16xf32>
    %245 = arith.extui %244 : vector<1x16xi1> to vector<1x16xi32>
    %246 = arith.sitofp %245 : vector<1x16xi32> to vector<1x16xf32>
    %c7_i32 = arith.constant 7 : i32
    %247 = vector.broadcast %c7_i32 : i32 to vector<14x16xi32>
    %248 = arith.cmpi eq, %33, %247 : vector<14x16xi32>
    %249 = vector.shape_cast %246 : vector<1x16xf32> to vector<1x16xf32>
    %250 = vector.broadcast %249 : vector<1x16xf32> to vector<14x16xf32>
    %251 = arith.select %248, %250, %223 : vector<14x16xi1>, vector<14x16xf32>
    %c7_i32_74 = arith.constant 7 : i32
    %252 = vector.broadcast %c7_i32_74 : i32 to vector<16x14xi32>
    %253 = arith.cmpi eq, %34, %252 : vector<16x14xi32>
    %254 = vector.broadcast %242 : vector<1x1xf32> to vector<16x14xf32>
    %255 = arith.cmpf oeq, %36, %254 : vector<16x14xf32>
    %256 = arith.andi %253, %255 : vector<16x14xi1>
    %cst_75 = arith.constant 1.000000e+00 : f32
    %257 = vector.broadcast %cst_75 : f32 to vector<16x14xf32>
    %258 = arith.select %256, %257, %230 : vector<16x14xi1>, vector<16x14xf32>
    %cst_76 = arith.constant 5.000000e-01 : f32
    %259 = vector.broadcast %cst_76 : f32 to vector<1x16xf32>
    %260 = arith.cmpf ogt, %246, %259 : vector<1x16xf32>
    %cst_77 = arith.constant -1.000000e+30 : f32
    %261 = vector.broadcast %cst_77 : f32 to vector<1x16xf32>
    %262 = arith.select %260, %261, %234 : vector<1x16xi1>, vector<1x16xf32>
    %cst_78 = arith.constant dense<0xFF800000> : vector<1xf32>
    %263 = vector.multi_reduction <maximumf>, %262, %cst_78 [1] : vector<1x16xf32> to vector<1xf32>
    %264 = vector.shape_cast %263 : vector<1xf32> to vector<1x1xf32>
    %265 = vector.broadcast %264 : vector<1x1xf32> to vector<1x16xf32>
    %266 = arith.cmpf oge, %262, %265 : vector<1x16xf32>
    %cst_79 = arith.constant 1.600000e+01 : f32
    %267 = vector.broadcast %cst_79 : f32 to vector<1x16xf32>
    %268 = arith.select %266, %32, %267 : vector<1x16xi1>, vector<1x16xf32>
    %cst_80 = arith.constant dense<0x7F800000> : vector<1xf32>
    %269 = vector.multi_reduction <minimumf>, %268, %cst_80 [1] : vector<1x16xf32> to vector<1xf32>
    %270 = vector.shape_cast %269 : vector<1xf32> to vector<1x1xf32>
    %271 = vector.broadcast %270 : vector<1x1xf32> to vector<1x16xf32>
    %272 = arith.cmpf oeq, %32, %271 : vector<1x16xf32>
    %273 = arith.extui %272 : vector<1x16xi1> to vector<1x16xi32>
    %274 = arith.sitofp %273 : vector<1x16xi32> to vector<1x16xf32>
    %c8_i32 = arith.constant 8 : i32
    %275 = vector.broadcast %c8_i32 : i32 to vector<14x16xi32>
    %276 = arith.cmpi eq, %33, %275 : vector<14x16xi32>
    %277 = vector.shape_cast %274 : vector<1x16xf32> to vector<1x16xf32>
    %278 = vector.broadcast %277 : vector<1x16xf32> to vector<14x16xf32>
    %279 = arith.select %276, %278, %251 : vector<14x16xi1>, vector<14x16xf32>
    %c8_i32_81 = arith.constant 8 : i32
    %280 = vector.broadcast %c8_i32_81 : i32 to vector<16x14xi32>
    %281 = arith.cmpi eq, %34, %280 : vector<16x14xi32>
    %282 = vector.broadcast %270 : vector<1x1xf32> to vector<16x14xf32>
    %283 = arith.cmpf oeq, %36, %282 : vector<16x14xf32>
    %284 = arith.andi %281, %283 : vector<16x14xi1>
    %cst_82 = arith.constant 1.000000e+00 : f32
    %285 = vector.broadcast %cst_82 : f32 to vector<16x14xf32>
    %286 = arith.select %284, %285, %258 : vector<16x14xi1>, vector<16x14xf32>
    %cst_83 = arith.constant 5.000000e-01 : f32
    %287 = vector.broadcast %cst_83 : f32 to vector<1x16xf32>
    %288 = arith.cmpf ogt, %274, %287 : vector<1x16xf32>
    %cst_84 = arith.constant -1.000000e+30 : f32
    %289 = vector.broadcast %cst_84 : f32 to vector<1x16xf32>
    %290 = arith.select %288, %289, %262 : vector<1x16xi1>, vector<1x16xf32>
    %cst_85 = arith.constant dense<0xFF800000> : vector<1xf32>
    %291 = vector.multi_reduction <maximumf>, %290, %cst_85 [1] : vector<1x16xf32> to vector<1xf32>
    %292 = vector.shape_cast %291 : vector<1xf32> to vector<1x1xf32>
    %293 = vector.broadcast %292 : vector<1x1xf32> to vector<1x16xf32>
    %294 = arith.cmpf oge, %290, %293 : vector<1x16xf32>
    %cst_86 = arith.constant 1.600000e+01 : f32
    %295 = vector.broadcast %cst_86 : f32 to vector<1x16xf32>
    %296 = arith.select %294, %32, %295 : vector<1x16xi1>, vector<1x16xf32>
    %cst_87 = arith.constant dense<0x7F800000> : vector<1xf32>
    %297 = vector.multi_reduction <minimumf>, %296, %cst_87 [1] : vector<1x16xf32> to vector<1xf32>
    %298 = vector.shape_cast %297 : vector<1xf32> to vector<1x1xf32>
    %299 = vector.broadcast %298 : vector<1x1xf32> to vector<1x16xf32>
    %300 = arith.cmpf oeq, %32, %299 : vector<1x16xf32>
    %301 = arith.extui %300 : vector<1x16xi1> to vector<1x16xi32>
    %302 = arith.sitofp %301 : vector<1x16xi32> to vector<1x16xf32>
    %c9_i32 = arith.constant 9 : i32
    %303 = vector.broadcast %c9_i32 : i32 to vector<14x16xi32>
    %304 = arith.cmpi eq, %33, %303 : vector<14x16xi32>
    %305 = vector.shape_cast %302 : vector<1x16xf32> to vector<1x16xf32>
    %306 = vector.broadcast %305 : vector<1x16xf32> to vector<14x16xf32>
    %307 = arith.select %304, %306, %279 : vector<14x16xi1>, vector<14x16xf32>
    %c9_i32_88 = arith.constant 9 : i32
    %308 = vector.broadcast %c9_i32_88 : i32 to vector<16x14xi32>
    %309 = arith.cmpi eq, %34, %308 : vector<16x14xi32>
    %310 = vector.broadcast %298 : vector<1x1xf32> to vector<16x14xf32>
    %311 = arith.cmpf oeq, %36, %310 : vector<16x14xf32>
    %312 = arith.andi %309, %311 : vector<16x14xi1>
    %cst_89 = arith.constant 1.000000e+00 : f32
    %313 = vector.broadcast %cst_89 : f32 to vector<16x14xf32>
    %314 = arith.select %312, %313, %286 : vector<16x14xi1>, vector<16x14xf32>
    %cst_90 = arith.constant 5.000000e-01 : f32
    %315 = vector.broadcast %cst_90 : f32 to vector<1x16xf32>
    %316 = arith.cmpf ogt, %302, %315 : vector<1x16xf32>
    %cst_91 = arith.constant -1.000000e+30 : f32
    %317 = vector.broadcast %cst_91 : f32 to vector<1x16xf32>
    %318 = arith.select %316, %317, %290 : vector<1x16xi1>, vector<1x16xf32>
    %cst_92 = arith.constant dense<0xFF800000> : vector<1xf32>
    %319 = vector.multi_reduction <maximumf>, %318, %cst_92 [1] : vector<1x16xf32> to vector<1xf32>
    %320 = vector.shape_cast %319 : vector<1xf32> to vector<1x1xf32>
    %321 = vector.broadcast %320 : vector<1x1xf32> to vector<1x16xf32>
    %322 = arith.cmpf oge, %318, %321 : vector<1x16xf32>
    %cst_93 = arith.constant 1.600000e+01 : f32
    %323 = vector.broadcast %cst_93 : f32 to vector<1x16xf32>
    %324 = arith.select %322, %32, %323 : vector<1x16xi1>, vector<1x16xf32>
    %cst_94 = arith.constant dense<0x7F800000> : vector<1xf32>
    %325 = vector.multi_reduction <minimumf>, %324, %cst_94 [1] : vector<1x16xf32> to vector<1xf32>
    %326 = vector.shape_cast %325 : vector<1xf32> to vector<1x1xf32>
    %327 = vector.broadcast %326 : vector<1x1xf32> to vector<1x16xf32>
    %328 = arith.cmpf oeq, %32, %327 : vector<1x16xf32>
    %329 = arith.extui %328 : vector<1x16xi1> to vector<1x16xi32>
    %330 = arith.sitofp %329 : vector<1x16xi32> to vector<1x16xf32>
    %c10_i32 = arith.constant 10 : i32
    %331 = vector.broadcast %c10_i32 : i32 to vector<14x16xi32>
    %332 = arith.cmpi eq, %33, %331 : vector<14x16xi32>
    %333 = vector.shape_cast %330 : vector<1x16xf32> to vector<1x16xf32>
    %334 = vector.broadcast %333 : vector<1x16xf32> to vector<14x16xf32>
    %335 = arith.select %332, %334, %307 : vector<14x16xi1>, vector<14x16xf32>
    %c10_i32_95 = arith.constant 10 : i32
    %336 = vector.broadcast %c10_i32_95 : i32 to vector<16x14xi32>
    %337 = arith.cmpi eq, %34, %336 : vector<16x14xi32>
    %338 = vector.broadcast %326 : vector<1x1xf32> to vector<16x14xf32>
    %339 = arith.cmpf oeq, %36, %338 : vector<16x14xf32>
    %340 = arith.andi %337, %339 : vector<16x14xi1>
    %cst_96 = arith.constant 1.000000e+00 : f32
    %341 = vector.broadcast %cst_96 : f32 to vector<16x14xf32>
    %342 = arith.select %340, %341, %314 : vector<16x14xi1>, vector<16x14xf32>
    %cst_97 = arith.constant 5.000000e-01 : f32
    %343 = vector.broadcast %cst_97 : f32 to vector<1x16xf32>
    %344 = arith.cmpf ogt, %330, %343 : vector<1x16xf32>
    %cst_98 = arith.constant -1.000000e+30 : f32
    %345 = vector.broadcast %cst_98 : f32 to vector<1x16xf32>
    %346 = arith.select %344, %345, %318 : vector<1x16xi1>, vector<1x16xf32>
    %cst_99 = arith.constant dense<0xFF800000> : vector<1xf32>
    %347 = vector.multi_reduction <maximumf>, %346, %cst_99 [1] : vector<1x16xf32> to vector<1xf32>
    %348 = vector.shape_cast %347 : vector<1xf32> to vector<1x1xf32>
    %349 = vector.broadcast %348 : vector<1x1xf32> to vector<1x16xf32>
    %350 = arith.cmpf oge, %346, %349 : vector<1x16xf32>
    %cst_100 = arith.constant 1.600000e+01 : f32
    %351 = vector.broadcast %cst_100 : f32 to vector<1x16xf32>
    %352 = arith.select %350, %32, %351 : vector<1x16xi1>, vector<1x16xf32>
    %cst_101 = arith.constant dense<0x7F800000> : vector<1xf32>
    %353 = vector.multi_reduction <minimumf>, %352, %cst_101 [1] : vector<1x16xf32> to vector<1xf32>
    %354 = vector.shape_cast %353 : vector<1xf32> to vector<1x1xf32>
    %355 = vector.broadcast %354 : vector<1x1xf32> to vector<1x16xf32>
    %356 = arith.cmpf oeq, %32, %355 : vector<1x16xf32>
    %357 = arith.extui %356 : vector<1x16xi1> to vector<1x16xi32>
    %358 = arith.sitofp %357 : vector<1x16xi32> to vector<1x16xf32>
    %c11_i32 = arith.constant 11 : i32
    %359 = vector.broadcast %c11_i32 : i32 to vector<14x16xi32>
    %360 = arith.cmpi eq, %33, %359 : vector<14x16xi32>
    %361 = vector.shape_cast %358 : vector<1x16xf32> to vector<1x16xf32>
    %362 = vector.broadcast %361 : vector<1x16xf32> to vector<14x16xf32>
    %363 = arith.select %360, %362, %335 : vector<14x16xi1>, vector<14x16xf32>
    %c11_i32_102 = arith.constant 11 : i32
    %364 = vector.broadcast %c11_i32_102 : i32 to vector<16x14xi32>
    %365 = arith.cmpi eq, %34, %364 : vector<16x14xi32>
    %366 = vector.broadcast %354 : vector<1x1xf32> to vector<16x14xf32>
    %367 = arith.cmpf oeq, %36, %366 : vector<16x14xf32>
    %368 = arith.andi %365, %367 : vector<16x14xi1>
    %cst_103 = arith.constant 1.000000e+00 : f32
    %369 = vector.broadcast %cst_103 : f32 to vector<16x14xf32>
    %370 = arith.select %368, %369, %342 : vector<16x14xi1>, vector<16x14xf32>
    %cst_104 = arith.constant 5.000000e-01 : f32
    %371 = vector.broadcast %cst_104 : f32 to vector<1x16xf32>
    %372 = arith.cmpf ogt, %358, %371 : vector<1x16xf32>
    %cst_105 = arith.constant -1.000000e+30 : f32
    %373 = vector.broadcast %cst_105 : f32 to vector<1x16xf32>
    %374 = arith.select %372, %373, %346 : vector<1x16xi1>, vector<1x16xf32>
    %cst_106 = arith.constant dense<0xFF800000> : vector<1xf32>
    %375 = vector.multi_reduction <maximumf>, %374, %cst_106 [1] : vector<1x16xf32> to vector<1xf32>
    %376 = vector.shape_cast %375 : vector<1xf32> to vector<1x1xf32>
    %377 = vector.broadcast %376 : vector<1x1xf32> to vector<1x16xf32>
    %378 = arith.cmpf oge, %374, %377 : vector<1x16xf32>
    %cst_107 = arith.constant 1.600000e+01 : f32
    %379 = vector.broadcast %cst_107 : f32 to vector<1x16xf32>
    %380 = arith.select %378, %32, %379 : vector<1x16xi1>, vector<1x16xf32>
    %cst_108 = arith.constant dense<0x7F800000> : vector<1xf32>
    %381 = vector.multi_reduction <minimumf>, %380, %cst_108 [1] : vector<1x16xf32> to vector<1xf32>
    %382 = vector.shape_cast %381 : vector<1xf32> to vector<1x1xf32>
    %383 = vector.broadcast %382 : vector<1x1xf32> to vector<1x16xf32>
    %384 = arith.cmpf oeq, %32, %383 : vector<1x16xf32>
    %385 = arith.extui %384 : vector<1x16xi1> to vector<1x16xi32>
    %386 = arith.sitofp %385 : vector<1x16xi32> to vector<1x16xf32>
    %c12_i32 = arith.constant 12 : i32
    %387 = vector.broadcast %c12_i32 : i32 to vector<14x16xi32>
    %388 = arith.cmpi eq, %33, %387 : vector<14x16xi32>
    %389 = vector.shape_cast %386 : vector<1x16xf32> to vector<1x16xf32>
    %390 = vector.broadcast %389 : vector<1x16xf32> to vector<14x16xf32>
    %391 = arith.select %388, %390, %363 : vector<14x16xi1>, vector<14x16xf32>
    %c12_i32_109 = arith.constant 12 : i32
    %392 = vector.broadcast %c12_i32_109 : i32 to vector<16x14xi32>
    %393 = arith.cmpi eq, %34, %392 : vector<16x14xi32>
    %394 = vector.broadcast %382 : vector<1x1xf32> to vector<16x14xf32>
    %395 = arith.cmpf oeq, %36, %394 : vector<16x14xf32>
    %396 = arith.andi %393, %395 : vector<16x14xi1>
    %cst_110 = arith.constant 1.000000e+00 : f32
    %397 = vector.broadcast %cst_110 : f32 to vector<16x14xf32>
    %398 = arith.select %396, %397, %370 : vector<16x14xi1>, vector<16x14xf32>
    %cst_111 = arith.constant 5.000000e-01 : f32
    %399 = vector.broadcast %cst_111 : f32 to vector<1x16xf32>
    %400 = arith.cmpf ogt, %386, %399 : vector<1x16xf32>
    %cst_112 = arith.constant -1.000000e+30 : f32
    %401 = vector.broadcast %cst_112 : f32 to vector<1x16xf32>
    %402 = arith.select %400, %401, %374 : vector<1x16xi1>, vector<1x16xf32>
    %cst_113 = arith.constant dense<0xFF800000> : vector<1xf32>
    %403 = vector.multi_reduction <maximumf>, %402, %cst_113 [1] : vector<1x16xf32> to vector<1xf32>
    %404 = vector.shape_cast %403 : vector<1xf32> to vector<1x1xf32>
    %405 = vector.broadcast %404 : vector<1x1xf32> to vector<1x16xf32>
    %406 = arith.cmpf oge, %402, %405 : vector<1x16xf32>
    %cst_114 = arith.constant 1.600000e+01 : f32
    %407 = vector.broadcast %cst_114 : f32 to vector<1x16xf32>
    %408 = arith.select %406, %32, %407 : vector<1x16xi1>, vector<1x16xf32>
    %cst_115 = arith.constant dense<0x7F800000> : vector<1xf32>
    %409 = vector.multi_reduction <minimumf>, %408, %cst_115 [1] : vector<1x16xf32> to vector<1xf32>
    %410 = vector.shape_cast %409 : vector<1xf32> to vector<1x1xf32>
    %411 = vector.broadcast %410 : vector<1x1xf32> to vector<1x16xf32>
    %412 = arith.cmpf oeq, %32, %411 : vector<1x16xf32>
    %413 = arith.extui %412 : vector<1x16xi1> to vector<1x16xi32>
    %414 = arith.sitofp %413 : vector<1x16xi32> to vector<1x16xf32>
    %c13_i32 = arith.constant 13 : i32
    %415 = vector.broadcast %c13_i32 : i32 to vector<14x16xi32>
    %416 = arith.cmpi eq, %33, %415 : vector<14x16xi32>
    %417 = vector.shape_cast %414 : vector<1x16xf32> to vector<1x16xf32>
    %418 = vector.broadcast %417 : vector<1x16xf32> to vector<14x16xf32>
    %419 = arith.select %416, %418, %391 : vector<14x16xi1>, vector<14x16xf32>
    %c13_i32_116 = arith.constant 13 : i32
    %420 = vector.broadcast %c13_i32_116 : i32 to vector<16x14xi32>
    %421 = arith.cmpi eq, %34, %420 : vector<16x14xi32>
    %422 = vector.broadcast %410 : vector<1x1xf32> to vector<16x14xf32>
    %423 = arith.cmpf oeq, %36, %422 : vector<16x14xf32>
    %424 = arith.andi %421, %423 : vector<16x14xi1>
    %cst_117 = arith.constant 1.000000e+00 : f32
    %425 = vector.broadcast %cst_117 : f32 to vector<16x14xf32>
    %426 = arith.select %424, %425, %398 : vector<16x14xi1>, vector<16x14xf32>
    %427 = vector.broadcast %30 : vector<1x16xf32> to vector<14x16xf32>
    %428 = arith.mulf %419, %427 : vector<14x16xf32>
    %cst_118 = arith.constant dense<0.000000e+00> : vector<14xf32>
    %429 = vector.multi_reduction <add>, %428, %cst_118 [1] : vector<14x16xf32> to vector<14xf32>
    %430 = vector.shape_cast %429 : vector<14xf32> to vector<14x1xf32>
    %431 = arith.truncf %419 : vector<14x16xf32> to vector<14x16xbf16>
    %432 = arith.truncf %16 : vector<16x128xf32> to vector<16x128xbf16>
    %cst_119 = arith.constant dense<0.000000e+00> : vector<14x128xf32>
    %433 = tpu.matmul %431, %432, %cst_119 {dimension_numbers = #tpu.dot_dimension_numbers<[1], [0], [0], [1], [0, 0, 1, 1], [], []>} : vector<14x16xbf16>, vector<16x128xbf16>, vector<14x128xf32> -> vector<14x128xf32>
    %434 = vector.broadcast %430 : vector<14x1xf32> to vector<14x128xf32>
    %435 = arith.mulf %433, %434 : vector<14x128xf32>
    %c1 = arith.constant 1 : index
    %c0_120 = arith.constant 0 : index
    %c0_121 = arith.constant 0 : index
    %436 = vector.load %arg1[%c1, %c0_120, %c0_121] : memref<3x128x128xbf16, #tpu.memory_space<vmem>>, vector<1x128x128xbf16>
    %437 = vector.shape_cast %436 : vector<1x128x128xbf16> to vector<128x128xbf16>
    %c1_122 = arith.constant 1 : index
    %c0_123 = arith.constant 0 : index
    %c0_124 = arith.constant 0 : index
    %438 = vector.load %arg2[%c1_122, %c0_123, %c0_124] : memref<3x1x128xf32, #tpu.memory_space<vmem>>, vector<1x1x128xf32>
    %439 = vector.shape_cast %438 : vector<1x1x128xf32> to vector<1x128xf32>
    %440 = arith.truncf %435 : vector<14x128xf32> to vector<14x128xbf16>
    %cst_125 = arith.constant dense<0.000000e+00> : vector<14x128xf32>
    %441 = tpu.matmul %440, %437, %cst_125 {dimension_numbers = #tpu.dot_dimension_numbers<[1], [0], [0], [1], [0, 0, 1, 1], [], []>} : vector<14x128xbf16>, vector<128x128xbf16>, vector<14x128xf32> -> vector<14x128xf32>
    %442 = vector.broadcast %439 : vector<1x128xf32> to vector<14x128xf32>
    %443 = arith.addf %441, %442 : vector<14x128xf32>
    %cst_126 = arith.constant 0.000000e+00 : f32
    %444 = vector.broadcast %cst_126 : f32 to vector<14x128xf32>
    %445 = arith.cmpf ogt, %443, %444 : vector<14x128xf32>
    %cst_127 = arith.constant 0.000000e+00 : f32
    %446 = vector.broadcast %cst_127 : f32 to vector<14x128xf32>
    %447 = arith.minimumf %443, %446 : vector<14x128xf32>
    %448 = math.exp %447 : vector<14x128xf32>
    %cst_128 = arith.constant 1.000000e+00 : f32
    %449 = vector.broadcast %cst_128 : f32 to vector<14x128xf32>
    %450 = arith.subf %448, %449 : vector<14x128xf32>
    %451 = arith.select %445, %443, %450 : vector<14x128xi1>, vector<14x128xf32>
    %c1_129 = arith.constant 1 : index
    %c0_130 = arith.constant 0 : index
    %c0_131 = arith.constant 0 : index
    %452 = vector.load %arg3[%c1_129, %c0_130, %c0_131] : memref<3x1x128xf32, #tpu.memory_space<vmem>>, vector<1x1x128xf32>
    %453 = vector.shape_cast %452 : vector<1x1x128xf32> to vector<1x128xf32>
    %cst_132 = arith.constant dense<0.000000e+00> : vector<1x14xf32>
    %454 = tpu.matmul %453, %451, %cst_132 {dimension_numbers = #tpu.dot_dimension_numbers<[1], [1], [0], [0], [0, 0, 1, 0], [], []>} : vector<1x128xf32>, vector<14x128xf32>, vector<1x14xf32> -> vector<1x14xf32>
    %c1_133 = arith.constant 1 : index
    %c0_134 = arith.constant 0 : index
    %c0_135 = arith.constant 0 : index
    %455 = vector.load %arg4[%c1_133, %c0_134, %c0_135] : memref<3x1x1xf32, #tpu.memory_space<vmem>>, vector<1x1x1xf32>
    %456 = vector.shape_cast %455 : vector<1x1x1xf32> to vector<1x1xf32>
    %457 = vector.broadcast %456 : vector<1x1xf32> to vector<1x14xf32>
    %458 = arith.addf %454, %457 : vector<1x14xf32>
    %cst_136 = arith.constant 0.000000e+00 : f32
    %459 = vector.broadcast %cst_136 : f32 to vector<1x14xf32>
    %460 = arith.subf %459, %458 : vector<1x14xf32>
    %461 = math.exp %460 : vector<1x14xf32>
    %cst_137 = arith.constant 1.000000e+00 : f32
    %462 = vector.broadcast %cst_137 : f32 to vector<1x14xf32>
    %463 = arith.addf %462, %461 : vector<1x14xf32>
    %cst_138 = arith.constant 1.000000e+00 : f32
    %464 = vector.broadcast %cst_138 : f32 to vector<1x14xf32>
    %465 = arith.divf %464, %463 : vector<1x14xf32>
    %466 = tpu.iota {dimensions = array<i32: 1>} : vector<1x14xi32>
    %467 = arith.sitofp %466 : vector<1x14xi32> to vector<1x14xf32>
    %468 = tpu.iota {dimensions = array<i32: 0>} : vector<11x14xi32>
    %469 = tpu.iota {dimensions = array<i32: 1>} : vector<14x11xi32>
    %470 = tpu.iota {dimensions = array<i32: 0>} : vector<14x11xi32>
    %471 = arith.sitofp %470 : vector<14x11xi32> to vector<14x11xf32>
    %cst_139 = arith.constant 0.000000e+00 : f32
    %472 = vector.broadcast %cst_139 : f32 to vector<11x14xf32>
    %cst_140 = arith.constant 0.000000e+00 : f32
    %473 = vector.broadcast %cst_140 : f32 to vector<14x11xf32>
    %cst_141 = arith.constant dense<0xFF800000> : vector<1xf32>
    %474 = vector.multi_reduction <maximumf>, %465, %cst_141 [1] : vector<1x14xf32> to vector<1xf32>
    %475 = vector.shape_cast %474 : vector<1xf32> to vector<1x1xf32>
    %476 = vector.broadcast %475 : vector<1x1xf32> to vector<1x14xf32>
    %477 = arith.cmpf oge, %465, %476 : vector<1x14xf32>
    %cst_142 = arith.constant 1.400000e+01 : f32
    %478 = vector.broadcast %cst_142 : f32 to vector<1x14xf32>
    %479 = arith.select %477, %467, %478 : vector<1x14xi1>, vector<1x14xf32>
    %cst_143 = arith.constant dense<0x7F800000> : vector<1xf32>
    %480 = vector.multi_reduction <minimumf>, %479, %cst_143 [1] : vector<1x14xf32> to vector<1xf32>
    %481 = vector.shape_cast %480 : vector<1xf32> to vector<1x1xf32>
    %482 = vector.broadcast %481 : vector<1x1xf32> to vector<1x14xf32>
    %483 = arith.cmpf oeq, %467, %482 : vector<1x14xf32>
    %484 = arith.extui %483 : vector<1x14xi1> to vector<1x14xi32>
    %485 = arith.sitofp %484 : vector<1x14xi32> to vector<1x14xf32>
    %c0_i32_144 = arith.constant 0 : i32
    %486 = vector.broadcast %c0_i32_144 : i32 to vector<11x14xi32>
    %487 = arith.cmpi eq, %468, %486 : vector<11x14xi32>
    %488 = vector.shape_cast %485 : vector<1x14xf32> to vector<1x14xf32>
    %489 = vector.broadcast %488 : vector<1x14xf32> to vector<11x14xf32>
    %490 = arith.select %487, %489, %472 : vector<11x14xi1>, vector<11x14xf32>
    %c0_i32_145 = arith.constant 0 : i32
    %491 = vector.broadcast %c0_i32_145 : i32 to vector<14x11xi32>
    %492 = arith.cmpi eq, %469, %491 : vector<14x11xi32>
    %493 = vector.broadcast %481 : vector<1x1xf32> to vector<14x11xf32>
    %494 = arith.cmpf oeq, %471, %493 : vector<14x11xf32>
    %495 = arith.andi %492, %494 : vector<14x11xi1>
    %cst_146 = arith.constant 1.000000e+00 : f32
    %496 = vector.broadcast %cst_146 : f32 to vector<14x11xf32>
    %497 = arith.select %495, %496, %473 : vector<14x11xi1>, vector<14x11xf32>
    %cst_147 = arith.constant 5.000000e-01 : f32
    %498 = vector.broadcast %cst_147 : f32 to vector<1x14xf32>
    %499 = arith.cmpf ogt, %485, %498 : vector<1x14xf32>
    %cst_148 = arith.constant -1.000000e+30 : f32
    %500 = vector.broadcast %cst_148 : f32 to vector<1x14xf32>
    %501 = arith.select %499, %500, %465 : vector<1x14xi1>, vector<1x14xf32>
    %cst_149 = arith.constant dense<0xFF800000> : vector<1xf32>
    %502 = vector.multi_reduction <maximumf>, %501, %cst_149 [1] : vector<1x14xf32> to vector<1xf32>
    %503 = vector.shape_cast %502 : vector<1xf32> to vector<1x1xf32>
    %504 = vector.broadcast %503 : vector<1x1xf32> to vector<1x14xf32>
    %505 = arith.cmpf oge, %501, %504 : vector<1x14xf32>
    %cst_150 = arith.constant 1.400000e+01 : f32
    %506 = vector.broadcast %cst_150 : f32 to vector<1x14xf32>
    %507 = arith.select %505, %467, %506 : vector<1x14xi1>, vector<1x14xf32>
    %cst_151 = arith.constant dense<0x7F800000> : vector<1xf32>
    %508 = vector.multi_reduction <minimumf>, %507, %cst_151 [1] : vector<1x14xf32> to vector<1xf32>
    %509 = vector.shape_cast %508 : vector<1xf32> to vector<1x1xf32>
    %510 = vector.broadcast %509 : vector<1x1xf32> to vector<1x14xf32>
    %511 = arith.cmpf oeq, %467, %510 : vector<1x14xf32>
    %512 = arith.extui %511 : vector<1x14xi1> to vector<1x14xi32>
    %513 = arith.sitofp %512 : vector<1x14xi32> to vector<1x14xf32>
    %c1_i32_152 = arith.constant 1 : i32
    %514 = vector.broadcast %c1_i32_152 : i32 to vector<11x14xi32>
    %515 = arith.cmpi eq, %468, %514 : vector<11x14xi32>
    %516 = vector.shape_cast %513 : vector<1x14xf32> to vector<1x14xf32>
    %517 = vector.broadcast %516 : vector<1x14xf32> to vector<11x14xf32>
    %518 = arith.select %515, %517, %490 : vector<11x14xi1>, vector<11x14xf32>
    %c1_i32_153 = arith.constant 1 : i32
    %519 = vector.broadcast %c1_i32_153 : i32 to vector<14x11xi32>
    %520 = arith.cmpi eq, %469, %519 : vector<14x11xi32>
    %521 = vector.broadcast %509 : vector<1x1xf32> to vector<14x11xf32>
    %522 = arith.cmpf oeq, %471, %521 : vector<14x11xf32>
    %523 = arith.andi %520, %522 : vector<14x11xi1>
    %cst_154 = arith.constant 1.000000e+00 : f32
    %524 = vector.broadcast %cst_154 : f32 to vector<14x11xf32>
    %525 = arith.select %523, %524, %497 : vector<14x11xi1>, vector<14x11xf32>
    %cst_155 = arith.constant 5.000000e-01 : f32
    %526 = vector.broadcast %cst_155 : f32 to vector<1x14xf32>
    %527 = arith.cmpf ogt, %513, %526 : vector<1x14xf32>
    %cst_156 = arith.constant -1.000000e+30 : f32
    %528 = vector.broadcast %cst_156 : f32 to vector<1x14xf32>
    %529 = arith.select %527, %528, %501 : vector<1x14xi1>, vector<1x14xf32>
    %cst_157 = arith.constant dense<0xFF800000> : vector<1xf32>
    %530 = vector.multi_reduction <maximumf>, %529, %cst_157 [1] : vector<1x14xf32> to vector<1xf32>
    %531 = vector.shape_cast %530 : vector<1xf32> to vector<1x1xf32>
    %532 = vector.broadcast %531 : vector<1x1xf32> to vector<1x14xf32>
    %533 = arith.cmpf oge, %529, %532 : vector<1x14xf32>
    %cst_158 = arith.constant 1.400000e+01 : f32
    %534 = vector.broadcast %cst_158 : f32 to vector<1x14xf32>
    %535 = arith.select %533, %467, %534 : vector<1x14xi1>, vector<1x14xf32>
    %cst_159 = arith.constant dense<0x7F800000> : vector<1xf32>
    %536 = vector.multi_reduction <minimumf>, %535, %cst_159 [1] : vector<1x14xf32> to vector<1xf32>
    %537 = vector.shape_cast %536 : vector<1xf32> to vector<1x1xf32>
    %538 = vector.broadcast %537 : vector<1x1xf32> to vector<1x14xf32>
    %539 = arith.cmpf oeq, %467, %538 : vector<1x14xf32>
    %540 = arith.extui %539 : vector<1x14xi1> to vector<1x14xi32>
    %541 = arith.sitofp %540 : vector<1x14xi32> to vector<1x14xf32>
    %c2_i32_160 = arith.constant 2 : i32
    %542 = vector.broadcast %c2_i32_160 : i32 to vector<11x14xi32>
    %543 = arith.cmpi eq, %468, %542 : vector<11x14xi32>
    %544 = vector.shape_cast %541 : vector<1x14xf32> to vector<1x14xf32>
    %545 = vector.broadcast %544 : vector<1x14xf32> to vector<11x14xf32>
    %546 = arith.select %543, %545, %518 : vector<11x14xi1>, vector<11x14xf32>
    %c2_i32_161 = arith.constant 2 : i32
    %547 = vector.broadcast %c2_i32_161 : i32 to vector<14x11xi32>
    %548 = arith.cmpi eq, %469, %547 : vector<14x11xi32>
    %549 = vector.broadcast %537 : vector<1x1xf32> to vector<14x11xf32>
    %550 = arith.cmpf oeq, %471, %549 : vector<14x11xf32>
    %551 = arith.andi %548, %550 : vector<14x11xi1>
    %cst_162 = arith.constant 1.000000e+00 : f32
    %552 = vector.broadcast %cst_162 : f32 to vector<14x11xf32>
    %553 = arith.select %551, %552, %525 : vector<14x11xi1>, vector<14x11xf32>
    %cst_163 = arith.constant 5.000000e-01 : f32
    %554 = vector.broadcast %cst_163 : f32 to vector<1x14xf32>
    %555 = arith.cmpf ogt, %541, %554 : vector<1x14xf32>
    %cst_164 = arith.constant -1.000000e+30 : f32
    %556 = vector.broadcast %cst_164 : f32 to vector<1x14xf32>
    %557 = arith.select %555, %556, %529 : vector<1x14xi1>, vector<1x14xf32>
    %cst_165 = arith.constant dense<0xFF800000> : vector<1xf32>
    %558 = vector.multi_reduction <maximumf>, %557, %cst_165 [1] : vector<1x14xf32> to vector<1xf32>
    %559 = vector.shape_cast %558 : vector<1xf32> to vector<1x1xf32>
    %560 = vector.broadcast %559 : vector<1x1xf32> to vector<1x14xf32>
    %561 = arith.cmpf oge, %557, %560 : vector<1x14xf32>
    %cst_166 = arith.constant 1.400000e+01 : f32
    %562 = vector.broadcast %cst_166 : f32 to vector<1x14xf32>
    %563 = arith.select %561, %467, %562 : vector<1x14xi1>, vector<1x14xf32>
    %cst_167 = arith.constant dense<0x7F800000> : vector<1xf32>
    %564 = vector.multi_reduction <minimumf>, %563, %cst_167 [1] : vector<1x14xf32> to vector<1xf32>
    %565 = vector.shape_cast %564 : vector<1xf32> to vector<1x1xf32>
    %566 = vector.broadcast %565 : vector<1x1xf32> to vector<1x14xf32>
    %567 = arith.cmpf oeq, %467, %566 : vector<1x14xf32>
    %568 = arith.extui %567 : vector<1x14xi1> to vector<1x14xi32>
    %569 = arith.sitofp %568 : vector<1x14xi32> to vector<1x14xf32>
    %c3_i32_168 = arith.constant 3 : i32
    %570 = vector.broadcast %c3_i32_168 : i32 to vector<11x14xi32>
    %571 = arith.cmpi eq, %468, %570 : vector<11x14xi32>
    %572 = vector.shape_cast %569 : vector<1x14xf32> to vector<1x14xf32>
    %573 = vector.broadcast %572 : vector<1x14xf32> to vector<11x14xf32>
    %574 = arith.select %571, %573, %546 : vector<11x14xi1>, vector<11x14xf32>
    %c3_i32_169 = arith.constant 3 : i32
    %575 = vector.broadcast %c3_i32_169 : i32 to vector<14x11xi32>
    %576 = arith.cmpi eq, %469, %575 : vector<14x11xi32>
    %577 = vector.broadcast %565 : vector<1x1xf32> to vector<14x11xf32>
    %578 = arith.cmpf oeq, %471, %577 : vector<14x11xf32>
    %579 = arith.andi %576, %578 : vector<14x11xi1>
    %cst_170 = arith.constant 1.000000e+00 : f32
    %580 = vector.broadcast %cst_170 : f32 to vector<14x11xf32>
    %581 = arith.select %579, %580, %553 : vector<14x11xi1>, vector<14x11xf32>
    %cst_171 = arith.constant 5.000000e-01 : f32
    %582 = vector.broadcast %cst_171 : f32 to vector<1x14xf32>
    %583 = arith.cmpf ogt, %569, %582 : vector<1x14xf32>
    %cst_172 = arith.constant -1.000000e+30 : f32
    %584 = vector.broadcast %cst_172 : f32 to vector<1x14xf32>
    %585 = arith.select %583, %584, %557 : vector<1x14xi1>, vector<1x14xf32>
    %cst_173 = arith.constant dense<0xFF800000> : vector<1xf32>
    %586 = vector.multi_reduction <maximumf>, %585, %cst_173 [1] : vector<1x14xf32> to vector<1xf32>
    %587 = vector.shape_cast %586 : vector<1xf32> to vector<1x1xf32>
    %588 = vector.broadcast %587 : vector<1x1xf32> to vector<1x14xf32>
    %589 = arith.cmpf oge, %585, %588 : vector<1x14xf32>
    %cst_174 = arith.constant 1.400000e+01 : f32
    %590 = vector.broadcast %cst_174 : f32 to vector<1x14xf32>
    %591 = arith.select %589, %467, %590 : vector<1x14xi1>, vector<1x14xf32>
    %cst_175 = arith.constant dense<0x7F800000> : vector<1xf32>
    %592 = vector.multi_reduction <minimumf>, %591, %cst_175 [1] : vector<1x14xf32> to vector<1xf32>
    %593 = vector.shape_cast %592 : vector<1xf32> to vector<1x1xf32>
    %594 = vector.broadcast %593 : vector<1x1xf32> to vector<1x14xf32>
    %595 = arith.cmpf oeq, %467, %594 : vector<1x14xf32>
    %596 = arith.extui %595 : vector<1x14xi1> to vector<1x14xi32>
    %597 = arith.sitofp %596 : vector<1x14xi32> to vector<1x14xf32>
    %c4_i32_176 = arith.constant 4 : i32
    %598 = vector.broadcast %c4_i32_176 : i32 to vector<11x14xi32>
    %599 = arith.cmpi eq, %468, %598 : vector<11x14xi32>
    %600 = vector.shape_cast %597 : vector<1x14xf32> to vector<1x14xf32>
    %601 = vector.broadcast %600 : vector<1x14xf32> to vector<11x14xf32>
    %602 = arith.select %599, %601, %574 : vector<11x14xi1>, vector<11x14xf32>
    %c4_i32_177 = arith.constant 4 : i32
    %603 = vector.broadcast %c4_i32_177 : i32 to vector<14x11xi32>
    %604 = arith.cmpi eq, %469, %603 : vector<14x11xi32>
    %605 = vector.broadcast %593 : vector<1x1xf32> to vector<14x11xf32>
    %606 = arith.cmpf oeq, %471, %605 : vector<14x11xf32>
    %607 = arith.andi %604, %606 : vector<14x11xi1>
    %cst_178 = arith.constant 1.000000e+00 : f32
    %608 = vector.broadcast %cst_178 : f32 to vector<14x11xf32>
    %609 = arith.select %607, %608, %581 : vector<14x11xi1>, vector<14x11xf32>
    %cst_179 = arith.constant 5.000000e-01 : f32
    %610 = vector.broadcast %cst_179 : f32 to vector<1x14xf32>
    %611 = arith.cmpf ogt, %597, %610 : vector<1x14xf32>
    %cst_180 = arith.constant -1.000000e+30 : f32
    %612 = vector.broadcast %cst_180 : f32 to vector<1x14xf32>
    %613 = arith.select %611, %612, %585 : vector<1x14xi1>, vector<1x14xf32>
    %cst_181 = arith.constant dense<0xFF800000> : vector<1xf32>
    %614 = vector.multi_reduction <maximumf>, %613, %cst_181 [1] : vector<1x14xf32> to vector<1xf32>
    %615 = vector.shape_cast %614 : vector<1xf32> to vector<1x1xf32>
    %616 = vector.broadcast %615 : vector<1x1xf32> to vector<1x14xf32>
    %617 = arith.cmpf oge, %613, %616 : vector<1x14xf32>
    %cst_182 = arith.constant 1.400000e+01 : f32
    %618 = vector.broadcast %cst_182 : f32 to vector<1x14xf32>
    %619 = arith.select %617, %467, %618 : vector<1x14xi1>, vector<1x14xf32>
    %cst_183 = arith.constant dense<0x7F800000> : vector<1xf32>
    %620 = vector.multi_reduction <minimumf>, %619, %cst_183 [1] : vector<1x14xf32> to vector<1xf32>
    %621 = vector.shape_cast %620 : vector<1xf32> to vector<1x1xf32>
    %622 = vector.broadcast %621 : vector<1x1xf32> to vector<1x14xf32>
    %623 = arith.cmpf oeq, %467, %622 : vector<1x14xf32>
    %624 = arith.extui %623 : vector<1x14xi1> to vector<1x14xi32>
    %625 = arith.sitofp %624 : vector<1x14xi32> to vector<1x14xf32>
    %c5_i32_184 = arith.constant 5 : i32
    %626 = vector.broadcast %c5_i32_184 : i32 to vector<11x14xi32>
    %627 = arith.cmpi eq, %468, %626 : vector<11x14xi32>
    %628 = vector.shape_cast %625 : vector<1x14xf32> to vector<1x14xf32>
    %629 = vector.broadcast %628 : vector<1x14xf32> to vector<11x14xf32>
    %630 = arith.select %627, %629, %602 : vector<11x14xi1>, vector<11x14xf32>
    %c5_i32_185 = arith.constant 5 : i32
    %631 = vector.broadcast %c5_i32_185 : i32 to vector<14x11xi32>
    %632 = arith.cmpi eq, %469, %631 : vector<14x11xi32>
    %633 = vector.broadcast %621 : vector<1x1xf32> to vector<14x11xf32>
    %634 = arith.cmpf oeq, %471, %633 : vector<14x11xf32>
    %635 = arith.andi %632, %634 : vector<14x11xi1>
    %cst_186 = arith.constant 1.000000e+00 : f32
    %636 = vector.broadcast %cst_186 : f32 to vector<14x11xf32>
    %637 = arith.select %635, %636, %609 : vector<14x11xi1>, vector<14x11xf32>
    %cst_187 = arith.constant 5.000000e-01 : f32
    %638 = vector.broadcast %cst_187 : f32 to vector<1x14xf32>
    %639 = arith.cmpf ogt, %625, %638 : vector<1x14xf32>
    %cst_188 = arith.constant -1.000000e+30 : f32
    %640 = vector.broadcast %cst_188 : f32 to vector<1x14xf32>
    %641 = arith.select %639, %640, %613 : vector<1x14xi1>, vector<1x14xf32>
    %cst_189 = arith.constant dense<0xFF800000> : vector<1xf32>
    %642 = vector.multi_reduction <maximumf>, %641, %cst_189 [1] : vector<1x14xf32> to vector<1xf32>
    %643 = vector.shape_cast %642 : vector<1xf32> to vector<1x1xf32>
    %644 = vector.broadcast %643 : vector<1x1xf32> to vector<1x14xf32>
    %645 = arith.cmpf oge, %641, %644 : vector<1x14xf32>
    %cst_190 = arith.constant 1.400000e+01 : f32
    %646 = vector.broadcast %cst_190 : f32 to vector<1x14xf32>
    %647 = arith.select %645, %467, %646 : vector<1x14xi1>, vector<1x14xf32>
    %cst_191 = arith.constant dense<0x7F800000> : vector<1xf32>
    %648 = vector.multi_reduction <minimumf>, %647, %cst_191 [1] : vector<1x14xf32> to vector<1xf32>
    %649 = vector.shape_cast %648 : vector<1xf32> to vector<1x1xf32>
    %650 = vector.broadcast %649 : vector<1x1xf32> to vector<1x14xf32>
    %651 = arith.cmpf oeq, %467, %650 : vector<1x14xf32>
    %652 = arith.extui %651 : vector<1x14xi1> to vector<1x14xi32>
    %653 = arith.sitofp %652 : vector<1x14xi32> to vector<1x14xf32>
    %c6_i32_192 = arith.constant 6 : i32
    %654 = vector.broadcast %c6_i32_192 : i32 to vector<11x14xi32>
    %655 = arith.cmpi eq, %468, %654 : vector<11x14xi32>
    %656 = vector.shape_cast %653 : vector<1x14xf32> to vector<1x14xf32>
    %657 = vector.broadcast %656 : vector<1x14xf32> to vector<11x14xf32>
    %658 = arith.select %655, %657, %630 : vector<11x14xi1>, vector<11x14xf32>
    %c6_i32_193 = arith.constant 6 : i32
    %659 = vector.broadcast %c6_i32_193 : i32 to vector<14x11xi32>
    %660 = arith.cmpi eq, %469, %659 : vector<14x11xi32>
    %661 = vector.broadcast %649 : vector<1x1xf32> to vector<14x11xf32>
    %662 = arith.cmpf oeq, %471, %661 : vector<14x11xf32>
    %663 = arith.andi %660, %662 : vector<14x11xi1>
    %cst_194 = arith.constant 1.000000e+00 : f32
    %664 = vector.broadcast %cst_194 : f32 to vector<14x11xf32>
    %665 = arith.select %663, %664, %637 : vector<14x11xi1>, vector<14x11xf32>
    %cst_195 = arith.constant 5.000000e-01 : f32
    %666 = vector.broadcast %cst_195 : f32 to vector<1x14xf32>
    %667 = arith.cmpf ogt, %653, %666 : vector<1x14xf32>
    %cst_196 = arith.constant -1.000000e+30 : f32
    %668 = vector.broadcast %cst_196 : f32 to vector<1x14xf32>
    %669 = arith.select %667, %668, %641 : vector<1x14xi1>, vector<1x14xf32>
    %cst_197 = arith.constant dense<0xFF800000> : vector<1xf32>
    %670 = vector.multi_reduction <maximumf>, %669, %cst_197 [1] : vector<1x14xf32> to vector<1xf32>
    %671 = vector.shape_cast %670 : vector<1xf32> to vector<1x1xf32>
    %672 = vector.broadcast %671 : vector<1x1xf32> to vector<1x14xf32>
    %673 = arith.cmpf oge, %669, %672 : vector<1x14xf32>
    %cst_198 = arith.constant 1.400000e+01 : f32
    %674 = vector.broadcast %cst_198 : f32 to vector<1x14xf32>
    %675 = arith.select %673, %467, %674 : vector<1x14xi1>, vector<1x14xf32>
    %cst_199 = arith.constant dense<0x7F800000> : vector<1xf32>
    %676 = vector.multi_reduction <minimumf>, %675, %cst_199 [1] : vector<1x14xf32> to vector<1xf32>
    %677 = vector.shape_cast %676 : vector<1xf32> to vector<1x1xf32>
    %678 = vector.broadcast %677 : vector<1x1xf32> to vector<1x14xf32>
    %679 = arith.cmpf oeq, %467, %678 : vector<1x14xf32>
    %680 = arith.extui %679 : vector<1x14xi1> to vector<1x14xi32>
    %681 = arith.sitofp %680 : vector<1x14xi32> to vector<1x14xf32>
    %c7_i32_200 = arith.constant 7 : i32
    %682 = vector.broadcast %c7_i32_200 : i32 to vector<11x14xi32>
    %683 = arith.cmpi eq, %468, %682 : vector<11x14xi32>
    %684 = vector.shape_cast %681 : vector<1x14xf32> to vector<1x14xf32>
    %685 = vector.broadcast %684 : vector<1x14xf32> to vector<11x14xf32>
    %686 = arith.select %683, %685, %658 : vector<11x14xi1>, vector<11x14xf32>
    %c7_i32_201 = arith.constant 7 : i32
    %687 = vector.broadcast %c7_i32_201 : i32 to vector<14x11xi32>
    %688 = arith.cmpi eq, %469, %687 : vector<14x11xi32>
    %689 = vector.broadcast %677 : vector<1x1xf32> to vector<14x11xf32>
    %690 = arith.cmpf oeq, %471, %689 : vector<14x11xf32>
    %691 = arith.andi %688, %690 : vector<14x11xi1>
    %cst_202 = arith.constant 1.000000e+00 : f32
    %692 = vector.broadcast %cst_202 : f32 to vector<14x11xf32>
    %693 = arith.select %691, %692, %665 : vector<14x11xi1>, vector<14x11xf32>
    %cst_203 = arith.constant 5.000000e-01 : f32
    %694 = vector.broadcast %cst_203 : f32 to vector<1x14xf32>
    %695 = arith.cmpf ogt, %681, %694 : vector<1x14xf32>
    %cst_204 = arith.constant -1.000000e+30 : f32
    %696 = vector.broadcast %cst_204 : f32 to vector<1x14xf32>
    %697 = arith.select %695, %696, %669 : vector<1x14xi1>, vector<1x14xf32>
    %cst_205 = arith.constant dense<0xFF800000> : vector<1xf32>
    %698 = vector.multi_reduction <maximumf>, %697, %cst_205 [1] : vector<1x14xf32> to vector<1xf32>
    %699 = vector.shape_cast %698 : vector<1xf32> to vector<1x1xf32>
    %700 = vector.broadcast %699 : vector<1x1xf32> to vector<1x14xf32>
    %701 = arith.cmpf oge, %697, %700 : vector<1x14xf32>
    %cst_206 = arith.constant 1.400000e+01 : f32
    %702 = vector.broadcast %cst_206 : f32 to vector<1x14xf32>
    %703 = arith.select %701, %467, %702 : vector<1x14xi1>, vector<1x14xf32>
    %cst_207 = arith.constant dense<0x7F800000> : vector<1xf32>
    %704 = vector.multi_reduction <minimumf>, %703, %cst_207 [1] : vector<1x14xf32> to vector<1xf32>
    %705 = vector.shape_cast %704 : vector<1xf32> to vector<1x1xf32>
    %706 = vector.broadcast %705 : vector<1x1xf32> to vector<1x14xf32>
    %707 = arith.cmpf oeq, %467, %706 : vector<1x14xf32>
    %708 = arith.extui %707 : vector<1x14xi1> to vector<1x14xi32>
    %709 = arith.sitofp %708 : vector<1x14xi32> to vector<1x14xf32>
    %c8_i32_208 = arith.constant 8 : i32
    %710 = vector.broadcast %c8_i32_208 : i32 to vector<11x14xi32>
    %711 = arith.cmpi eq, %468, %710 : vector<11x14xi32>
    %712 = vector.shape_cast %709 : vector<1x14xf32> to vector<1x14xf32>
    %713 = vector.broadcast %712 : vector<1x14xf32> to vector<11x14xf32>
    %714 = arith.select %711, %713, %686 : vector<11x14xi1>, vector<11x14xf32>
    %c8_i32_209 = arith.constant 8 : i32
    %715 = vector.broadcast %c8_i32_209 : i32 to vector<14x11xi32>
    %716 = arith.cmpi eq, %469, %715 : vector<14x11xi32>
    %717 = vector.broadcast %705 : vector<1x1xf32> to vector<14x11xf32>
    %718 = arith.cmpf oeq, %471, %717 : vector<14x11xf32>
    %719 = arith.andi %716, %718 : vector<14x11xi1>
    %cst_210 = arith.constant 1.000000e+00 : f32
    %720 = vector.broadcast %cst_210 : f32 to vector<14x11xf32>
    %721 = arith.select %719, %720, %693 : vector<14x11xi1>, vector<14x11xf32>
    %cst_211 = arith.constant 5.000000e-01 : f32
    %722 = vector.broadcast %cst_211 : f32 to vector<1x14xf32>
    %723 = arith.cmpf ogt, %709, %722 : vector<1x14xf32>
    %cst_212 = arith.constant -1.000000e+30 : f32
    %724 = vector.broadcast %cst_212 : f32 to vector<1x14xf32>
    %725 = arith.select %723, %724, %697 : vector<1x14xi1>, vector<1x14xf32>
    %cst_213 = arith.constant dense<0xFF800000> : vector<1xf32>
    %726 = vector.multi_reduction <maximumf>, %725, %cst_213 [1] : vector<1x14xf32> to vector<1xf32>
    %727 = vector.shape_cast %726 : vector<1xf32> to vector<1x1xf32>
    %728 = vector.broadcast %727 : vector<1x1xf32> to vector<1x14xf32>
    %729 = arith.cmpf oge, %725, %728 : vector<1x14xf32>
    %cst_214 = arith.constant 1.400000e+01 : f32
    %730 = vector.broadcast %cst_214 : f32 to vector<1x14xf32>
    %731 = arith.select %729, %467, %730 : vector<1x14xi1>, vector<1x14xf32>
    %cst_215 = arith.constant dense<0x7F800000> : vector<1xf32>
    %732 = vector.multi_reduction <minimumf>, %731, %cst_215 [1] : vector<1x14xf32> to vector<1xf32>
    %733 = vector.shape_cast %732 : vector<1xf32> to vector<1x1xf32>
    %734 = vector.broadcast %733 : vector<1x1xf32> to vector<1x14xf32>
    %735 = arith.cmpf oeq, %467, %734 : vector<1x14xf32>
    %736 = arith.extui %735 : vector<1x14xi1> to vector<1x14xi32>
    %737 = arith.sitofp %736 : vector<1x14xi32> to vector<1x14xf32>
    %c9_i32_216 = arith.constant 9 : i32
    %738 = vector.broadcast %c9_i32_216 : i32 to vector<11x14xi32>
    %739 = arith.cmpi eq, %468, %738 : vector<11x14xi32>
    %740 = vector.shape_cast %737 : vector<1x14xf32> to vector<1x14xf32>
    %741 = vector.broadcast %740 : vector<1x14xf32> to vector<11x14xf32>
    %742 = arith.select %739, %741, %714 : vector<11x14xi1>, vector<11x14xf32>
    %c9_i32_217 = arith.constant 9 : i32
    %743 = vector.broadcast %c9_i32_217 : i32 to vector<14x11xi32>
    %744 = arith.cmpi eq, %469, %743 : vector<14x11xi32>
    %745 = vector.broadcast %733 : vector<1x1xf32> to vector<14x11xf32>
    %746 = arith.cmpf oeq, %471, %745 : vector<14x11xf32>
    %747 = arith.andi %744, %746 : vector<14x11xi1>
    %cst_218 = arith.constant 1.000000e+00 : f32
    %748 = vector.broadcast %cst_218 : f32 to vector<14x11xf32>
    %749 = arith.select %747, %748, %721 : vector<14x11xi1>, vector<14x11xf32>
    %cst_219 = arith.constant 5.000000e-01 : f32
    %750 = vector.broadcast %cst_219 : f32 to vector<1x14xf32>
    %751 = arith.cmpf ogt, %737, %750 : vector<1x14xf32>
    %cst_220 = arith.constant -1.000000e+30 : f32
    %752 = vector.broadcast %cst_220 : f32 to vector<1x14xf32>
    %753 = arith.select %751, %752, %725 : vector<1x14xi1>, vector<1x14xf32>
    %cst_221 = arith.constant dense<0xFF800000> : vector<1xf32>
    %754 = vector.multi_reduction <maximumf>, %753, %cst_221 [1] : vector<1x14xf32> to vector<1xf32>
    %755 = vector.shape_cast %754 : vector<1xf32> to vector<1x1xf32>
    %756 = vector.broadcast %755 : vector<1x1xf32> to vector<1x14xf32>
    %757 = arith.cmpf oge, %753, %756 : vector<1x14xf32>
    %cst_222 = arith.constant 1.400000e+01 : f32
    %758 = vector.broadcast %cst_222 : f32 to vector<1x14xf32>
    %759 = arith.select %757, %467, %758 : vector<1x14xi1>, vector<1x14xf32>
    %cst_223 = arith.constant dense<0x7F800000> : vector<1xf32>
    %760 = vector.multi_reduction <minimumf>, %759, %cst_223 [1] : vector<1x14xf32> to vector<1xf32>
    %761 = vector.shape_cast %760 : vector<1xf32> to vector<1x1xf32>
    %762 = vector.broadcast %761 : vector<1x1xf32> to vector<1x14xf32>
    %763 = arith.cmpf oeq, %467, %762 : vector<1x14xf32>
    %764 = arith.extui %763 : vector<1x14xi1> to vector<1x14xi32>
    %765 = arith.sitofp %764 : vector<1x14xi32> to vector<1x14xf32>
    %c10_i32_224 = arith.constant 10 : i32
    %766 = vector.broadcast %c10_i32_224 : i32 to vector<11x14xi32>
    %767 = arith.cmpi eq, %468, %766 : vector<11x14xi32>
    %768 = vector.shape_cast %765 : vector<1x14xf32> to vector<1x14xf32>
    %769 = vector.broadcast %768 : vector<1x14xf32> to vector<11x14xf32>
    %770 = arith.select %767, %769, %742 : vector<11x14xi1>, vector<11x14xf32>
    %c10_i32_225 = arith.constant 10 : i32
    %771 = vector.broadcast %c10_i32_225 : i32 to vector<14x11xi32>
    %772 = arith.cmpi eq, %469, %771 : vector<14x11xi32>
    %773 = vector.broadcast %761 : vector<1x1xf32> to vector<14x11xf32>
    %774 = arith.cmpf oeq, %471, %773 : vector<14x11xf32>
    %775 = arith.andi %772, %774 : vector<14x11xi1>
    %cst_226 = arith.constant 1.000000e+00 : f32
    %776 = vector.broadcast %cst_226 : f32 to vector<14x11xf32>
    %777 = arith.select %775, %776, %749 : vector<14x11xi1>, vector<14x11xf32>
    %778 = vector.broadcast %465 : vector<1x14xf32> to vector<11x14xf32>
    %779 = arith.mulf %770, %778 : vector<11x14xf32>
    %cst_227 = arith.constant dense<0.000000e+00> : vector<11xf32>
    %780 = vector.multi_reduction <add>, %779, %cst_227 [1] : vector<11x14xf32> to vector<11xf32>
    %781 = vector.shape_cast %780 : vector<11xf32> to vector<11x1xf32>
    %782 = arith.truncf %770 : vector<11x14xf32> to vector<11x14xbf16>
    %783 = arith.truncf %451 : vector<14x128xf32> to vector<14x128xbf16>
    %cst_228 = arith.constant dense<0.000000e+00> : vector<11x128xf32>
    %784 = tpu.matmul %782, %783, %cst_228 {dimension_numbers = #tpu.dot_dimension_numbers<[1], [0], [0], [1], [0, 0, 1, 1], [], []>} : vector<11x14xbf16>, vector<14x128xbf16>, vector<11x128xf32> -> vector<11x128xf32>
    %785 = vector.broadcast %781 : vector<11x1xf32> to vector<11x128xf32>
    %786 = arith.mulf %784, %785 : vector<11x128xf32>
    %c2 = arith.constant 2 : index
    %c0_229 = arith.constant 0 : index
    %c0_230 = arith.constant 0 : index
    %787 = vector.load %arg1[%c2, %c0_229, %c0_230] : memref<3x128x128xbf16, #tpu.memory_space<vmem>>, vector<1x128x128xbf16>
    %788 = vector.shape_cast %787 : vector<1x128x128xbf16> to vector<128x128xbf16>
    %c2_231 = arith.constant 2 : index
    %c0_232 = arith.constant 0 : index
    %c0_233 = arith.constant 0 : index
    %789 = vector.load %arg2[%c2_231, %c0_232, %c0_233] : memref<3x1x128xf32, #tpu.memory_space<vmem>>, vector<1x1x128xf32>
    %790 = vector.shape_cast %789 : vector<1x1x128xf32> to vector<1x128xf32>
    %791 = arith.truncf %786 : vector<11x128xf32> to vector<11x128xbf16>
    %cst_234 = arith.constant dense<0.000000e+00> : vector<11x128xf32>
    %792 = tpu.matmul %791, %788, %cst_234 {dimension_numbers = #tpu.dot_dimension_numbers<[1], [0], [0], [1], [0, 0, 1, 1], [], []>} : vector<11x128xbf16>, vector<128x128xbf16>, vector<11x128xf32> -> vector<11x128xf32>
    %793 = vector.broadcast %790 : vector<1x128xf32> to vector<11x128xf32>
    %794 = arith.addf %792, %793 : vector<11x128xf32>
    %cst_235 = arith.constant 0.000000e+00 : f32
    %795 = vector.broadcast %cst_235 : f32 to vector<11x128xf32>
    %796 = arith.cmpf ogt, %794, %795 : vector<11x128xf32>
    %cst_236 = arith.constant 0.000000e+00 : f32
    %797 = vector.broadcast %cst_236 : f32 to vector<11x128xf32>
    %798 = arith.minimumf %794, %797 : vector<11x128xf32>
    %799 = math.exp %798 : vector<11x128xf32>
    %cst_237 = arith.constant 1.000000e+00 : f32
    %800 = vector.broadcast %cst_237 : f32 to vector<11x128xf32>
    %801 = arith.subf %799, %800 : vector<11x128xf32>
    %802 = arith.select %796, %794, %801 : vector<11x128xi1>, vector<11x128xf32>
    %c2_238 = arith.constant 2 : index
    %c0_239 = arith.constant 0 : index
    %c0_240 = arith.constant 0 : index
    %803 = vector.load %arg3[%c2_238, %c0_239, %c0_240] : memref<3x1x128xf32, #tpu.memory_space<vmem>>, vector<1x1x128xf32>
    %804 = vector.shape_cast %803 : vector<1x1x128xf32> to vector<1x128xf32>
    %cst_241 = arith.constant dense<0.000000e+00> : vector<1x11xf32>
    %805 = tpu.matmul %804, %802, %cst_241 {dimension_numbers = #tpu.dot_dimension_numbers<[1], [1], [0], [0], [0, 0, 1, 0], [], []>} : vector<1x128xf32>, vector<11x128xf32>, vector<1x11xf32> -> vector<1x11xf32>
    %c2_242 = arith.constant 2 : index
    %c0_243 = arith.constant 0 : index
    %c0_244 = arith.constant 0 : index
    %806 = vector.load %arg4[%c2_242, %c0_243, %c0_244] : memref<3x1x1xf32, #tpu.memory_space<vmem>>, vector<1x1x1xf32>
    %807 = vector.shape_cast %806 : vector<1x1x1xf32> to vector<1x1xf32>
    %808 = vector.broadcast %807 : vector<1x1xf32> to vector<1x11xf32>
    %809 = arith.addf %805, %808 : vector<1x11xf32>
    %cst_245 = arith.constant 0.000000e+00 : f32
    %810 = vector.broadcast %cst_245 : f32 to vector<1x11xf32>
    %811 = arith.subf %810, %809 : vector<1x11xf32>
    %812 = math.exp %811 : vector<1x11xf32>
    %cst_246 = arith.constant 1.000000e+00 : f32
    %813 = vector.broadcast %cst_246 : f32 to vector<1x11xf32>
    %814 = arith.addf %813, %812 : vector<1x11xf32>
    %cst_247 = arith.constant 1.000000e+00 : f32
    %815 = vector.broadcast %cst_247 : f32 to vector<1x11xf32>
    %816 = arith.divf %815, %814 : vector<1x11xf32>
    %817 = tpu.iota {dimensions = array<i32: 1>} : vector<1x11xi32>
    %818 = arith.sitofp %817 : vector<1x11xi32> to vector<1x11xf32>
    %819 = tpu.iota {dimensions = array<i32: 0>} : vector<7x11xi32>
    %820 = tpu.iota {dimensions = array<i32: 1>} : vector<11x7xi32>
    %821 = tpu.iota {dimensions = array<i32: 0>} : vector<11x7xi32>
    %822 = arith.sitofp %821 : vector<11x7xi32> to vector<11x7xf32>
    %cst_248 = arith.constant 0.000000e+00 : f32
    %823 = vector.broadcast %cst_248 : f32 to vector<7x11xf32>
    %cst_249 = arith.constant 0.000000e+00 : f32
    %824 = vector.broadcast %cst_249 : f32 to vector<11x7xf32>
    %cst_250 = arith.constant dense<0xFF800000> : vector<1xf32>
    %825 = vector.multi_reduction <maximumf>, %816, %cst_250 [1] : vector<1x11xf32> to vector<1xf32>
    %826 = vector.shape_cast %825 : vector<1xf32> to vector<1x1xf32>
    %827 = vector.broadcast %826 : vector<1x1xf32> to vector<1x11xf32>
    %828 = arith.cmpf oge, %816, %827 : vector<1x11xf32>
    %cst_251 = arith.constant 1.100000e+01 : f32
    %829 = vector.broadcast %cst_251 : f32 to vector<1x11xf32>
    %830 = arith.select %828, %818, %829 : vector<1x11xi1>, vector<1x11xf32>
    %cst_252 = arith.constant dense<0x7F800000> : vector<1xf32>
    %831 = vector.multi_reduction <minimumf>, %830, %cst_252 [1] : vector<1x11xf32> to vector<1xf32>
    %832 = vector.shape_cast %831 : vector<1xf32> to vector<1x1xf32>
    %833 = vector.broadcast %832 : vector<1x1xf32> to vector<1x11xf32>
    %834 = arith.cmpf oeq, %818, %833 : vector<1x11xf32>
    %835 = arith.extui %834 : vector<1x11xi1> to vector<1x11xi32>
    %836 = arith.sitofp %835 : vector<1x11xi32> to vector<1x11xf32>
    %c0_i32_253 = arith.constant 0 : i32
    %837 = vector.broadcast %c0_i32_253 : i32 to vector<7x11xi32>
    %838 = arith.cmpi eq, %819, %837 : vector<7x11xi32>
    %839 = vector.shape_cast %836 : vector<1x11xf32> to vector<1x11xf32>
    %840 = vector.broadcast %839 : vector<1x11xf32> to vector<7x11xf32>
    %841 = arith.select %838, %840, %823 : vector<7x11xi1>, vector<7x11xf32>
    %c0_i32_254 = arith.constant 0 : i32
    %842 = vector.broadcast %c0_i32_254 : i32 to vector<11x7xi32>
    %843 = arith.cmpi eq, %820, %842 : vector<11x7xi32>
    %844 = vector.broadcast %832 : vector<1x1xf32> to vector<11x7xf32>
    %845 = arith.cmpf oeq, %822, %844 : vector<11x7xf32>
    %846 = arith.andi %843, %845 : vector<11x7xi1>
    %cst_255 = arith.constant 1.000000e+00 : f32
    %847 = vector.broadcast %cst_255 : f32 to vector<11x7xf32>
    %848 = arith.select %846, %847, %824 : vector<11x7xi1>, vector<11x7xf32>
    %cst_256 = arith.constant 5.000000e-01 : f32
    %849 = vector.broadcast %cst_256 : f32 to vector<1x11xf32>
    %850 = arith.cmpf ogt, %836, %849 : vector<1x11xf32>
    %cst_257 = arith.constant -1.000000e+30 : f32
    %851 = vector.broadcast %cst_257 : f32 to vector<1x11xf32>
    %852 = arith.select %850, %851, %816 : vector<1x11xi1>, vector<1x11xf32>
    %cst_258 = arith.constant dense<0xFF800000> : vector<1xf32>
    %853 = vector.multi_reduction <maximumf>, %852, %cst_258 [1] : vector<1x11xf32> to vector<1xf32>
    %854 = vector.shape_cast %853 : vector<1xf32> to vector<1x1xf32>
    %855 = vector.broadcast %854 : vector<1x1xf32> to vector<1x11xf32>
    %856 = arith.cmpf oge, %852, %855 : vector<1x11xf32>
    %cst_259 = arith.constant 1.100000e+01 : f32
    %857 = vector.broadcast %cst_259 : f32 to vector<1x11xf32>
    %858 = arith.select %856, %818, %857 : vector<1x11xi1>, vector<1x11xf32>
    %cst_260 = arith.constant dense<0x7F800000> : vector<1xf32>
    %859 = vector.multi_reduction <minimumf>, %858, %cst_260 [1] : vector<1x11xf32> to vector<1xf32>
    %860 = vector.shape_cast %859 : vector<1xf32> to vector<1x1xf32>
    %861 = vector.broadcast %860 : vector<1x1xf32> to vector<1x11xf32>
    %862 = arith.cmpf oeq, %818, %861 : vector<1x11xf32>
    %863 = arith.extui %862 : vector<1x11xi1> to vector<1x11xi32>
    %864 = arith.sitofp %863 : vector<1x11xi32> to vector<1x11xf32>
    %c1_i32_261 = arith.constant 1 : i32
    %865 = vector.broadcast %c1_i32_261 : i32 to vector<7x11xi32>
    %866 = arith.cmpi eq, %819, %865 : vector<7x11xi32>
    %867 = vector.shape_cast %864 : vector<1x11xf32> to vector<1x11xf32>
    %868 = vector.broadcast %867 : vector<1x11xf32> to vector<7x11xf32>
    %869 = arith.select %866, %868, %841 : vector<7x11xi1>, vector<7x11xf32>
    %c1_i32_262 = arith.constant 1 : i32
    %870 = vector.broadcast %c1_i32_262 : i32 to vector<11x7xi32>
    %871 = arith.cmpi eq, %820, %870 : vector<11x7xi32>
    %872 = vector.broadcast %860 : vector<1x1xf32> to vector<11x7xf32>
    %873 = arith.cmpf oeq, %822, %872 : vector<11x7xf32>
    %874 = arith.andi %871, %873 : vector<11x7xi1>
    %cst_263 = arith.constant 1.000000e+00 : f32
    %875 = vector.broadcast %cst_263 : f32 to vector<11x7xf32>
    %876 = arith.select %874, %875, %848 : vector<11x7xi1>, vector<11x7xf32>
    %cst_264 = arith.constant 5.000000e-01 : f32
    %877 = vector.broadcast %cst_264 : f32 to vector<1x11xf32>
    %878 = arith.cmpf ogt, %864, %877 : vector<1x11xf32>
    %cst_265 = arith.constant -1.000000e+30 : f32
    %879 = vector.broadcast %cst_265 : f32 to vector<1x11xf32>
    %880 = arith.select %878, %879, %852 : vector<1x11xi1>, vector<1x11xf32>
    %cst_266 = arith.constant dense<0xFF800000> : vector<1xf32>
    %881 = vector.multi_reduction <maximumf>, %880, %cst_266 [1] : vector<1x11xf32> to vector<1xf32>
    %882 = vector.shape_cast %881 : vector<1xf32> to vector<1x1xf32>
    %883 = vector.broadcast %882 : vector<1x1xf32> to vector<1x11xf32>
    %884 = arith.cmpf oge, %880, %883 : vector<1x11xf32>
    %cst_267 = arith.constant 1.100000e+01 : f32
    %885 = vector.broadcast %cst_267 : f32 to vector<1x11xf32>
    %886 = arith.select %884, %818, %885 : vector<1x11xi1>, vector<1x11xf32>
    %cst_268 = arith.constant dense<0x7F800000> : vector<1xf32>
    %887 = vector.multi_reduction <minimumf>, %886, %cst_268 [1] : vector<1x11xf32> to vector<1xf32>
    %888 = vector.shape_cast %887 : vector<1xf32> to vector<1x1xf32>
    %889 = vector.broadcast %888 : vector<1x1xf32> to vector<1x11xf32>
    %890 = arith.cmpf oeq, %818, %889 : vector<1x11xf32>
    %891 = arith.extui %890 : vector<1x11xi1> to vector<1x11xi32>
    %892 = arith.sitofp %891 : vector<1x11xi32> to vector<1x11xf32>
    %c2_i32_269 = arith.constant 2 : i32
    %893 = vector.broadcast %c2_i32_269 : i32 to vector<7x11xi32>
    %894 = arith.cmpi eq, %819, %893 : vector<7x11xi32>
    %895 = vector.shape_cast %892 : vector<1x11xf32> to vector<1x11xf32>
    %896 = vector.broadcast %895 : vector<1x11xf32> to vector<7x11xf32>
    %897 = arith.select %894, %896, %869 : vector<7x11xi1>, vector<7x11xf32>
    %c2_i32_270 = arith.constant 2 : i32
    %898 = vector.broadcast %c2_i32_270 : i32 to vector<11x7xi32>
    %899 = arith.cmpi eq, %820, %898 : vector<11x7xi32>
    %900 = vector.broadcast %888 : vector<1x1xf32> to vector<11x7xf32>
    %901 = arith.cmpf oeq, %822, %900 : vector<11x7xf32>
    %902 = arith.andi %899, %901 : vector<11x7xi1>
    %cst_271 = arith.constant 1.000000e+00 : f32
    %903 = vector.broadcast %cst_271 : f32 to vector<11x7xf32>
    %904 = arith.select %902, %903, %876 : vector<11x7xi1>, vector<11x7xf32>
    %cst_272 = arith.constant 5.000000e-01 : f32
    %905 = vector.broadcast %cst_272 : f32 to vector<1x11xf32>
    %906 = arith.cmpf ogt, %892, %905 : vector<1x11xf32>
    %cst_273 = arith.constant -1.000000e+30 : f32
    %907 = vector.broadcast %cst_273 : f32 to vector<1x11xf32>
    %908 = arith.select %906, %907, %880 : vector<1x11xi1>, vector<1x11xf32>
    %cst_274 = arith.constant dense<0xFF800000> : vector<1xf32>
    %909 = vector.multi_reduction <maximumf>, %908, %cst_274 [1] : vector<1x11xf32> to vector<1xf32>
    %910 = vector.shape_cast %909 : vector<1xf32> to vector<1x1xf32>
    %911 = vector.broadcast %910 : vector<1x1xf32> to vector<1x11xf32>
    %912 = arith.cmpf oge, %908, %911 : vector<1x11xf32>
    %cst_275 = arith.constant 1.100000e+01 : f32
    %913 = vector.broadcast %cst_275 : f32 to vector<1x11xf32>
    %914 = arith.select %912, %818, %913 : vector<1x11xi1>, vector<1x11xf32>
    %cst_276 = arith.constant dense<0x7F800000> : vector<1xf32>
    %915 = vector.multi_reduction <minimumf>, %914, %cst_276 [1] : vector<1x11xf32> to vector<1xf32>
    %916 = vector.shape_cast %915 : vector<1xf32> to vector<1x1xf32>
    %917 = vector.broadcast %916 : vector<1x1xf32> to vector<1x11xf32>
    %918 = arith.cmpf oeq, %818, %917 : vector<1x11xf32>
    %919 = arith.extui %918 : vector<1x11xi1> to vector<1x11xi32>
    %920 = arith.sitofp %919 : vector<1x11xi32> to vector<1x11xf32>
    %c3_i32_277 = arith.constant 3 : i32
    %921 = vector.broadcast %c3_i32_277 : i32 to vector<7x11xi32>
    %922 = arith.cmpi eq, %819, %921 : vector<7x11xi32>
    %923 = vector.shape_cast %920 : vector<1x11xf32> to vector<1x11xf32>
    %924 = vector.broadcast %923 : vector<1x11xf32> to vector<7x11xf32>
    %925 = arith.select %922, %924, %897 : vector<7x11xi1>, vector<7x11xf32>
    %c3_i32_278 = arith.constant 3 : i32
    %926 = vector.broadcast %c3_i32_278 : i32 to vector<11x7xi32>
    %927 = arith.cmpi eq, %820, %926 : vector<11x7xi32>
    %928 = vector.broadcast %916 : vector<1x1xf32> to vector<11x7xf32>
    %929 = arith.cmpf oeq, %822, %928 : vector<11x7xf32>
    %930 = arith.andi %927, %929 : vector<11x7xi1>
    %cst_279 = arith.constant 1.000000e+00 : f32
    %931 = vector.broadcast %cst_279 : f32 to vector<11x7xf32>
    %932 = arith.select %930, %931, %904 : vector<11x7xi1>, vector<11x7xf32>
    %cst_280 = arith.constant 5.000000e-01 : f32
    %933 = vector.broadcast %cst_280 : f32 to vector<1x11xf32>
    %934 = arith.cmpf ogt, %920, %933 : vector<1x11xf32>
    %cst_281 = arith.constant -1.000000e+30 : f32
    %935 = vector.broadcast %cst_281 : f32 to vector<1x11xf32>
    %936 = arith.select %934, %935, %908 : vector<1x11xi1>, vector<1x11xf32>
    %cst_282 = arith.constant dense<0xFF800000> : vector<1xf32>
    %937 = vector.multi_reduction <maximumf>, %936, %cst_282 [1] : vector<1x11xf32> to vector<1xf32>
    %938 = vector.shape_cast %937 : vector<1xf32> to vector<1x1xf32>
    %939 = vector.broadcast %938 : vector<1x1xf32> to vector<1x11xf32>
    %940 = arith.cmpf oge, %936, %939 : vector<1x11xf32>
    %cst_283 = arith.constant 1.100000e+01 : f32
    %941 = vector.broadcast %cst_283 : f32 to vector<1x11xf32>
    %942 = arith.select %940, %818, %941 : vector<1x11xi1>, vector<1x11xf32>
    %cst_284 = arith.constant dense<0x7F800000> : vector<1xf32>
    %943 = vector.multi_reduction <minimumf>, %942, %cst_284 [1] : vector<1x11xf32> to vector<1xf32>
    %944 = vector.shape_cast %943 : vector<1xf32> to vector<1x1xf32>
    %945 = vector.broadcast %944 : vector<1x1xf32> to vector<1x11xf32>
    %946 = arith.cmpf oeq, %818, %945 : vector<1x11xf32>
    %947 = arith.extui %946 : vector<1x11xi1> to vector<1x11xi32>
    %948 = arith.sitofp %947 : vector<1x11xi32> to vector<1x11xf32>
    %c4_i32_285 = arith.constant 4 : i32
    %949 = vector.broadcast %c4_i32_285 : i32 to vector<7x11xi32>
    %950 = arith.cmpi eq, %819, %949 : vector<7x11xi32>
    %951 = vector.shape_cast %948 : vector<1x11xf32> to vector<1x11xf32>
    %952 = vector.broadcast %951 : vector<1x11xf32> to vector<7x11xf32>
    %953 = arith.select %950, %952, %925 : vector<7x11xi1>, vector<7x11xf32>
    %c4_i32_286 = arith.constant 4 : i32
    %954 = vector.broadcast %c4_i32_286 : i32 to vector<11x7xi32>
    %955 = arith.cmpi eq, %820, %954 : vector<11x7xi32>
    %956 = vector.broadcast %944 : vector<1x1xf32> to vector<11x7xf32>
    %957 = arith.cmpf oeq, %822, %956 : vector<11x7xf32>
    %958 = arith.andi %955, %957 : vector<11x7xi1>
    %cst_287 = arith.constant 1.000000e+00 : f32
    %959 = vector.broadcast %cst_287 : f32 to vector<11x7xf32>
    %960 = arith.select %958, %959, %932 : vector<11x7xi1>, vector<11x7xf32>
    %cst_288 = arith.constant 5.000000e-01 : f32
    %961 = vector.broadcast %cst_288 : f32 to vector<1x11xf32>
    %962 = arith.cmpf ogt, %948, %961 : vector<1x11xf32>
    %cst_289 = arith.constant -1.000000e+30 : f32
    %963 = vector.broadcast %cst_289 : f32 to vector<1x11xf32>
    %964 = arith.select %962, %963, %936 : vector<1x11xi1>, vector<1x11xf32>
    %cst_290 = arith.constant dense<0xFF800000> : vector<1xf32>
    %965 = vector.multi_reduction <maximumf>, %964, %cst_290 [1] : vector<1x11xf32> to vector<1xf32>
    %966 = vector.shape_cast %965 : vector<1xf32> to vector<1x1xf32>
    %967 = vector.broadcast %966 : vector<1x1xf32> to vector<1x11xf32>
    %968 = arith.cmpf oge, %964, %967 : vector<1x11xf32>
    %cst_291 = arith.constant 1.100000e+01 : f32
    %969 = vector.broadcast %cst_291 : f32 to vector<1x11xf32>
    %970 = arith.select %968, %818, %969 : vector<1x11xi1>, vector<1x11xf32>
    %cst_292 = arith.constant dense<0x7F800000> : vector<1xf32>
    %971 = vector.multi_reduction <minimumf>, %970, %cst_292 [1] : vector<1x11xf32> to vector<1xf32>
    %972 = vector.shape_cast %971 : vector<1xf32> to vector<1x1xf32>
    %973 = vector.broadcast %972 : vector<1x1xf32> to vector<1x11xf32>
    %974 = arith.cmpf oeq, %818, %973 : vector<1x11xf32>
    %975 = arith.extui %974 : vector<1x11xi1> to vector<1x11xi32>
    %976 = arith.sitofp %975 : vector<1x11xi32> to vector<1x11xf32>
    %c5_i32_293 = arith.constant 5 : i32
    %977 = vector.broadcast %c5_i32_293 : i32 to vector<7x11xi32>
    %978 = arith.cmpi eq, %819, %977 : vector<7x11xi32>
    %979 = vector.shape_cast %976 : vector<1x11xf32> to vector<1x11xf32>
    %980 = vector.broadcast %979 : vector<1x11xf32> to vector<7x11xf32>
    %981 = arith.select %978, %980, %953 : vector<7x11xi1>, vector<7x11xf32>
    %c5_i32_294 = arith.constant 5 : i32
    %982 = vector.broadcast %c5_i32_294 : i32 to vector<11x7xi32>
    %983 = arith.cmpi eq, %820, %982 : vector<11x7xi32>
    %984 = vector.broadcast %972 : vector<1x1xf32> to vector<11x7xf32>
    %985 = arith.cmpf oeq, %822, %984 : vector<11x7xf32>
    %986 = arith.andi %983, %985 : vector<11x7xi1>
    %cst_295 = arith.constant 1.000000e+00 : f32
    %987 = vector.broadcast %cst_295 : f32 to vector<11x7xf32>
    %988 = arith.select %986, %987, %960 : vector<11x7xi1>, vector<11x7xf32>
    %cst_296 = arith.constant 5.000000e-01 : f32
    %989 = vector.broadcast %cst_296 : f32 to vector<1x11xf32>
    %990 = arith.cmpf ogt, %976, %989 : vector<1x11xf32>
    %cst_297 = arith.constant -1.000000e+30 : f32
    %991 = vector.broadcast %cst_297 : f32 to vector<1x11xf32>
    %992 = arith.select %990, %991, %964 : vector<1x11xi1>, vector<1x11xf32>
    %cst_298 = arith.constant dense<0xFF800000> : vector<1xf32>
    %993 = vector.multi_reduction <maximumf>, %992, %cst_298 [1] : vector<1x11xf32> to vector<1xf32>
    %994 = vector.shape_cast %993 : vector<1xf32> to vector<1x1xf32>
    %995 = vector.broadcast %994 : vector<1x1xf32> to vector<1x11xf32>
    %996 = arith.cmpf oge, %992, %995 : vector<1x11xf32>
    %cst_299 = arith.constant 1.100000e+01 : f32
    %997 = vector.broadcast %cst_299 : f32 to vector<1x11xf32>
    %998 = arith.select %996, %818, %997 : vector<1x11xi1>, vector<1x11xf32>
    %cst_300 = arith.constant dense<0x7F800000> : vector<1xf32>
    %999 = vector.multi_reduction <minimumf>, %998, %cst_300 [1] : vector<1x11xf32> to vector<1xf32>
    %1000 = vector.shape_cast %999 : vector<1xf32> to vector<1x1xf32>
    %1001 = vector.broadcast %1000 : vector<1x1xf32> to vector<1x11xf32>
    %1002 = arith.cmpf oeq, %818, %1001 : vector<1x11xf32>
    %1003 = arith.extui %1002 : vector<1x11xi1> to vector<1x11xi32>
    %1004 = arith.sitofp %1003 : vector<1x11xi32> to vector<1x11xf32>
    %c6_i32_301 = arith.constant 6 : i32
    %1005 = vector.broadcast %c6_i32_301 : i32 to vector<7x11xi32>
    %1006 = arith.cmpi eq, %819, %1005 : vector<7x11xi32>
    %1007 = vector.shape_cast %1004 : vector<1x11xf32> to vector<1x11xf32>
    %1008 = vector.broadcast %1007 : vector<1x11xf32> to vector<7x11xf32>
    %1009 = arith.select %1006, %1008, %981 : vector<7x11xi1>, vector<7x11xf32>
    %c6_i32_302 = arith.constant 6 : i32
    %1010 = vector.broadcast %c6_i32_302 : i32 to vector<11x7xi32>
    %1011 = arith.cmpi eq, %820, %1010 : vector<11x7xi32>
    %1012 = vector.broadcast %1000 : vector<1x1xf32> to vector<11x7xf32>
    %1013 = arith.cmpf oeq, %822, %1012 : vector<11x7xf32>
    %1014 = arith.andi %1011, %1013 : vector<11x7xi1>
    %cst_303 = arith.constant 1.000000e+00 : f32
    %1015 = vector.broadcast %cst_303 : f32 to vector<11x7xf32>
    %1016 = arith.select %1014, %1015, %988 : vector<11x7xi1>, vector<11x7xf32>
    %1017 = vector.broadcast %816 : vector<1x11xf32> to vector<7x11xf32>
    %1018 = arith.mulf %1009, %1017 : vector<7x11xf32>
    %cst_304 = arith.constant dense<0.000000e+00> : vector<7xf32>
    %1019 = vector.multi_reduction <add>, %1018, %cst_304 [1] : vector<7x11xf32> to vector<7xf32>
    %1020 = vector.shape_cast %1019 : vector<7xf32> to vector<7x1xf32>
    %1021 = arith.truncf %1009 : vector<7x11xf32> to vector<7x11xbf16>
    %1022 = arith.truncf %802 : vector<11x128xf32> to vector<11x128xbf16>
    %cst_305 = arith.constant dense<0.000000e+00> : vector<7x128xf32>
    %1023 = tpu.matmul %1021, %1022, %cst_305 {dimension_numbers = #tpu.dot_dimension_numbers<[1], [0], [0], [1], [0, 0, 1, 1], [], []>} : vector<7x11xbf16>, vector<11x128xbf16>, vector<7x128xf32> -> vector<7x128xf32>
    %1024 = vector.broadcast %1020 : vector<7x1xf32> to vector<7x128xf32>
    %1025 = arith.mulf %1023, %1024 : vector<7x128xf32>
    %c0_306 = arith.constant 0 : index
    %c0_307 = arith.constant 0 : index
    %1026 = vector.load %arg7[%c0_306, %c0_307] : memref<128x128xbf16, #tpu.memory_space<vmem>>, vector<128x128xbf16>
    %c0_308 = arith.constant 0 : index
    %c0_309 = arith.constant 0 : index
    %1027 = vector.load %arg8[%c0_308, %c0_309] : memref<1x128xf32, #tpu.memory_space<vmem>>, vector<1x128xf32>
    %1028 = arith.truncf %1025 : vector<7x128xf32> to vector<7x128xbf16>
    %cst_310 = arith.constant dense<0.000000e+00> : vector<7x128xf32>
    %1029 = tpu.matmul %1028, %1026, %cst_310 {dimension_numbers = #tpu.dot_dimension_numbers<[1], [0], [0], [1], [0, 0, 1, 1], [], []>} : vector<7x128xbf16>, vector<128x128xbf16>, vector<7x128xf32> -> vector<7x128xf32>
    %1030 = vector.broadcast %1027 : vector<1x128xf32> to vector<7x128xf32>
    %1031 = arith.addf %1029, %1030 : vector<7x128xf32>
    %cst_311 = arith.constant 0.000000e+00 : f32
    %1032 = vector.broadcast %cst_311 : f32 to vector<7x128xf32>
    %1033 = arith.cmpf ogt, %1031, %1032 : vector<7x128xf32>
    %cst_312 = arith.constant 0.000000e+00 : f32
    %1034 = vector.broadcast %cst_312 : f32 to vector<7x128xf32>
    %1035 = arith.minimumf %1031, %1034 : vector<7x128xf32>
    %1036 = math.exp %1035 : vector<7x128xf32>
    %cst_313 = arith.constant 1.000000e+00 : f32
    %1037 = vector.broadcast %cst_313 : f32 to vector<7x128xf32>
    %1038 = arith.subf %1036, %1037 : vector<7x128xf32>
    %1039 = arith.select %1033, %1031, %1038 : vector<7x128xi1>, vector<7x128xf32>
    %1040 = arith.truncf %1016 : vector<11x7xf32> to vector<11x7xbf16>
    %1041 = arith.truncf %1039 : vector<7x128xf32> to vector<7x128xbf16>
    %cst_314 = arith.constant dense<0.000000e+00> : vector<11x128xf32>
    %1042 = tpu.matmul %1040, %1041, %cst_314 {dimension_numbers = #tpu.dot_dimension_numbers<[1], [0], [0], [1], [0, 0, 1, 1], [], []>} : vector<11x7xbf16>, vector<7x128xbf16>, vector<11x128xf32> -> vector<11x128xf32>
    %c0_315 = arith.constant 0 : index
    %c0_316 = arith.constant 0 : index
    %c0_317 = arith.constant 0 : index
    %1043 = vector.load %arg5[%c0_315, %c0_316, %c0_317] : memref<3x128x128xbf16, #tpu.memory_space<vmem>>, vector<1x128x128xbf16>
    %1044 = vector.shape_cast %1043 : vector<1x128x128xbf16> to vector<128x128xbf16>
    %c0_318 = arith.constant 0 : index
    %c0_319 = arith.constant 0 : index
    %c0_320 = arith.constant 0 : index
    %1045 = vector.load %arg6[%c0_318, %c0_319, %c0_320] : memref<3x1x128xf32, #tpu.memory_space<vmem>>, vector<1x1x128xf32>
    %1046 = vector.shape_cast %1045 : vector<1x1x128xf32> to vector<1x128xf32>
    %1047 = arith.truncf %1042 : vector<11x128xf32> to vector<11x128xbf16>
    %cst_321 = arith.constant dense<0.000000e+00> : vector<11x128xf32>
    %1048 = tpu.matmul %1047, %1044, %cst_321 {dimension_numbers = #tpu.dot_dimension_numbers<[1], [0], [0], [1], [0, 0, 1, 1], [], []>} : vector<11x128xbf16>, vector<128x128xbf16>, vector<11x128xf32> -> vector<11x128xf32>
    %1049 = vector.broadcast %1046 : vector<1x128xf32> to vector<11x128xf32>
    %1050 = arith.addf %1048, %1049 : vector<11x128xf32>
    %cst_322 = arith.constant 0.000000e+00 : f32
    %1051 = vector.broadcast %cst_322 : f32 to vector<11x128xf32>
    %1052 = arith.cmpf ogt, %1050, %1051 : vector<11x128xf32>
    %cst_323 = arith.constant 0.000000e+00 : f32
    %1053 = vector.broadcast %cst_323 : f32 to vector<11x128xf32>
    %1054 = arith.minimumf %1050, %1053 : vector<11x128xf32>
    %1055 = math.exp %1054 : vector<11x128xf32>
    %cst_324 = arith.constant 1.000000e+00 : f32
    %1056 = vector.broadcast %cst_324 : f32 to vector<11x128xf32>
    %1057 = arith.subf %1055, %1056 : vector<11x128xf32>
    %1058 = arith.select %1052, %1050, %1057 : vector<11x128xi1>, vector<11x128xf32>
    %1059 = arith.addf %1058, %802 : vector<11x128xf32>
    %c0_325 = arith.constant 0 : index
    %c0_326 = arith.constant 0 : index
    %1060 = vector.load %arg9[%c0_325, %c0_326] : memref<11x128xf32, #tpu.memory_space<vmem>>, vector<11x128xf32>
    tpu.vector_store %arg9[%c0_325, %c0_326], %1059 {strides = array<i32>} : memref<11x128xf32, #tpu.memory_space<vmem>>, vector<11x128xf32>,
    %1061 = arith.truncf %777 : vector<14x11xf32> to vector<14x11xbf16>
    %1062 = arith.truncf %1059 : vector<11x128xf32> to vector<11x128xbf16>
    %cst_327 = arith.constant dense<0.000000e+00> : vector<14x128xf32>
    %1063 = tpu.matmul %1061, %1062, %cst_327 {dimension_numbers = #tpu.dot_dimension_numbers<[1], [0], [0], [1], [0, 0, 1, 1], [], []>} : vector<14x11xbf16>, vector<11x128xbf16>, vector<14x128xf32> -> vector<14x128xf32>
    %c1_328 = arith.constant 1 : index
    %c0_329 = arith.constant 0 : index
    %c0_330 = arith.constant 0 : index
    %1064 = vector.load %arg5[%c1_328, %c0_329, %c0_330] : memref<3x128x128xbf16, #tpu.memory_space<vmem>>, vector<1x128x128xbf16>
    %1065 = vector.shape_cast %1064 : vector<1x128x128xbf16> to vector<128x128xbf16>
    %c1_331 = arith.constant 1 : index
    %c0_332 = arith.constant 0 : index
    %c0_333 = arith.constant 0 : index
    %1066 = vector.load %arg6[%c1_331, %c0_332, %c0_333] : memref<3x1x128xf32, #tpu.memory_space<vmem>>, vector<1x1x128xf32>
    %1067 = vector.shape_cast %1066 : vector<1x1x128xf32> to vector<1x128xf32>
    %1068 = arith.truncf %1063 : vector<14x128xf32> to vector<14x128xbf16>
    %cst_334 = arith.constant dense<0.000000e+00> : vector<14x128xf32>
    %1069 = tpu.matmul %1068, %1065, %cst_334 {dimension_numbers = #tpu.dot_dimension_numbers<[1], [0], [0], [1], [0, 0, 1, 1], [], []>} : vector<14x128xbf16>, vector<128x128xbf16>, vector<14x128xf32> -> vector<14x128xf32>
    %1070 = vector.broadcast %1067 : vector<1x128xf32> to vector<14x128xf32>
    %1071 = arith.addf %1069, %1070 : vector<14x128xf32>
    %cst_335 = arith.constant 0.000000e+00 : f32
    %1072 = vector.broadcast %cst_335 : f32 to vector<14x128xf32>
    %1073 = arith.cmpf ogt, %1071, %1072 : vector<14x128xf32>
    %cst_336 = arith.constant 0.000000e+00 : f32
    %1074 = vector.broadcast %cst_336 : f32 to vector<14x128xf32>
    %1075 = arith.minimumf %1071, %1074 : vector<14x128xf32>
    %1076 = math.exp %1075 : vector<14x128xf32>
    %cst_337 = arith.constant 1.000000e+00 : f32
    %1077 = vector.broadcast %cst_337 : f32 to vector<14x128xf32>
    %1078 = arith.subf %1076, %1077 : vector<14x128xf32>
    %1079 = arith.select %1073, %1071, %1078 : vector<14x128xi1>, vector<14x128xf32>
    %1080 = arith.addf %1079, %451 : vector<14x128xf32>
    %c0_338 = arith.constant 0 : index
    %c0_339 = arith.constant 0 : index
    %1081 = vector.load %arg10[%c0_338, %c0_339] : memref<14x128xf32, #tpu.memory_space<vmem>>, vector<14x128xf32>
    tpu.vector_store %arg10[%c0_338, %c0_339], %1080 {strides = array<i32>} : memref<14x128xf32, #tpu.memory_space<vmem>>, vector<14x128xf32>,
    %1082 = arith.truncf %426 : vector<16x14xf32> to vector<16x14xbf16>
    %1083 = arith.truncf %1080 : vector<14x128xf32> to vector<14x128xbf16>
    %cst_340 = arith.constant dense<0.000000e+00> : vector<16x128xf32>
    %1084 = tpu.matmul %1082, %1083, %cst_340 {dimension_numbers = #tpu.dot_dimension_numbers<[1], [0], [0], [1], [0, 0, 1, 1], [], []>} : vector<16x14xbf16>, vector<14x128xbf16>, vector<16x128xf32> -> vector<16x128xf32>
    %c2_341 = arith.constant 2 : index
    %c0_342 = arith.constant 0 : index
    %c0_343 = arith.constant 0 : index
    %1085 = vector.load %arg5[%c2_341, %c0_342, %c0_343] : memref<3x128x128xbf16, #tpu.memory_space<vmem>>, vector<1x128x128xbf16>
    %1086 = vector.shape_cast %1085 : vector<1x128x128xbf16> to vector<128x128xbf16>
    %c2_344 = arith.constant 2 : index
    %c0_345 = arith.constant 0 : index
    %c0_346 = arith.constant 0 : index
    %1087 = vector.load %arg6[%c2_344, %c0_345, %c0_346] : memref<3x1x128xf32, #tpu.memory_space<vmem>>, vector<1x1x128xf32>
    %1088 = vector.shape_cast %1087 : vector<1x1x128xf32> to vector<1x128xf32>
    %1089 = arith.truncf %1084 : vector<16x128xf32> to vector<16x128xbf16>
    %cst_347 = arith.constant dense<0.000000e+00> : vector<16x128xf32>
    %1090 = tpu.matmul %1089, %1086, %cst_347 {dimension_numbers = #tpu.dot_dimension_numbers<[1], [0], [0], [1], [0, 0, 1, 1], [], []>} : vector<16x128xbf16>, vector<128x128xbf16>, vector<16x128xf32> -> vector<16x128xf32>
    %1091 = vector.broadcast %1088 : vector<1x128xf32> to vector<16x128xf32>
    %1092 = arith.addf %1090, %1091 : vector<16x128xf32>
    %cst_348 = arith.constant 0.000000e+00 : f32
    %1093 = vector.broadcast %cst_348 : f32 to vector<16x128xf32>
    %1094 = arith.cmpf ogt, %1092, %1093 : vector<16x128xf32>
    %cst_349 = arith.constant 0.000000e+00 : f32
    %1095 = vector.broadcast %cst_349 : f32 to vector<16x128xf32>
    %1096 = arith.minimumf %1092, %1095 : vector<16x128xf32>
    %1097 = math.exp %1096 : vector<16x128xf32>
    %cst_350 = arith.constant 1.000000e+00 : f32
    %1098 = vector.broadcast %cst_350 : f32 to vector<16x128xf32>
    %1099 = arith.subf %1097, %1098 : vector<16x128xf32>
    %1100 = arith.select %1094, %1092, %1099 : vector<16x128xi1>, vector<16x128xf32>
    %1101 = arith.addf %1100, %16 : vector<16x128xf32>
    %c0_351 = arith.constant 0 : index
    %c0_352 = arith.constant 0 : index
    %1102 = vector.load %arg11[%c0_351, %c0_352] : memref<16x128xf32, #tpu.memory_space<vmem>>, vector<16x128xf32>
    tpu.vector_store %arg11[%c0_351, %c0_352], %1101 {strides = array<i32>} : memref<16x128xf32, #tpu.memory_space<vmem>>, vector<16x128xf32>,
    %1103 = arith.addf %1101, %0 : vector<16x128xf32>
    %c0_353 = arith.constant 0 : index
    %c0_354 = arith.constant 0 : index
    %1104 = vector.load %arg12[%c0_353, %c0_354] : memref<16x128xf32, #tpu.memory_space<vmem>>, vector<16x128xf32>
    tpu.vector_store %arg12[%c0_353, %c0_354], %1103 {strides = array<i32>} : memref<16x128xf32, #tpu.memory_space<vmem>>, vector<16x128xf32>,
    return
  }
}

</mosaic_0001>

<llo_original>
// kernel: graph_unet_forward.1
$region0: #{graph_unet_forward.1}
  #allocation0 [shape = 'u32[]', space=smem, size = 0x4, offset = 0x4, fixed_abs, tag = 'smem constant byte address 0x4 - core index']
  #allocation1 [shape = 'u32[144,128]{1,0:T(1,128)}', space=vmem, size = 0x12000, scoped, tag = 'internal scratch']
  %s0 = inlined_call_operand.vmem [shape: f32[16,128], index: 0, kind: input, shape index: {}]
  %s1 = inlined_call_operand.hbm [shape: bf16[3,128,128], index: 1, kind: input, shape index: {}]
  %s2 = inlined_call_operand.vmem [shape: f32[3,1,128], index: 2, kind: input, shape index: {}]
  %s3 = inlined_call_operand.vmem [shape: f32[3,1,128], index: 3, kind: input, shape index: {}]
  %s4 = inlined_call_operand.vmem [shape: f32[3,1,1], index: 4, kind: input, shape index: {}]
  %s5 = inlined_call_operand.hbm [shape: bf16[3,128,128], index: 5, kind: input, shape index: {}]
  %s6 = inlined_call_operand.vmem [shape: f32[3,1,128], index: 6, kind: input, shape index: {}]
  %s7 = inlined_call_operand.vmem [shape: bf16[128,128], index: 7, kind: input, shape index: {}]
  %s8 = inlined_call_operand.vmem [shape: f32[1,128], index: 8, kind: input, shape index: {}]
  %s9 = inlined_call_operand.hbm [shape: f32[11,128], index: 9, kind: output, shape index: {0}]
  %s10 = inlined_call_operand.hbm [shape: f32[14,128], index: 10, kind: output, shape index: {1}]
  %s11 = inlined_call_operand.hbm [shape: f32[16,128], index: 11, kind: output, shape index: {2}]
  %s12 = inlined_call_operand.hbm [shape: f32[16,128], index: 12, kind: output, shape index: {3}]
  %13 = xla_tuple %s9, %s10, %s11, %s12
  %s14 = sld [smem:[#allocation0]]
  $region78: #{graph_unet_forward.1} parent=0
    _
  %s16 = ssub.s32 1, %s14
  %s17 = scalar_select 0, %s16, %s14
  $region1: #{graph_unet_forward.1} parent=0
    #allocation2 [shape = 'u8[98304]{0}', space=vmem, size = 0x18000, scoped, tag = 'input window, operand 1, single buffered']
    #allocation3 [shape = 's32[1]{0}', space=sflag, size = 0x4, scoped, tag = 'scoped memory for graph_unet_forward.1']
    #allocation4 [shape = 's32[1]{0}', space=sflag, size = 0x4, scoped, tag = 'scoped memory for graph_unet_forward.1']
    #allocation5 [shape = 'u8[98304]{0}', space=vmem, size = 0x18000, scoped, tag = 'input window, operand 5, single buffered']
    #allocation6 [shape = 's32[1]{0}', space=sflag, size = 0x4, scoped, tag = 'scoped memory for graph_unet_forward.1']
    #allocation7 [shape = 'u8[8192]{0}', space=vmem, size = 0x2000, scoped, tag = 'output window, operand 0, single buffered']
    #allocation8 [shape = 'u8[8192]{0}', space=vmem, size = 0x2000, scoped, tag = 'output window, operand 1, single buffered']
    #allocation9 [shape = 's32[1]{0}', space=sflag, size = 0x4, scoped, tag = 'scoped memory for graph_unet_forward.1']
    #allocation10 [shape = 'u8[8192]{0}', space=vmem, size = 0x2000, scoped, tag = 'output window, operand 2, single buffered']
    #allocation11 [shape = 'u8[8192]{0}', space=vmem, size = 0x2000, scoped, tag = 'output window, operand 3, single buffered']
    #allocation12 [shape = 's32[1]{0}', space=sflag, size = 0x4, scoped, tag = 'scoped memory for graph_unet_forward.1']
    %18 = vsyncpa [#allocation3], 0
    %19 = vsyncpa [#allocation6], 0
    %20 = vsyncpa [#allocation4], 0
    %21 = vsyncpa [#allocation9], 0
    %22 = vsyncpa [#allocation12], 0
    // Predicated region
    $region2: #{graph_unet_forward.1} parent=1 // pred_check
      _
    $region3: #{graph_unet_forward.1} parent=1 // pred_check_branch
      %24 = sbr.rel (0) target = $region5
    $region4: #{graph_unet_forward.1} parent=1 // pred_region
      _
    $region5: #{graph_unet_forward.1} parent=1 // pred_fallthru
      _
    // Predicated region
    $region6: #{graph_unet_forward.1} parent=1 // pred_check
      _
    $region7: #{graph_unet_forward.1} parent=1 // pred_check_branch
      %26 = sbr.rel (0) target = $region9
    $region8: #{graph_unet_forward.1} parent=1 // pred_region
      %s28 = ssub.s32 3072, 3072
      %29 = vsyncadd [#allocation3], %s28
      %s30 = sshll.u32 [#allocation2], 4
      %s31 = int_to_ptr.vmem [resolvable:$true] %s30
      %36 = dma.hbm_to_vmem [thread:$0]  %s1, 3072, %s31, [#allocation3], 64, 64, 4
    $region9: #{graph_unet_forward.1} parent=1 // pred_fallthru
      _
    // Predicated region
    $region10: #{graph_unet_forward.1} parent=1 // pred_check
      _
    $region11: #{graph_unet_forward.1} parent=1 // pred_check_branch
      %38 = sbr.rel (0) target = $region13
    $region12: #{graph_unet_forward.1} parent=1 // pred_region
      _
    $region13: #{graph_unet_forward.1} parent=1 // pred_fallthru
      _
    // Predicated region
    $region14: #{graph_unet_forward.1} parent=1 // pred_check
      _
    $region15: #{graph_unet_forward.1} parent=1 // pred_check_branch
      %40 = sbr.rel (0) target = $region17
    $region16: #{graph_unet_forward.1} parent=1 // pred_region
      _
    $region17: #{graph_unet_forward.1} parent=1 // pred_fallthru
      _
    // Predicated region
    $region18: #{graph_unet_forward.1} parent=1 // pred_check
      _
    $region19: #{graph_unet_forward.1} parent=1 // pred_check_branch
      %42 = sbr.rel (0) target = $region21
    $region20: #{graph_unet_forward.1} parent=1 // pred_region
      _
    $region21: #{graph_unet_forward.1} parent=1 // pred_fallthru
      _
    // Predicated region
    $region22: #{graph_unet_forward.1} parent=1 // pred_check
      _
    $region23: #{graph_unet_forward.1} parent=1 // pred_check_branch
      %44 = sbr.rel (0) target = $region25
    $region24: #{graph_unet_forward.1} parent=1 // pred_region
      %s46 = ssub.s32 3072, 3072
      %47 = vsyncadd [#allocation6], %s46
      %s48 = sshll.u32 [#allocation5], 4
      %s49 = int_to_ptr.vmem [resolvable:$true] %s48
      %54 = dma.hbm_to_vmem [thread:$0]  %s5, 3072, %s49, [#allocation6], 64, 64, 4
    $region25: #{graph_unet_forward.1} parent=1 // pred_fallthru
      _
    // Predicated region
    $region26: #{graph_unet_forward.1} parent=1 // pred_check
      _
    $region27: #{graph_unet_forward.1} parent=1 // pred_check_branch
      %56 = sbr.rel (0) target = $region29
    $region28: #{graph_unet_forward.1} parent=1 // pred_region
      _
    $region29: #{graph_unet_forward.1} parent=1 // pred_fallthru
      _
    // Predicated region
    $region30: #{graph_unet_forward.1} parent=1 // pred_check
      _
    $region31: #{graph_unet_forward.1} parent=1 // pred_check_branch
      %58 = sbr.rel (0) target = $region33
    $region32: #{graph_unet_forward.1} parent=1 // pred_region
      _
    $region33: #{graph_unet_forward.1} parent=1 // pred_fallthru
      _
    // Predicated region
    $region34: #{graph_unet_forward.1} parent=1 // pred_check
      _
    $region35: #{graph_unet_forward.1} parent=1 // pred_check_branch
      %60 = sbr.rel (0) target = $region37
    $region36: #{graph_unet_forward.1} parent=1 // pred_region
      _
    $region37: #{graph_unet_forward.1} parent=1 // pred_fallthru
      _
    // Predicated region
    $region38: #{graph_unet_forward.1} parent=1 // pred_check
      _
    $region39: #{graph_unet_forward.1} parent=1 // pred_check_branch
      %62 = sbr.rel (0) target = $region41
    $region40: #{graph_unet_forward.1} parent=1 // pred_region
      %63 = dma.done [#allocation3], 3072
    $region41: #{graph_unet_forward.1} parent=1 // pred_fallthru
      _
    // Predicated region
    $region42: #{graph_unet_forward.1} parent=1 // pred_check
      _
    $region43: #{graph_unet_forward.1} parent=1 // pred_check_branch
      %65 = sbr.rel (0) target = $region45
    $region44: #{graph_unet_forward.1} parent=1 // pred_region
      %66 = dma.done [#allocation6], 3072
    $region45: #{graph_unet_forward.1} parent=1 // pred_fallthru
      _
    %v68 = vld [vmem:[%s0] sm:$0xff]
    %v69 = vld [vmem:[%s0 + $0x8] sm:$0xff]
    %v70 = vld [vmem:[#allocation2] sm:$0xf]
    %v71 = vld [vmem:[#allocation2 + $0x4] sm:$0xf]
    %v72 = vld [vmem:[#allocation2 + $0x8] sm:$0xf]
    %v73 = vld [vmem:[#allocation2 + $0xc] sm:$0xf]
    %v74 = vld [vmem:[#allocation2 + $0x10] sm:$0xf]
    %v75 = vld [vmem:[#allocation2 + $0x14] sm:$0xf]
    %v76 = vld [vmem:[#allocation2 + $0x18] sm:$0xf]
    %v77 = vld [vmem:[#allocation2 + $0x1c] sm:$0xf]
    %v78 = vld [vmem:[#allocation2 + $0x20] sm:$0xf]
    %v79 = vld [vmem:[#allocation2 + $0x24] sm:$0xf]
    %v80 = vld [vmem:[#allocation2 + $0x28] sm:$0xf]
    %v81 = vld [vmem:[#allocation2 + $0x2c] sm:$0xf]
    %v82 = vld [vmem:[#allocation2 + $0x30] sm:$0xf]
    %v83 = vld [vmem:[#allocation2 + $0x34] sm:$0xf]
    %v84 = vld [vmem:[#allocation2 + $0x38] sm:$0xf]
    %v85 = vld [vmem:[#allocation2 + $0x3c] sm:$0xf]
    %v86 = vld [vmem:[%s2] sm:$0x1]
    %v87 = vpack.c.bf16 %v69, %v68
    %v89 = vlaneseq
    %v90 = vshrl.u32 %v89, 7
    %v91 = vsub.s32 0, %v90
    %v92 = vrot.slane %v86, %v91
    %v110 = vunpack.c.l.b16 %v70
    %v111 = vunpack.c.l.b16 %v71
    %v112 = vunpack.c.l.b16 %v72
    %v113 = vunpack.c.l.b16 %v73
    %v114 = vunpack.c.l.b16 %v74
    %v115 = vunpack.c.l.b16 %v75
    %v116 = vunpack.c.l.b16 %v76
    %v117 = vunpack.c.l.b16 %v77
    %v118 = vunpack.c.l.b16 %v78
    %v119 = vunpack.c.l.b16 %v79
    %v120 = vunpack.c.l.b16 %v80
    %v121 = vunpack.c.l.b16 %v81
    %v122 = vunpack.c.l.b16 %v82
    %v123 = vunpack.c.l.b16 %v83
    %v124 = vunpack.c.l.b16 %v84
    %v125 = vunpack.c.l.b16 %v85
    %v126 = vpack.c.b16 %v111, %v110
    %v127 = vpack.c.b16 %v113, %v112
    %v128 = vpack.c.b16 %v115, %v114
    %v129 = vpack.c.b16 %v117, %v116
    %v130 = vpack.c.b16 %v119, %v118
    %v131 = vpack.c.b16 %v121, %v120
    %v132 = vpack.c.b16 %v123, %v122
    %v133 = vpack.c.b16 %v125, %v124
    %142 = vmatprep.subr.bf16.mxu0 0
    %143 = vmatpush1.bf16.msra.mxu0 %v126
    %144 = vmatprep.subr.bf16.mxu0 0
    %145 = vmatpush1.bf16.msra.mxu0 %v127
    %146 = vmatprep.subr.bf16.mxu0 0
    %147 = vmatpush1.bf16.msra.mxu0 %v128
    %148 = vmatprep.subr.bf16.mxu0 0
    %149 = vmatpush1.bf16.msra.mxu0 %v129
    %150 = vmatprep.subr.bf16.mxu0 0
    %151 = vmatpush1.bf16.msra.mxu0 %v130
    %152 = vmatprep.subr.bf16.mxu0 0
    %153 = vmatpush1.bf16.msra.mxu0 %v131
    %154 = vmatprep.subr.bf16.mxu0 0
    %155 = vmatpush1.bf16.msra.mxu0 %v132
    %156 = vmatprep.subr.bf16.mxu0 0
    %157 = vmatpush1.bf16.msra.mxu0 %v133
    %158 = vmatprep.subr.bf16.mxu0 0
    %159 = vmatpush1.bf16.msra.mxu0 0
    %160 = vmatprep.subr.bf16.mxu0 0
    %161 = vmatpush1.bf16.msra.mxu0 0
    %162 = vmatprep.subr.bf16.mxu0 0
    %163 = vmatpush1.bf16.msra.mxu0 0
    %164 = vmatprep.subr.bf16.mxu0 0
    %165 = vmatpush1.bf16.msra.mxu0 0
    %166 = vmatprep.subr.bf16.mxu0 0
    %167 = vmatpush1.bf16.msra.mxu0 0
    %168 = vmatprep.subr.bf16.mxu0 0
    %169 = vmatpush1.bf16.msra.mxu0 0
    %170 = vmatprep.subr.bf16.mxu0 0
    %171 = vmatpush1.bf16.msra.mxu0 0
    %172 = vmatprep.subr.bf16.mxu0 0
    %173 = vmatpush1.bf16.msra.mxu0 0
    %174 = vmatprep.mubr.bf16.mxu0 0
    %175 = vmatmul.mubr.bf16.gmra.mrb[0].mxu0 %v87
    %v176 = vpop.f32.mrb[0].mxu0
    %v177 = vadd.f32 %v92, %v176
    %v178 = vpop.f32.mrb[0].mxu0
    %v179 = vpop.f32.mrb[0].mxu0
    %v180 = vadd.f32 %v92, %v179
    %v181 = vpop.f32.mrb[0].mxu0
    %182 = vdwg.mxu0
    %vm183 = vcmp.gt.f32.partialorder %v177, 0.0
    %vm184 = vcmp.gt.f32.partialorder %v180, 0.0
    %v185 = vmin.f32 %v177, 0.0
    %v186 = vmin.f32 %v180, 0.0
    %v187 = vmul.f32 %v185, 1.442695
    %v188 = vpow.pop %v187
    %v189 = vmul.f32 %v186, 1.442695
    %v190 = vpow.pop %v189
    %v191 = vsub.f32 %v188, 1.0
    %v192 = vsub.f32 %v190, 1.0
    %v193 = vsel %vm183, %v177, %v191
    %v194 = vsel %vm184, %v180, %v192
    %v195 = vld [vmem:[%s3] sm:$0x1]
    %v196 = vld [vmem:[%s4] sm:$0x1]
    %198 = vset.pattern.permute.xlu0 0
    %199 = vperm.xlu0 %198, %v196
    %v200 = vpop.permute.xlu0 %199
    %v202 = vlaneseq
    %v203 = vshrl.u32 %v202, 7
    %v204 = vsub.s32 0, %v203
    %v205 = vrot.slane %v200, %v204
    %206 = vmatprep.subr.mxu0 0.0
    %207 = vmatpush1.xpose.msra.mxu0 %v193
    %208 = vmatprep.subr.mxu0 0.0
    %209 = vmatpush1.xpose.msra.mxu0 %v194
    %210 = vmatprep.subr.mxu0 0.0
    %211 = vmatpush1.xpose.msra.mxu0 0.0
    %212 = vmatprep.subr.mxu0 0.0
    %213 = vmatpush1.xpose.msra.mxu0 0.0
    %214 = vmatprep.subr.mxu0 0.0
    %215 = vmatpush1.xpose.msra.mxu0 0.0
    %216 = vmatprep.subr.mxu0 0.0
    %217 = vmatpush1.xpose.msra.mxu0 0.0
    %218 = vmatprep.subr.mxu0 0.0
    %219 = vmatpush1.xpose.msra.mxu0 0.0
    %220 = vmatprep.subr.mxu0 0.0
    %221 = vmatpush1.xpose.msra.mxu0 0.0
    %222 = vmatprep.subr.mxu0 0.0
    %223 = vmatpush1.xpose.msra.mxu0 0.0
    %224 = vmatprep.subr.mxu0 0.0
    %225 = vmatpush1.xpose.msra.mxu0 0.0
    %226 = vmatprep.subr.mxu0 0.0
    %227 = vmatpush1.xpose.msra.mxu0 0.0
    %228 = vmatprep.subr.mxu0 0.0
    %229 = vmatpush1.xpose.msra.mxu0 0.0
    %230 = vmatprep.subr.mxu0 0.0
    %231 = vmatpush1.xpose.msra.mxu0 0.0
    %232 = vmatprep.subr.mxu0 0.0
    %233 = vmatpush1.xpose.msra.mxu0 0.0
    %234 = vmatprep.subr.mxu0 0.0
    %235 = vmatpush1.xpose.msra.mxu0 0.0
    %236 = vmatprep.subr.mxu0 0.0
    %237 = vmatpush1.xpose.msra.mxu0 0.0
    %238 = vmatprep.subr.mxu0 0.0
    %239 = vmatpush1.xpose.msra.mxu0 0.0
    %240 = vmatprep.subr.mxu0 0.0
    %241 = vmatpush1.xpose.msra.mxu0 0.0
    %242 = vmatprep.subr.mxu0 0.0
    %243 = vmatpush1.xpose.msra.mxu0 0.0
    %244 = vmatprep.subr.mxu0 0.0
    %245 = vmatpush1.xpose.msra.mxu0 0.0
    %246 = vmatprep.subr.mxu0 0.0
    %247 = vmatpush1.xpose.msra.mxu0 0.0
    %248 = vmatprep.subr.mxu0 0.0
    %249 = vmatpush1.xpose.msra.mxu0 0.0
    %250 = vmatprep.subr.mxu0 0.0
    %251 = vmatpush1.xpose.msra.mxu0 0.0
    %252 = vmatprep.subr.mxu0 0.0
    %253 = vmatpush1.xpose.msra.mxu0 0.0
    %254 = vmatprep.subr.mxu0 0.0
    %255 = vmatpush1.xpose.msra.mxu0 0.0
    %256 = vmatprep.subr.mxu0 0.0
    %257 = vmatpush1.xpose.msra.mxu0 0.0
    %258 = vmatprep.subr.mxu0 0.0
    %259 = vmatpush1.xpose.msra.mxu0 0.0
    %260 = vmatprep.subr.mxu0 0.0
    %261 = vmatpush1.xpose.msra.mxu0 0.0
    %262 = vmatprep.subr.mxu0 0.0
    %263 = vmatpush1.xpose.msra.mxu0 0.0
    %264 = vmatprep.subr.mxu0 0.0
    %265 = vmatpush1.xpose.msra.mxu0 0.0
    %266 = vmatprep.subr.mxu0 0.0
    %267 = vmatpush1.xpose.msra.mxu0 0.0
    %268 = vmatprep.subr.mxu0 0.0
    %269 = vmatpush1.xpose.msra.mxu0 0.0
    %270 = vmatprep.mubr.f32.mxu0 0.0
    %271 = vmatmul.mubr.f32.gmra.mrb[0].mxu0 %v195
    %v272 = vpop.f32.mrb[0].mxu0
    %v273 = vadd.f32 %v205, %v272
    %v274 = vpop.f32.mrb[0].mxu0
    %275 = vdwg.mxu0
    %v276 = vsub.f32 0.0, %v273
    %v277 = vmul.f32 %v276, 1.442695
    %v278 = vpow.pop %v277
    %v279 = vadd.f32 %v278, 1.0
    %v280 = vrcp.pop %v279
    %v281 = vmul.f32 1.0, %v280
    %v282 = vlaneseq
    %v283 = vand.u32 %v282, 127
    %v284 = vcvt.s32.f32 %v283
    %v285 = vlaneseq
    %v286 = vshrl.u32 %v285, 7
    %v287 = vadd.s32 %v286, 8
    %v288 = vcvt.s32.f32 %v286
    %v289 = vcvt.s32.f32 %v287
    %vm290 = vcmask 122880
    %v291 = vsel %vm290, %v281, -inf
    %292 = vmax.xlane.f32.xlu0 %v291
    %v293 = vpop.xlane.xlu0 %292
    %vm294 = vcmp.ge.f32.partialorder %v281, %v293
    %v295 = vsel %vm294, %v284, 16.0
    %v296 = vsel %vm290, %v295, inf
    %297 = vmin.xlane.f32.xlu0 %v296
    %v298 = vpop.xlane.xlu0 %297
    %vm299 = vcmp.eq.f32.partialorder %v284, %v298
    %v300 = vsel %vm299, 1, 0
    %v301 = vcvt.s32.f32 %v300
    %vm302 = vcmp.eq.s32.totalorder %v286, 0
    %vm303 = vcmp.eq.s32.totalorder %v287, 0
    %v304 = vlaneseq
    %v305 = vshrl.u32 %v304, 7
    %v306 = vsub.s32 0, %v305
    %v307 = vrot.slane %v301, %v306
    %v308 = vsel %vm302, %v307, 0.0
    %v309 = vsel %vm303, %v307, 0.0
    %vm310 = vcmp.eq.s32.totalorder %v283, 0
    %v311 = vlaneseq
    %v312 = vshrl.u32 %v311, 7
    %v313 = vsub.s32 0, %v312
    %v314 = vrot.slane %v298, %v313
    %vm315 = vcmp.eq.f32.partialorder %v288, %v314
    %vm316 = vcmp.eq.f32.partialorder %v289, %v314
    %vm317 = vmand %vm310, %vm315
    %vm318 = vmand %vm310, %vm316
    %v319 = vsel %vm317, 1.0, 0.0
    %v320 = vsel %vm318, 1.0, 0.0
    %vm321 = vcmp.gt.f32.partialorder %v301, 0.5
    %v322 = vsel %vm321, -1e+30, %v281
    %v323 = vsel %vm290, %v322, -inf
    %324 = vmax.xlane.f32.xlu0 %v323
    %v325 = vpop.xlane.xlu0 %324
    %vm326 = vcmp.ge.f32.partialorder %v322, %v325
    %v327 = vsel %vm326, %v284, 16.0
    %v328 = vsel %vm290, %v327, inf
    %329 = vmin.xlane.f32.xlu0 %v328
    %v330 = vpop.xlane.xlu0 %329
    %vm331 = vcmp.eq.f32.partialorder %v284, %v330
    %v332 = vsel %vm331, 1, 0
    %v333 = vcvt.s32.f32 %v332
    %vm334 = vcmp.eq.s32.totalorder %v286, 1
    %vm335 = vcmp.eq.s32.totalorder %v287, 1
    %v336 = vlaneseq
    %v337 = vshrl.u32 %v336, 7
    %v338 = vsub.s32 0, %v337
    %v339 = vrot.slane %v333, %v338
    %v340 = vsel %vm334, %v339, %v308
    %v341 = vsel %vm335, %v339, %v309
    %vm342 = vcmp.eq.s32.totalorder %v283, 1
    %v343 = vlaneseq
    %v344 = vshrl.u32 %v343, 7
    %v345 = vsub.s32 0, %v344
    %v346 = vrot.slane %v330, %v345
    %vm347 = vcmp.eq.f32.partialorder %v288, %v346
    %vm348 = vcmp.eq.f32.partialorder %v289, %v346
    %vm349 = vmand %vm342, %vm347
    %vm350 = vmand %vm342, %vm348
    %v351 = vsel %vm349, 1.0, %v319
    %v352 = vsel %vm350, 1.0, %v320
    %vm353 = vcmp.gt.f32.partialorder %v333, 0.5
    %v354 = vsel %vm353, -1e+30, %v322
    %v355 = vsel %vm290, %v354, -inf
    %356 = vmax.xlane.f32.xlu0 %v355
    %v357 = vpop.xlane.xlu0 %356
    %vm358 = vcmp.ge.f32.partialorder %v354, %v357
    %v359 = vsel %vm358, %v284, 16.0
    %v360 = vsel %vm290, %v359, inf
    %361 = vmin.xlane.f32.xlu0 %v360
    %v362 = vpop.xlane.xlu0 %361
    %vm363 = vcmp.eq.f32.partialorder %v284, %v362
    %v364 = vsel %vm363, 1, 0
    %v365 = vcvt.s32.f32 %v364
    %vm366 = vcmp.eq.s32.totalorder %v286, 2
    %vm367 = vcmp.eq.s32.totalorder %v287, 2
    %v368 = vlaneseq
    %v369 = vshrl.u32 %v368, 7
    %v370 = vsub.s32 0, %v369
    %v371 = vrot.slane %v365, %v370
    %v372 = vsel %vm366, %v371, %v340
    %v373 = vsel %vm367, %v371, %v341
    %vm374 = vcmp.eq.s32.totalorder %v283, 2
    %v375 = vlaneseq
    %v376 = vshrl.u32 %v375, 7
    %v377 = vsub.s32 0, %v376
    %v378 = vrot.slane %v362, %v377
    %vm379 = vcmp.eq.f32.partialorder %v288, %v378
    %vm380 = vcmp.eq.f32.partialorder %v289, %v378
    %vm381 = vmand %vm374, %vm379
    %vm382 = vmand %vm374, %vm380
    %v383 = vsel %vm381, 1.0, %v351
    %v384 = vsel %vm382, 1.0, %v352
    %vm385 = vcmp.gt.f32.partialorder %v365, 0.5
    %v386 = vsel %vm385, -1e+30, %v354
    %v387 = vsel %vm290, %v386, -inf
    %388 = vmax.xlane.f32.xlu0 %v387
    %v389 = vpop.xlane.xlu0 %388
    %vm390 = vcmp.ge.f32.partialorder %v386, %v389
    %v391 = vsel %vm390, %v284, 16.0
    %v392 = vsel %vm290, %v391, inf
    %393 = vmin.xlane.f32.xlu0 %v392
    %v394 = vpop.xlane.xlu0 %393
    %vm395 = vcmp.eq.f32.partialorder %v284, %v394
    %v396 = vsel %vm395, 1, 0
    %v397 = vcvt.s32.f32 %v396
    %vm398 = vcmp.eq.s32.totalorder %v286, 3
    %vm399 = vcmp.eq.s32.totalorder %v287, 3
    %v400 = vlaneseq
    %v401 = vshrl.u32 %v400, 7
    %v402 = vsub.s32 0, %v401
    %v403 = vrot.slane %v397, %v402
    %v404 = vsel %vm398, %v403, %v372
    %v405 = vsel %vm399, %v403, %v373
    %vm406 = vcmp.eq.s32.totalorder %v283, 3
    %v407 = vlaneseq
    %v408 = vshrl.u32 %v407, 7
    %v409 = vsub.s32 0, %v408
    %v410 = vrot.slane %v394, %v409
    %vm411 = vcmp.eq.f32.partialorder %v288, %v410
    %vm412 = vcmp.eq.f32.partialorder %v289, %v410
    %vm413 = vmand %vm406, %vm411
    %vm414 = vmand %vm406, %vm412
    %v415 = vsel %vm413, 1.0, %v383
    %v416 = vsel %vm414, 1.0, %v384
    %vm417 = vcmp.gt.f32.partialorder %v397, 0.5
    %v418 = vsel %vm417, -1e+30, %v386
    %v419 = vsel %vm290, %v418, -inf
    %420 = vmax.xlane.f32.xlu0 %v419
    %v421 = vpop.xlane.xlu0 %420
    %vm422 = vcmp.ge.f32.partialorder %v418, %v421
    %v423 = vsel %vm422, %v284, 16.0
    %v424 = vsel %vm290, %v423, inf
    %425 = vmin.xlane.f32.xlu0 %v424
    %v426 = vpop.xlane.xlu0 %425
    %vm427 = vcmp.eq.f32.partialorder %v284, %v426
    %v428 = vsel %vm427, 1, 0
    %v429 = vcvt.s32.f32 %v428
    %vm430 = vcmp.eq.s32.totalorder %v286, 4
    %vm431 = vcmp.eq.s32.totalorder %v287, 4
    %v432 = vlaneseq
    %v433 = vshrl.u32 %v432, 7
    %v434 = vsub.s32 0, %v433
    %v435 = vrot.slane %v429, %v434
    %v436 = vsel %vm430, %v435, %v404
    %v437 = vsel %vm431, %v435, %v405
    %vm438 = vcmp.eq.s32.totalorder %v283, 4
    %v439 = vlaneseq
    %v440 = vshrl.u32 %v439, 7
    %v441 = vsub.s32 0, %v440
    %v442 = vrot.slane %v426, %v441
    %vm443 = vcmp.eq.f32.partialorder %v288, %v442
    %vm444 = vcmp.eq.f32.partialorder %v289, %v442
    %vm445 = vmand %vm438, %vm443
    %vm446 = vmand %vm438, %vm444
    %v447 = vsel %vm445, 1.0, %v415
    %v448 = vsel %vm446, 1.0, %v416
    %vm449 = vcmp.gt.f32.partialorder %v429, 0.5
    %v450 = vsel %vm449, -1e+30, %v418
    %v451 = vsel %vm290, %v450, -inf
    %452 = vmax.xlane.f32.xlu0 %v451
    %v453 = vpop.xlane.xlu0 %452
    %vm454 = vcmp.ge.f32.partialorder %v450, %v453
    %v455 = vsel %vm454, %v284, 16.0
    %v456 = vsel %vm290, %v455, inf
    %457 = vmin.xlane.f32.xlu0 %v456
    %v458 = vpop.xlane.xlu0 %457
    %vm459 = vcmp.eq.f32.partialorder %v284, %v458
    %v460 = vsel %vm459, 1, 0
    %v461 = vcvt.s32.f32 %v460
    %vm462 = vcmp.eq.s32.totalorder %v286, 5
    %vm463 = vcmp.eq.s32.totalorder %v287, 5
    %v464 = vlaneseq
    %v465 = vshrl.u32 %v464, 7
    %v466 = vsub.s32 0, %v465
    %v467 = vrot.slane %v461, %v466
    %v468 = vsel %vm462, %v467, %v436
    %v469 = vsel %vm463, %v467, %v437
    %vm470 = vcmp.eq.s32.totalorder %v283, 5
    %v471 = vlaneseq
    %v472 = vshrl.u32 %v471, 7
    %v473 = vsub.s32 0, %v472
    %v474 = vrot.slane %v458, %v473
    %vm475 = vcmp.eq.f32.partialorder %v288, %v474
    %vm476 = vcmp.eq.f32.partialorder %v289, %v474
    %vm477 = vmand %vm470, %vm475
    %vm478 = vmand %vm470, %vm476
    %v479 = vsel %vm477, 1.0, %v447
    %v480 = vsel %vm478, 1.0, %v448
    %vm481 = vcmp.gt.f32.partialorder %v461, 0.5
    %v482 = vsel %vm481, -1e+30, %v450
    %v483 = vsel %vm290, %v482, -inf
    %484 = vmax.xlane.f32.xlu0 %v483
    %v485 = vpop.xlane.xlu0 %484
    %vm486 = vcmp.ge.f32.partialorder %v482, %v485
    %v487 = vsel %vm486, %v284, 16.0
    %v488 = vsel %vm290, %v487, inf
    %489 = vmin.xlane.f32.xlu0 %v488
    %v490 = vpop.xlane.xlu0 %489
    %vm491 = vcmp.eq.f32.partialorder %v284, %v490
    %v492 = vsel %vm491, 1, 0
    %v493 = vcvt.s32.f32 %v492
    %vm494 = vcmp.eq.s32.totalorder %v286, 6
    %vm495 = vcmp.eq.s32.totalorder %v287, 6
    %v496 = vlaneseq
    %v497 = vshrl.u32 %v496, 7
    %v498 = vsub.s32 0, %v497
    %v499 = vrot.slane %v493, %v498
    %v500 = vsel %vm494, %v499, %v468
    %v501 = vsel %vm495, %v499, %v469
    %vm502 = vcmp.eq.s32.totalorder %v283, 6
    %v503 = vlaneseq
    %v504 = vshrl.u32 %v503, 7
    %v505 = vsub.s32 0, %v504
    %v506 = vrot.slane %v490, %v505
    %vm507 = vcmp.eq.f32.partialorder %v288, %v506
    %vm508 = vcmp.eq.f32.partialorder %v289, %v506
    %vm509 = vmand %vm502, %vm507
    %vm510 = vmand %vm502, %vm508
    %v511 = vsel %vm509, 1.0, %v479
    %v512 = vsel %vm510, 1.0, %v480
    %vm513 = vcmp.gt.f32.partialorder %v493, 0.5
    %v514 = vsel %vm513, -1e+30, %v482
    %v515 = vsel %vm290, %v514, -inf
    %516 = vmax.xlane.f32.xlu0 %v515
    %v517 = vpop.xlane.xlu0 %516
    %vm518 = vcmp.ge.f32.partialorder %v514, %v517
    %v519 = vsel %vm518, %v284, 16.0
    %v520 = vsel %vm290, %v519, inf
    %521 = vmin.xlane.f32.xlu0 %v520
    %v522 = vpop.xlane.xlu0 %521
    %vm523 = vcmp.eq.f32.partialorder %v284, %v522
    %v524 = vsel %vm523, 1, 0
    %v525 = vcvt.s32.f32 %v524
    %vm526 = vcmp.eq.s32.totalorder %v286, 7
    %vm527 = vcmp.eq.s32.totalorder %v287, 7
    %v528 = vlaneseq
    %v529 = vshrl.u32 %v528, 7
    %v530 = vsub.s32 0, %v529
    %v531 = vrot.slane %v525, %v530
    %v532 = vsel %vm526, %v531, %v500
    %v533 = vsel %vm527, %v531, %v501
    %vm534 = vcmp.eq.s32.totalorder %v283, 7
    %v535 = vlaneseq
    %v536 = vshrl.u32 %v535, 7
    %v537 = vsub.s32 0, %v536
    %v538 = vrot.slane %v522, %v537
    %vm539 = vcmp.eq.f32.partialorder %v288, %v538
    %vm540 = vcmp.eq.f32.partialorder %v289, %v538
    %vm541 = vmand %vm534, %vm539
    %vm542 = vmand %vm534, %vm540
    %v543 = vsel %vm541, 1.0, %v511
    %v544 = vsel %vm542, 1.0, %v512
    %vm545 = vcmp.gt.f32.partialorder %v525, 0.5
    %v546 = vsel %vm545, -1e+30, %v514
    %v547 = vsel %vm290, %v546, -inf
    %548 = vmax.xlane.f32.xlu0 %v547
    %v549 = vpop.xlane.xlu0 %548
    %vm550 = vcmp.ge.f32.partialorder %v546, %v549
    %v551 = vsel %vm550, %v284, 16.0
    %v552 = vsel %vm290, %v551, inf
    %553 = vmin.xlane.f32.xlu0 %v552
    %v554 = vpop.xlane.xlu0 %553
    %vm555 = vcmp.eq.f32.partialorder %v284, %v554
    %v556 = vsel %vm555, 1, 0
    %v557 = vcvt.s32.f32 %v556
    %vm558 = vcmp.eq.s32.totalorder %v286, 8
    %vm559 = vcmp.eq.s32.totalorder %v287, 8
    %v560 = vlaneseq
    %v561 = vshrl.u32 %v560, 7
    %v562 = vsub.s32 0, %v561
    %v563 = vrot.slane %v557, %v562
    %v564 = vsel %vm558, %v563, %v532
    %v565 = vsel %vm559, %v563, %v533
    %vm566 = vcmp.eq.s32.totalorder %v283, 8
    %v567 = vlaneseq
    %v568 = vshrl.u32 %v567, 7
    %v569 = vsub.s32 0, %v568
    %v570 = vrot.slane %v554, %v569
    %vm571 = vcmp.eq.f32.partialorder %v288, %v570
    %vm572 = vcmp.eq.f32.partialorder %v289, %v570
    %vm573 = vmand %vm566, %vm571
    %vm574 = vmand %vm566, %vm572
    %v575 = vsel %vm573, 1.0, %v543
    %v576 = vsel %vm574, 1.0, %v544
    %vm577 = vcmp.gt.f32.partialorder %v557, 0.5
    %v578 = vsel %vm577, -1e+30, %v546
    %v579 = vsel %vm290, %v578, -inf
    %580 = vmax.xlane.f32.xlu0 %v579
    %v581 = vpop.xlane.xlu0 %580
    %vm582 = vcmp.ge.f32.partialorder %v578, %v581
    %v583 = vsel %vm582, %v284, 16.0
    %v584 = vsel %vm290, %v583, inf
    %585 = vmin.xlane.f32.xlu0 %v584
    %v586 = vpop.xlane.xlu0 %585
    %vm587 = vcmp.eq.f32.partialorder %v284, %v586
    %v588 = vsel %vm587, 1, 0
    %v589 = vcvt.s32.f32 %v588
    %vm590 = vcmp.eq.s32.totalorder %v286, 9
    %vm591 = vcmp.eq.s32.totalorder %v287, 9
    %v592 = vlaneseq
    %v593 = vshrl.u32 %v592, 7
    %v594 = vsub.s32 0, %v593
    %v595 = vrot.slane %v589, %v594
    %v596 = vsel %vm590, %v595, %v564
    %v597 = vsel %vm591, %v595, %v565
    %vm598 = vcmp.eq.s32.totalorder %v283, 9
    %v599 = vlaneseq
    %v600 = vshrl.u32 %v599, 7
    %v601 = vsub.s32 0, %v600
    %v602 = vrot.slane %v586, %v601
    %vm603 = vcmp.eq.f32.partialorder %v288, %v602
    %vm604 = vcmp.eq.f32.partialorder %v289, %v602
    %vm605 = vmand %vm598, %vm603
    %vm606 = vmand %vm598, %vm604
    %v607 = vsel %vm605, 1.0, %v575
    %v608 = vsel %vm606, 1.0, %v576
    %vm609 = vcmp.gt.f32.partialorder %v589, 0.5
    %v610 = vsel %vm609, -1e+30, %v578
    %v611 = vsel %vm290, %v610, -inf
    %612 = vmax.xlane.f32.xlu0 %v611
    %v613 = vpop.xlane.xlu0 %612
    %vm614 = vcmp.ge.f32.partialorder %v610, %v613
    %v615 = vsel %vm614, %v284, 16.0
    %v616 = vsel %vm290, %v615, inf
    %617 = vmin.xlane.f32.xlu0 %v616
    %v618 = vpop.xlane.xlu0 %617
    %vm619 = vcmp.eq.f32.partialorder %v284, %v618
    %v620 = vsel %vm619, 1, 0
    %v621 = vcvt.s32.f32 %v620
    %vm622 = vcmp.eq.s32.totalorder %v286, 10
    %vm623 = vcmp.eq.s32.totalorder %v287, 10
    %v624 = vlaneseq
    %v625 = vshrl.u32 %v624, 7
    %v626 = vsub.s32 0, %v625
    %v627 = vrot.slane %v621, %v626
    %v628 = vsel %vm622, %v627, %v596
    %v629 = vsel %vm623, %v627, %v597
    %vm630 = vcmp.eq.s32.totalorder %v283, 10
    %v631 = vlaneseq
    %v632 = vshrl.u32 %v631, 7
    %v633 = vsub.s32 0, %v632
    %v634 = vrot.slane %v618, %v633
    %vm635 = vcmp.eq.f32.partialorder %v288, %v634
    %vm636 = vcmp.eq.f32.partialorder %v289, %v634
    %vm637 = vmand %vm630, %vm635
    %vm638 = vmand %vm630, %vm636
    %v639 = vsel %vm637, 1.0, %v607
    %v640 = vsel %vm638, 1.0, %v608
    %vm641 = vcmp.gt.f32.partialorder %v621, 0.5
    %v642 = vsel %vm641, -1e+30, %v610
    %v643 = vsel %vm290, %v642, -inf
    %644 = vmax.xlane.f32.xlu0 %v643
    %v645 = vpop.xlane.xlu0 %644
    %vm646 = vcmp.ge.f32.partialorder %v642, %v645
    %v647 = vsel %vm646, %v284, 16.0
    %v648 = vsel %vm290, %v647, inf
    %649 = vmin.xlane.f32.xlu0 %v648
    %v650 = vpop.xlane.xlu0 %649
    %vm651 = vcmp.eq.f32.partialorder %v284, %v650
    %v652 = vsel %vm651, 1, 0
    %v653 = vcvt.s32.f32 %v652
    %vm654 = vcmp.eq.s32.totalorder %v286, 11
    %vm655 = vcmp.eq.s32.totalorder %v287, 11
    %v656 = vlaneseq
    %v657 = vshrl.u32 %v656, 7
    %v658 = vsub.s32 0, %v657
    %v659 = vrot.slane %v653, %v658
    %v660 = vsel %vm654, %v659, %v628
    %v661 = vsel %vm655, %v659, %v629
    %vm662 = vcmp.eq.s32.totalorder %v283, 11
    %v663 = vlaneseq
    %v664 = vshrl.u32 %v663, 7
    %v665 = vsub.s32 0, %v664
    %v666 = vrot.slane %v650, %v665
    %vm667 = vcmp.eq.f32.partialorder %v288, %v666
    %vm668 = vcmp.eq.f32.partialorder %v289, %v666
    %vm669 = vmand %vm662, %vm667
    %vm670 = vmand %vm662, %vm668
    %v671 = vsel %vm669, 1.0, %v639
    %v672 = vsel %vm670, 1.0, %v640
    %vm673 = vcmp.gt.f32.partialorder %v653, 0.5
    %v674 = vsel %vm673, -1e+30, %v642
    %v675 = vsel %vm290, %v674, -inf
    %676 = vmax.xlane.f32.xlu0 %v675
    %v677 = vpop.xlane.xlu0 %676
    %vm678 = vcmp.ge.f32.partialorder %v674, %v677
    %v679 = vsel %vm678, %v284, 16.0
    %v680 = vsel %vm290, %v679, inf
    %681 = vmin.xlane.f32.xlu0 %v680
    %v682 = vpop.xlane.xlu0 %681
    %vm683 = vcmp.eq.f32.partialorder %v284, %v682
    %v684 = vsel %vm683, 1, 0
    %v685 = vcvt.s32.f32 %v684
    %vm686 = vcmp.eq.s32.totalorder %v286, 12
    %vm687 = vcmp.eq.s32.totalorder %v287, 12
    %v688 = vlaneseq
    %v689 = vshrl.u32 %v688, 7
    %v690 = vsub.s32 0, %v689
    %v691 = vrot.slane %v685, %v690
    %v692 = vsel %vm686, %v691, %v660
    %v693 = vsel %vm687, %v691, %v661
    %vm694 = vcmp.eq.s32.totalorder %v283, 12
    %v695 = vlaneseq
    %v696 = vshrl.u32 %v695, 7
    %v697 = vsub.s32 0, %v696
    %v698 = vrot.slane %v682, %v697
    %vm699 = vcmp.eq.f32.partialorder %v288, %v698
    %vm700 = vcmp.eq.f32.partialorder %v289, %v698
    %vm701 = vmand %vm694, %vm699
    %vm702 = vmand %vm694, %vm700
    %v703 = vsel %vm701, 1.0, %v671
    %v704 = vsel %vm702, 1.0, %v672
    %vm705 = vcmp.gt.f32.partialorder %v685, 0.5
    %v706 = vsel %vm705, -1e+30, %v674
    %v707 = vsel %vm290, %v706, -inf
    %708 = vmax.xlane.f32.xlu0 %v707
    %v709 = vpop.xlane.xlu0 %708
    %vm710 = vcmp.ge.f32.partialorder %v706, %v709
    %v711 = vsel %vm710, %v284, 16.0
    %v712 = vsel %vm290, %v711, inf
    %713 = vmin.xlane.f32.xlu0 %v712
    %v714 = vpop.xlane.xlu0 %713
    %vm715 = vcmp.eq.f32.partialorder %v284, %v714
    %v716 = vsel %vm715, 1, 0
    %v717 = vcvt.s32.f32 %v716
    %vm718 = vcmp.eq.s32.totalorder %v286, 13
    %vm719 = vcmp.eq.s32.totalorder %v287, 13
    %v720 = vlaneseq
    %v721 = vshrl.u32 %v720, 7
    %v722 = vsub.s32 0, %v721
    %v723 = vrot.slane %v717, %v722
    %v724 = vsel %vm718, %v723, %v692
    %v725 = vsel %vm719, %v723, %v693
    %vm726 = vcmp.eq.s32.totalorder %v283, 13
    %v727 = vlaneseq
    %v728 = vshrl.u32 %v727, 7
    %v729 = vsub.s32 0, %v728
    %v730 = vrot.slane %v714, %v729
    %vm731 = vcmp.eq.f32.partialorder %v288, %v730
    %vm732 = vcmp.eq.f32.partialorder %v289, %v730
    %vm733 = vmand %vm726, %vm731
    %vm734 = vmand %vm726, %vm732
    %v735 = vsel %vm733, 1.0, %v703
    %v736 = vsel %vm734, 1.0, %v704
    %v737 = vlaneseq
    %v738 = vshrl.u32 %v737, 7
    %v739 = vsub.s32 0, %v738
    %v740 = vrot.slane %v281, %v739
    %v741 = vmul.f32 %v724, %v740
    %v742 = vmul.f32 %v725, %v740
    %vm743 = vcmask 130048
    %v744 = vsel %vm743, %v741, 0.0
    %745 = vadd.xlane.f32.xlu0 %v744
    %v746 = vpop.xlane.xlu0 %745
    %vm747 = vcmask 128000
    %v748 = vsel %vm747, %v742, 0.0
    %749 = vadd.xlane.f32.xlu0 %v748
    %v750 = vpop.xlane.xlu0 %749
    %v751 = vpack.c.bf16 %v725, %v724
    %v752 = vpack.c.bf16 %v194, %v193
    %v754 = vsel %vm743, %v751, 0
    %756 = vmatprep.subr.bf16.mxu0 0
    %757 = vmatpush1.bf16.msra.mxu0 %v752
    %758 = vmatprep.subr.bf16.mxu0 0
    %759 = vmatpush1.bf16.msra.mxu0 0
    %760 = vmatprep.subr.bf16.mxu0 0
    %761 = vmatpush1.bf16.msra.mxu0 0
    %762 = vmatprep.subr.bf16.mxu0 0
    %763 = vmatpush1.bf16.msra.mxu0 0
    %764 = vmatprep.subr.bf16.mxu0 0
    %765 = vmatpush1.bf16.msra.mxu0 0
    %766 = vmatprep.subr.bf16.mxu0 0
    %767 = vmatpush1.bf16.msra.mxu0 0
    %768 = vmatprep.subr.bf16.mxu0 0
    %769 = vmatpush1.bf16.msra.mxu0 0
    %770 = vmatprep.subr.bf16.mxu0 0
    %771 = vmatpush1.bf16.msra.mxu0 0
    %772 = vmatprep.subr.bf16.mxu0 0
    %773 = vmatpush1.bf16.msra.mxu0 0
    %774 = vmatprep.subr.bf16.mxu0 0
    %775 = vmatpush1.bf16.msra.mxu0 0
    %776 = vmatprep.subr.bf16.mxu0 0
    %777 = vmatpush1.bf16.msra.mxu0 0
    %778 = vmatprep.subr.bf16.mxu0 0
    %779 = vmatpush1.bf16.msra.mxu0 0
    %780 = vmatprep.subr.bf16.mxu0 0
    %781 = vmatpush1.bf16.msra.mxu0 0
    %782 = vmatprep.subr.bf16.mxu0 0
    %783 = vmatpush1.bf16.msra.mxu0 0
    %784 = vmatprep.subr.bf16.mxu0 0
    %785 = vmatpush1.bf16.msra.mxu0 0
    %786 = vmatprep.subr.bf16.mxu0 0
    %787 = vmatpush1.bf16.msra.mxu0 0
    %788 = vmatprep.mubr.bf16.mxu0 0
    %789 = vmatmul.mubr.bf16.gmra.mrb[0].mxu0 %v754
    %v790 = vpop.f32.mrb[0].mxu0
    %v791 = vadd.f32 0.0, %v790
    %v792 = vpop.f32.mrb[0].mxu0
    %v793 = vpop.f32.mrb[0].mxu0
    %v794 = vadd.f32 0.0, %v793
    %v795 = vpop.f32.mrb[0].mxu0
    %796 = vdwg.mxu0
    %v797 = vmul.f32 %v791, %v746
    %v798 = vmul.f32 %v794, %v750
    %s799 = scalar_lea.vmem [#allocation2], 64
    %v800 = vld [vmem:[%s799] sm:$0xf]
    %v801 = vld [vmem:[%s799 + $0x4] sm:$0xf]
    %v802 = vld [vmem:[%s799 + $0x8] sm:$0xf]
    %v803 = vld [vmem:[%s799 + $0xc] sm:$0xf]
    %v804 = vld [vmem:[%s799 + $0x10] sm:$0xf]
    %v805 = vld [vmem:[%s799 + $0x14] sm:$0xf]
    %v806 = vld [vmem:[%s799 + $0x18] sm:$0xf]
    %v807 = vld [vmem:[%s799 + $0x1c] sm:$0xf]
    %v808 = vld [vmem:[%s799 + $0x20] sm:$0xf]
    %v809 = vld [vmem:[%s799 + $0x24] sm:$0xf]
    %v810 = vld [vmem:[%s799 + $0x28] sm:$0xf]
    %v811 = vld [vmem:[%s799 + $0x2c] sm:$0xf]
    %v812 = vld [vmem:[%s799 + $0x30] sm:$0xf]
    %v813 = vld [vmem:[%s799 + $0x34] sm:$0xf]
    %v814 = vld [vmem:[%s799 + $0x38] sm:$0xf]
    %v815 = vld [vmem:[%s799 + $0x3c] sm:$0xf]
    %s816 = scalar_lea.vmem %s2, 1
    %v817 = vld [vmem:[%s816] sm:$0x1]
    %v818 = vpack.c.bf16 %v798, %v797
    %v820 = vlaneseq
    %v821 = vshrl.u32 %v820, 7
    %v822 = vsub.s32 0, %v821
    %v823 = vrot.slane %v817, %v822
    %v841 = vunpack.c.l.b16 %v800
    %v842 = vunpack.c.l.b16 %v801
    %v843 = vunpack.c.l.b16 %v802
    %v844 = vunpack.c.l.b16 %v803
    %v845 = vunpack.c.l.b16 %v804
    %v846 = vunpack.c.l.b16 %v805
    %v847 = vunpack.c.l.b16 %v806
    %v848 = vunpack.c.l.b16 %v807
    %v849 = vunpack.c.l.b16 %v808
    %v850 = vunpack.c.l.b16 %v809
    %v851 = vunpack.c.l.b16 %v810
    %v852 = vunpack.c.l.b16 %v811
    %v853 = vunpack.c.l.b16 %v812
    %v854 = vunpack.c.l.b16 %v813
    %v855 = vunpack.c.l.b16 %v814
    %v856 = vunpack.c.l.b16 %v815
    %v857 = vpack.c.b16 %v842, %v841
    %v858 = vpack.c.b16 %v844, %v843
    %v859 = vpack.c.b16 %v846, %v845
    %v860 = vpack.c.b16 %v848, %v847
    %v861 = vpack.c.b16 %v850, %v849
    %v862 = vpack.c.b16 %v852, %v851
    %v863 = vpack.c.b16 %v854, %v853
    %v864 = vpack.c.b16 %v856, %v855
    %873 = vmatprep.subr.bf16.mxu0 0
    %874 = vmatpush1.bf16.msra.mxu0 %v857
    %875 = vmatprep.subr.bf16.mxu0 0
    %876 = vmatpush1.bf16.msra.mxu0 %v858
    %877 = vmatprep.subr.bf16.mxu0 0
    %878 = vmatpush1.bf16.msra.mxu0 %v859
    %879 = vmatprep.subr.bf16.mxu0 0
    %880 = vmatpush1.bf16.msra.mxu0 %v860
    %881 = vmatprep.subr.bf16.mxu0 0
    %882 = vmatpush1.bf16.msra.mxu0 %v861
    %883 = vmatprep.subr.bf16.mxu0 0
    %884 = vmatpush1.bf16.msra.mxu0 %v862
    %885 = vmatprep.subr.bf16.mxu0 0
    %886 = vmatpush1.bf16.msra.mxu0 %v863
    %887 = vmatprep.subr.bf16.mxu0 0
    %888 = vmatpush1.bf16.msra.mxu0 %v864
    %889 = vmatprep.subr.bf16.mxu0 0
    %890 = vmatpush1.bf16.msra.mxu0 0
    %891 = vmatprep.subr.bf16.mxu0 0
    %892 = vmatpush1.bf16.msra.mxu0 0
    %893 = vmatprep.subr.bf16.mxu0 0
    %894 = vmatpush1.bf16.msra.mxu0 0
    %895 = vmatprep.subr.bf16.mxu0 0
    %896 = vmatpush1.bf16.msra.mxu0 0
    %897 = vmatprep.subr.bf16.mxu0 0
    %898 = vmatpush1.bf16.msra.mxu0 0
    %899 = vmatprep.subr.bf16.mxu0 0
    %900 = vmatpush1.bf16.msra.mxu0 0
    %901 = vmatprep.subr.bf16.mxu0 0
    %902 = vmatpush1.bf16.msra.mxu0 0
    %903 = vmatprep.subr.bf16.mxu0 0
    %904 = vmatpush1.bf16.msra.mxu0 0
    %905 = vmatprep.mubr.bf16.mxu0 0
    %906 = vmatmul.mubr.bf16.gmra.mrb[0].mxu0 %v818
    %v907 = vpop.f32.mrb[0].mxu0
    %v908 = vadd.f32 %v823, %v907
    %v909 = vpop.f32.mrb[0].mxu0
    %v910 = vpop.f32.mrb[0].mxu0
    %v911 = vadd.f32 %v823, %v910
    %v912 = vpop.f32.mrb[0].mxu0
    %913 = vdwg.mxu0
    %vm914 = vcmp.gt.f32.partialorder %v908, 0.0
    %vm915 = vcmp.gt.f32.partialorder %v911, 0.0
    %v916 = vmin.f32 %v908, 0.0
    %v917 = vmin.f32 %v911, 0.0
    %v918 = vmul.f32 %v916, 1.442695
    %v919 = vpow.pop %v918
    %v920 = vmul.f32 %v917, 1.442695
    %v921 = vpow.pop %v920
    %v922 = vsub.f32 %v919, 1.0
    %v923 = vsub.f32 %v921, 1.0
    %v924 = vsel %vm914, %v908, %v922
    %v925 = vsel %vm915, %v911, %v923
    %s926 = scalar_lea.vmem %s3, 1
    %v927 = vld [vmem:[%s926] sm:$0x1]
    %s928 = scalar_lea.vmem %s4, 1
    %v929 = vld [vmem:[%s928] sm:$0x1]
    %931 = vset.pattern.permute.xlu0 0
    %932 = vperm.xlu0 %931, %v929
    %v933 = vpop.permute.xlu0 %932
    %v935 = vlaneseq
    %v936 = vshrl.u32 %v935, 7
    %v937 = vsub.s32 0, %v936
    %v938 = vrot.slane %v933, %v937
    %939 = vmatprep.subr.mxu0 0.0
    %940 = vmatpush1.xpose.msra.mxu0 %v924
    %941 = vmatprep.subr.mxu0 0.0
    %942 = vmatpush1.xpose.msra.mxu0 %v925
    %943 = vmatprep.subr.mxu0 0.0
    %944 = vmatpush1.xpose.msra.mxu0 0.0
    %945 = vmatprep.subr.mxu0 0.0
    %946 = vmatpush1.xpose.msra.mxu0 0.0
    %947 = vmatprep.subr.mxu0 0.0
    %948 = vmatpush1.xpose.msra.mxu0 0.0
    %949 = vmatprep.subr.mxu0 0.0
    %950 = vmatpush1.xpose.msra.mxu0 0.0
    %951 = vmatprep.subr.mxu0 0.0
    %952 = vmatpush1.xpose.msra.mxu0 0.0
    %953 = vmatprep.subr.mxu0 0.0
    %954 = vmatpush1.xpose.msra.mxu0 0.0
    %955 = vmatprep.subr.mxu0 0.0
    %956 = vmatpush1.xpose.msra.mxu0 0.0
    %957 = vmatprep.subr.mxu0 0.0
    %958 = vmatpush1.xpose.msra.mxu0 0.0
    %959 = vmatprep.subr.mxu0 0.0
    %960 = vmatpush1.xpose.msra.mxu0 0.0
    %961 = vmatprep.subr.mxu0 0.0
    %962 = vmatpush1.xpose.msra.mxu0 0.0
    %963 = vmatprep.subr.mxu0 0.0
    %964 = vmatpush1.xpose.msra.mxu0 0.0
    %965 = vmatprep.subr.mxu0 0.0
    %966 = vmatpush1.xpose.msra.mxu0 0.0
    %967 = vmatprep.subr.mxu0 0.0
    %968 = vmatpush1.xpose.msra.mxu0 0.0
    %969 = vmatprep.subr.mxu0 0.0
    %970 = vmatpush1.xpose.msra.mxu0 0.0
    %971 = vmatprep.subr.mxu0 0.0
    %972 = vmatpush1.xpose.msra.mxu0 0.0
    %973 = vmatprep.subr.mxu0 0.0
    %974 = vmatpush1.xpose.msra.mxu0 0.0
    %975 = vmatprep.subr.mxu0 0.0
    %976 = vmatpush1.xpose.msra.mxu0 0.0
    %977 = vmatprep.subr.mxu0 0.0
    %978 = vmatpush1.xpose.msra.mxu0 0.0
    %979 = vmatprep.subr.mxu0 0.0
    %980 = vmatpush1.xpose.msra.mxu0 0.0
    %981 = vmatprep.subr.mxu0 0.0
    %982 = vmatpush1.xpose.msra.mxu0 0.0
    %983 = vmatprep.subr.mxu0 0.0
    %984 = vmatpush1.xpose.msra.mxu0 0.0
    %985 = vmatprep.subr.mxu0 0.0
    %986 = vmatpush1.xpose.msra.mxu0 0.0
    %987 = vmatprep.subr.mxu0 0.0
    %988 = vmatpush1.xpose.msra.mxu0 0.0
    %989 = vmatprep.subr.mxu0 0.0
    %990 = vmatpush1.xpose.msra.mxu0 0.0
    %991 = vmatprep.subr.mxu0 0.0
    %992 = vmatpush1.xpose.msra.mxu0 0.0
    %993 = vmatprep.subr.mxu0 0.0
    %994 = vmatpush1.xpose.msra.mxu0 0.0
    %995 = vmatprep.subr.mxu0 0.0
    %996 = vmatpush1.xpose.msra.mxu0 0.0
    %997 = vmatprep.subr.mxu0 0.0
    %998 = vmatpush1.xpose.msra.mxu0 0.0
    %999 = vmatprep.subr.mxu0 0.0
    %1000 = vmatpush1.xpose.msra.mxu0 0.0
    %1001 = vmatprep.subr.mxu0 0.0
    %1002 = vmatpush1.xpose.msra.mxu0 0.0
    %1003 = vmatprep.mubr.f32.mxu0 0.0
    %1004 = vmatmul.mubr.f32.gmra.mrb[0].mxu0 %v927
    %v1005 = vpop.f32.mrb[0].mxu0
    %v1006 = vadd.f32 %v938, %v1005
    %v1007 = vpop.f32.mrb[0].mxu0
    %1008 = vdwg.mxu0
    %v1009 = vsub.f32 0.0, %v1006
    %v1010 = vmul.f32 %v1009, 1.442695
    %v1011 = vpow.pop %v1010
    %v1012 = vadd.f32 %v1011, 1.0
    %v1013 = vrcp.pop %v1012
    %v1014 = vmul.f32 1.0, %v1013
    %vm1015 = vcmask 106496
    %v1016 = vsel %vm1015, %v1014, -inf
    %1017 = vmax.xlane.f32.xlu0 %v1016
    %v1018 = vpop.xlane.xlu0 %1017
    %vm1019 = vcmp.ge.f32.partialorder %v1014, %v1018
    %v1020 = vsel %vm1019, %v284, 14.0
    %v1021 = vsel %vm1015, %v1020, inf
    %1022 = vmin.xlane.f32.xlu0 %v1021
    %v1023 = vpop.xlane.xlu0 %1022
    %vm1024 = vcmp.eq.f32.partialorder %v284, %v1023
    %v1025 = vsel %vm1024, 1, 0
    %v1026 = vcvt.s32.f32 %v1025
    %v1027 = vlaneseq
    %v1028 = vshrl.u32 %v1027, 7
    %v1029 = vsub.s32 0, %v1028
    %v1030 = vrot.slane %v1026, %v1029
    %v1031 = vsel %vm302, %v1030, 0.0
    %v1032 = vsel %vm303, %v1030, 0.0
    %v1033 = vlaneseq
    %v1034 = vshrl.u32 %v1033, 7
    %v1035 = vsub.s32 0, %v1034
    %v1036 = vrot.slane %v1023, %v1035
    %vm1037 = vcmp.eq.f32.partialorder %v288, %v1036
    %vm1038 = vcmp.eq.f32.partialorder %v289, %v1036
    %vm1039 = vmand %vm310, %vm1037
    %vm1040 = vmand %vm310, %vm1038
    %v1041 = vsel %vm1039, 1.0, 0.0
    %v1042 = vsel %vm1040, 1.0, 0.0
    %vm1043 = vcmp.gt.f32.partialorder %v1026, 0.5
    %v1044 = vsel %vm1043, -1e+30, %v1014
    %v1045 = vsel %vm1015, %v1044, -inf
    %1046 = vmax.xlane.f32.xlu0 %v1045
    %v1047 = vpop.xlane.xlu0 %1046
    %vm1048 = vcmp.ge.f32.partialorder %v1044, %v1047
    %v1049 = vsel %vm1048, %v284, 14.0
    %v1050 = vsel %vm1015, %v1049, inf
    %1051 = vmin.xlane.f32.xlu0 %v1050
    %v1052 = vpop.xlane.xlu0 %1051
    %vm1053 = vcmp.eq.f32.partialorder %v284, %v1052
    %v1054 = vsel %vm1053, 1, 0
    %v1055 = vcvt.s32.f32 %v1054
    %v1056 = vlaneseq
    %v1057 = vshrl.u32 %v1056, 7
    %v1058 = vsub.s32 0, %v1057
    %v1059 = vrot.slane %v1055, %v1058
    %v1060 = vsel %vm334, %v1059, %v1031
    %v1061 = vsel %vm335, %v1059, %v1032
    %v1062 = vlaneseq
    %v1063 = vshrl.u32 %v1062, 7
    %v1064 = vsub.s32 0, %v1063
    %v1065 = vrot.slane %v1052, %v1064
    %vm1066 = vcmp.eq.f32.partialorder %v288, %v1065
    %vm1067 = vcmp.eq.f32.partialorder %v289, %v1065
    %vm1068 = vmand %vm342, %vm1066
    %vm1069 = vmand %vm342, %vm1067
    %v1070 = vsel %vm1068, 1.0, %v1041
    %v1071 = vsel %vm1069, 1.0, %v1042
    %vm1072 = vcmp.gt.f32.partialorder %v1055, 0.5
    %v1073 = vsel %vm1072, -1e+30, %v1044
    %v1074 = vsel %vm1015, %v1073, -inf
    %1075 = vmax.xlane.f32.xlu0 %v1074
    %v1076 = vpop.xlane.xlu0 %1075
    %vm1077 = vcmp.ge.f32.partialorder %v1073, %v1076
    %v1078 = vsel %vm1077, %v284, 14.0
    %v1079 = vsel %vm1015, %v1078, inf
    %1080 = vmin.xlane.f32.xlu0 %v1079
    %v1081 = vpop.xlane.xlu0 %1080
    %vm1082 = vcmp.eq.f32.partialorder %v284, %v1081
    %v1083 = vsel %vm1082, 1, 0
    %v1084 = vcvt.s32.f32 %v1083
    %v1085 = vlaneseq
    %v1086 = vshrl.u32 %v1085, 7
    %v1087 = vsub.s32 0, %v1086
    %v1088 = vrot.slane %v1084, %v1087
    %v1089 = vsel %vm366, %v1088, %v1060
    %v1090 = vsel %vm367, %v1088, %v1061
    %v1091 = vlaneseq
    %v1092 = vshrl.u32 %v1091, 7
    %v1093 = vsub.s32 0, %v1092
    %v1094 = vrot.slane %v1081, %v1093
    %vm1095 = vcmp.eq.f32.partialorder %v288, %v1094
    %vm1096 = vcmp.eq.f32.partialorder %v289, %v1094
    %vm1097 = vmand %vm374, %vm1095
    %vm1098 = vmand %vm374, %vm1096
    %v1099 = vsel %vm1097, 1.0, %v1070
    %v1100 = vsel %vm1098, 1.0, %v1071
    %vm1101 = vcmp.gt.f32.partialorder %v1084, 0.5
    %v1102 = vsel %vm1101, -1e+30, %v1073
    %v1103 = vsel %vm1015, %v1102, -inf
    %1104 = vmax.xlane.f32.xlu0 %v1103
    %v1105 = vpop.xlane.xlu0 %1104
    %vm1106 = vcmp.ge.f32.partialorder %v1102, %v1105
    %v1107 = vsel %vm1106, %v284, 14.0
    %v1108 = vsel %vm1015, %v1107, inf
    %1109 = vmin.xlane.f32.xlu0 %v1108
    %v1110 = vpop.xlane.xlu0 %1109
    %vm1111 = vcmp.eq.f32.partialorder %v284, %v1110
    %v1112 = vsel %vm1111, 1, 0
    %v1113 = vcvt.s32.f32 %v1112
    %v1114 = vlaneseq
    %v1115 = vshrl.u32 %v1114, 7
    %v1116 = vsub.s32 0, %v1115
    %v1117 = vrot.slane %v1113, %v1116
    %v1118 = vsel %vm398, %v1117, %v1089
    %v1119 = vsel %vm399, %v1117, %v1090
    %v1120 = vlaneseq
    %v1121 = vshrl.u32 %v1120, 7
    %v1122 = vsub.s32 0, %v1121
    %v1123 = vrot.slane %v1110, %v1122
    %vm1124 = vcmp.eq.f32.partialorder %v288, %v1123
    %vm1125 = vcmp.eq.f32.partialorder %v289, %v1123
    %vm1126 = vmand %vm406, %vm1124
    %vm1127 = vmand %vm406, %vm1125
    %v1128 = vsel %vm1126, 1.0, %v1099
    %v1129 = vsel %vm1127, 1.0, %v1100
    %vm1130 = vcmp.gt.f32.partialorder %v1113, 0.5
    %v1131 = vsel %vm1130, -1e+30, %v1102
    %v1132 = vsel %vm1015, %v1131, -inf
    %1133 = vmax.xlane.f32.xlu0 %v1132
    %v1134 = vpop.xlane.xlu0 %1133
    %vm1135 = vcmp.ge.f32.partialorder %v1131, %v1134
    %v1136 = vsel %vm1135, %v284, 14.0
    %v1137 = vsel %vm1015, %v1136, inf
    %1138 = vmin.xlane.f32.xlu0 %v1137
    %v1139 = vpop.xlane.xlu0 %1138
    %vm1140 = vcmp.eq.f32.partialorder %v284, %v1139
    %v1141 = vsel %vm1140, 1, 0
    %v1142 = vcvt.s32.f32 %v1141
    %v1143 = vlaneseq
    %v1144 = vshrl.u32 %v1143, 7
    %v1145 = vsub.s32 0, %v1144
    %v1146 = vrot.slane %v1142, %v1145
    %v1147 = vsel %vm430, %v1146, %v1118
    %v1148 = vsel %vm431, %v1146, %v1119
    %v1149 = vlaneseq
    %v1150 = vshrl.u32 %v1149, 7
    %v1151 = vsub.s32 0, %v1150
    %v1152 = vrot.slane %v1139, %v1151
    %vm1153 = vcmp.eq.f32.partialorder %v288, %v1152
    %vm1154 = vcmp.eq.f32.partialorder %v289, %v1152
    %vm1155 = vmand %vm438, %vm1153
    %vm1156 = vmand %vm438, %vm1154
    %v1157 = vsel %vm1155, 1.0, %v1128
    %v1158 = vsel %vm1156, 1.0, %v1129
    %vm1159 = vcmp.gt.f32.partialorder %v1142, 0.5
    %v1160 = vsel %vm1159, -1e+30, %v1131
    %v1161 = vsel %vm1015, %v1160, -inf
    %1162 = vmax.xlane.f32.xlu0 %v1161
    %v1163 = vpop.xlane.xlu0 %1162
    %vm1164 = vcmp.ge.f32.partialorder %v1160, %v1163
    %v1165 = vsel %vm1164, %v284, 14.0
    %v1166 = vsel %vm1015, %v1165, inf
    %1167 = vmin.xlane.f32.xlu0 %v1166
    %v1168 = vpop.xlane.xlu0 %1167
    %vm1169 = vcmp.eq.f32.partialorder %v284, %v1168
    %v1170 = vsel %vm1169, 1, 0
    %v1171 = vcvt.s32.f32 %v1170
    %v1172 = vlaneseq
    %v1173 = vshrl.u32 %v1172, 7
    %v1174 = vsub.s32 0, %v1173
    %v1175 = vrot.slane %v1171, %v1174
    %v1176 = vsel %vm462, %v1175, %v1147
    %v1177 = vsel %vm463, %v1175, %v1148
    %v1178 = vlaneseq
    %v1179 = vshrl.u32 %v1178, 7
    %v1180 = vsub.s32 0, %v1179
    %v1181 = vrot.slane %v1168, %v1180
    %vm1182 = vcmp.eq.f32.partialorder %v288, %v1181
    %vm1183 = vcmp.eq.f32.partialorder %v289, %v1181
    %vm1184 = vmand %vm470, %vm1182
    %vm1185 = vmand %vm470, %vm1183
    %v1186 = vsel %vm1184, 1.0, %v1157
    %v1187 = vsel %vm1185, 1.0, %v1158
    %vm1188 = vcmp.gt.f32.partialorder %v1171, 0.5
    %v1189 = vsel %vm1188, -1e+30, %v1160
    %v1190 = vsel %vm1015, %v1189, -inf
    %1191 = vmax.xlane.f32.xlu0 %v1190
    %v1192 = vpop.xlane.xlu0 %1191
    %vm1193 = vcmp.ge.f32.partialorder %v1189, %v1192
    %v1194 = vsel %vm1193, %v284, 14.0
    %v1195 = vsel %vm1015, %v1194, inf
    %1196 = vmin.xlane.f32.xlu0 %v1195
    %v1197 = vpop.xlane.xlu0 %1196
    %vm1198 = vcmp.eq.f32.partialorder %v284, %v1197
    %v1199 = vsel %vm1198, 1, 0
    %v1200 = vcvt.s32.f32 %v1199
    %v1201 = vlaneseq
    %v1202 = vshrl.u32 %v1201, 7
    %v1203 = vsub.s32 0, %v1202
    %v1204 = vrot.slane %v1200, %v1203
    %v1205 = vsel %vm494, %v1204, %v1176
    %v1206 = vsel %vm495, %v1204, %v1177
    %v1207 = vlaneseq
    %v1208 = vshrl.u32 %v1207, 7
    %v1209 = vsub.s32 0, %v1208
    %v1210 = vrot.slane %v1197, %v1209
    %vm1211 = vcmp.eq.f32.partialorder %v288, %v1210
    %vm1212 = vcmp.eq.f32.partialorder %v289, %v1210
    %vm1213 = vmand %vm502, %vm1211
    %vm1214 = vmand %vm502, %vm1212
    %v1215 = vsel %vm1213, 1.0, %v1186
    %v1216 = vsel %vm1214, 1.0, %v1187
    %vm1217 = vcmp.gt.f32.partialorder %v1200, 0.5
    %v1218 = vsel %vm1217, -1e+30, %v1189
    %v1219 = vsel %vm1015, %v1218, -inf
    %1220 = vmax.xlane.f32.xlu0 %v1219
    %v1221 = vpop.xlane.xlu0 %1220
    %vm1222 = vcmp.ge.f32.partialorder %v1218, %v1221
    %v1223 = vsel %vm1222, %v284, 14.0
    %v1224 = vsel %vm1015, %v1223, inf
    %1225 = vmin.xlane.f32.xlu0 %v1224
    %v1226 = vpop.xlane.xlu0 %1225
    %vm1227 = vcmp.eq.f32.partialorder %v284, %v1226
    %v1228 = vsel %vm1227, 1, 0
    %v1229 = vcvt.s32.f32 %v1228
    %v1230 = vlaneseq
    %v1231 = vshrl.u32 %v1230, 7
    %v1232 = vsub.s32 0, %v1231
    %v1233 = vrot.slane %v1229, %v1232
    %v1234 = vsel %vm526, %v1233, %v1205
    %v1235 = vsel %vm527, %v1233, %v1206
    %v1236 = vlaneseq
    %v1237 = vshrl.u32 %v1236, 7
    %v1238 = vsub.s32 0, %v1237
    %v1239 = vrot.slane %v1226, %v1238
    %vm1240 = vcmp.eq.f32.partialorder %v288, %v1239
    %vm1241 = vcmp.eq.f32.partialorder %v289, %v1239
    %vm1242 = vmand %vm534, %vm1240
    %vm1243 = vmand %vm534, %vm1241
    %v1244 = vsel %vm1242, 1.0, %v1215
    %v1245 = vsel %vm1243, 1.0, %v1216
    %vm1246 = vcmp.gt.f32.partialorder %v1229, 0.5
    %v1247 = vsel %vm1246, -1e+30, %v1218
    %v1248 = vsel %vm1015, %v1247, -inf
    %1249 = vmax.xlane.f32.xlu0 %v1248
    %v1250 = vpop.xlane.xlu0 %1249
    %vm1251 = vcmp.ge.f32.partialorder %v1247, %v1250
    %v1252 = vsel %vm1251, %v284, 14.0
    %v1253 = vsel %vm1015, %v1252, inf
    %1254 = vmin.xlane.f32.xlu0 %v1253
    %v1255 = vpop.xlane.xlu0 %1254
    %vm1256 = vcmp.eq.f32.partialorder %v284, %v1255
    %v1257 = vsel %vm1256, 1, 0
    %v1258 = vcvt.s32.f32 %v1257
    %v1259 = vlaneseq
    %v1260 = vshrl.u32 %v1259, 7
    %v1261 = vsub.s32 0, %v1260
    %v1262 = vrot.slane %v1258, %v1261
    %v1263 = vsel %vm558, %v1262, %v1234
    %v1264 = vsel %vm559, %v1262, %v1235
    %v1265 = vlaneseq
    %v1266 = vshrl.u32 %v1265, 7
    %v1267 = vsub.s32 0, %v1266
    %v1268 = vrot.slane %v1255, %v1267
    %vm1269 = vcmp.eq.f32.partialorder %v288, %v1268
    %vm1270 = vcmp.eq.f32.partialorder %v289, %v1268
    %vm1271 = vmand %vm566, %vm1269
    %vm1272 = vmand %vm566, %vm1270
    %v1273 = vsel %vm1271, 1.0, %v1244
    %v1274 = vsel %vm1272, 1.0, %v1245
    %vm1275 = vcmp.gt.f32.partialorder %v1258, 0.5
    %v1276 = vsel %vm1275, -1e+30, %v1247
    %v1277 = vsel %vm1015, %v1276, -inf
    %1278 = vmax.xlane.f32.xlu0 %v1277
    %v1279 = vpop.xlane.xlu0 %1278
    %vm1280 = vcmp.ge.f32.partialorder %v1276, %v1279
    %v1281 = vsel %vm1280, %v284, 14.0
    %v1282 = vsel %vm1015, %v1281, inf
    %1283 = vmin.xlane.f32.xlu0 %v1282
    %v1284 = vpop.xlane.xlu0 %1283
    %vm1285 = vcmp.eq.f32.partialorder %v284, %v1284
    %v1286 = vsel %vm1285, 1, 0
    %v1287 = vcvt.s32.f32 %v1286
    %v1288 = vlaneseq
    %v1289 = vshrl.u32 %v1288, 7
    %v1290 = vsub.s32 0, %v1289
    %v1291 = vrot.slane %v1287, %v1290
    %v1292 = vsel %vm590, %v1291, %v1263
    %v1293 = vsel %vm591, %v1291, %v1264
    %v1294 = vlaneseq
    %v1295 = vshrl.u32 %v1294, 7
    %v1296 = vsub.s32 0, %v1295
    %v1297 = vrot.slane %v1284, %v1296
    %vm1298 = vcmp.eq.f32.partialorder %v288, %v1297
    %vm1299 = vcmp.eq.f32.partialorder %v289, %v1297
    %vm1300 = vmand %vm598, %vm1298
    %vm1301 = vmand %vm598, %vm1299
    %v1302 = vsel %vm1300, 1.0, %v1273
    %v1303 = vsel %vm1301, 1.0, %v1274
    %vm1304 = vcmp.gt.f32.partialorder %v1287, 0.5
    %v1305 = vsel %vm1304, -1e+30, %v1276
    %v1306 = vsel %vm1015, %v1305, -inf
    %1307 = vmax.xlane.f32.xlu0 %v1306
    %v1308 = vpop.xlane.xlu0 %1307
    %vm1309 = vcmp.ge.f32.partialorder %v1305, %v1308
    %v1310 = vsel %vm1309, %v284, 14.0
    %v1311 = vsel %vm1015, %v1310, inf
    %1312 = vmin.xlane.f32.xlu0 %v1311
    %v1313 = vpop.xlane.xlu0 %1312
    %vm1314 = vcmp.eq.f32.partialorder %v284, %v1313
    %v1315 = vsel %vm1314, 1, 0
    %v1316 = vcvt.s32.f32 %v1315
    %v1317 = vlaneseq
    %v1318 = vshrl.u32 %v1317, 7
    %v1319 = vsub.s32 0, %v1318
    %v1320 = vrot.slane %v1316, %v1319
    %v1321 = vsel %vm622, %v1320, %v1292
    %v1322 = vsel %vm623, %v1320, %v1293
    %v1323 = vlaneseq
    %v1324 = vshrl.u32 %v1323, 7
    %v1325 = vsub.s32 0, %v1324
    %v1326 = vrot.slane %v1313, %v1325
    %vm1327 = vcmp.eq.f32.partialorder %v288, %v1326
    %vm1328 = vcmp.eq.f32.partialorder %v289, %v1326
    %vm1329 = vmand %vm630, %vm1327
    %vm1330 = vmand %vm630, %vm1328
    %v1331 = vsel %vm1329, 1.0, %v1302
    %v1332 = vsel %vm1330, 1.0, %v1303
    %v1333 = vlaneseq
    %v1334 = vshrl.u32 %v1333, 7
    %v1335 = vsub.s32 0, %v1334
    %v1336 = vrot.slane %v1014, %v1335
    %v1337 = vmul.f32 %v1321, %v1336
    %v1338 = vmul.f32 %v1322, %v1336
    %vm1339 = vcmask 113664
    %v1340 = vsel %vm1339, %v1337, 0.0
    %1341 = vadd.xlane.f32.xlu0 %v1340
    %v1342 = vpop.xlane.xlu0 %1341
    %vm1343 = vcmask 108544
    %v1344 = vsel %vm1343, %v1338, 0.0
    %1345 = vadd.xlane.f32.xlu0 %v1344
    %v1346 = vpop.xlane.xlu0 %1345
    %v1347 = vpack.c.bf16 %v1322, %v1321
    %v1348 = vpack.c.bf16 %v925, %v924
    %v1350 = vsel %vm1339, %v1347, 0
    %vm1352 = vcmask 1046528
    %v1354 = vsel %vm1352, %v1348, 0
    %1356 = vmatprep.subr.bf16.mxu0 0
    %1357 = vmatpush1.bf16.msra.mxu0 %v1354
    %1358 = vmatprep.subr.bf16.mxu0 0
    %1359 = vmatpush1.bf16.msra.mxu0 0
    %1360 = vmatprep.subr.bf16.mxu0 0
    %1361 = vmatpush1.bf16.msra.mxu0 0
    %1362 = vmatprep.subr.bf16.mxu0 0
    %1363 = vmatpush1.bf16.msra.mxu0 0
    %1364 = vmatprep.subr.bf16.mxu0 0
    %1365 = vmatpush1.bf16.msra.mxu0 0
    %1366 = vmatprep.subr.bf16.mxu0 0
    %1367 = vmatpush1.bf16.msra.mxu0 0
    %1368 = vmatprep.subr.bf16.mxu0 0
    %1369 = vmatpush1.bf16.msra.mxu0 0
    %1370 = vmatprep.subr.bf16.mxu0 0
    %1371 = vmatpush1.bf16.msra.mxu0 0
    %1372 = vmatprep.subr.bf16.mxu0 0
    %1373 = vmatpush1.bf16.msra.mxu0 0
    %1374 = vmatprep.subr.bf16.mxu0 0
    %1375 = vmatpush1.bf16.msra.mxu0 0
    %1376 = vmatprep.subr.bf16.mxu0 0
    %1377 = vmatpush1.bf16.msra.mxu0 0
    %1378 = vmatprep.subr.bf16.mxu0 0
    %1379 = vmatpush1.bf16.msra.mxu0 0
    %1380 = vmatprep.subr.bf16.mxu0 0
    %1381 = vmatpush1.bf16.msra.mxu0 0
    %1382 = vmatprep.subr.bf16.mxu0 0
    %1383 = vmatpush1.bf16.msra.mxu0 0
    %1384 = vmatprep.subr.bf16.mxu0 0
    %1385 = vmatpush1.bf16.msra.mxu0 0
    %1386 = vmatprep.subr.bf16.mxu0 0
    %1387 = vmatpush1.bf16.msra.mxu0 0
    %1388 = vmatprep.mubr.bf16.mxu0 0
    %1389 = vmatmul.mubr.bf16.gmra.mrb[0].mxu0 %v1350
    %v1390 = vpop.f32.mrb[0].mxu0
    %v1391 = vadd.f32 0.0, %v1390
    %v1392 = vpop.f32.mrb[0].mxu0
    %v1393 = vpop.f32.mrb[0].mxu0
    %v1394 = vadd.f32 0.0, %v1393
    %v1395 = vpop.f32.mrb[0].mxu0
    %1396 = vdwg.mxu0
    %v1397 = vmul.f32 %v1391, %v1342
    %v1398 = vmul.f32 %v1394, %v1346
    %s1399 = scalar_lea.vmem [#allocation2], 128
    %v1400 = vld [vmem:[%s1399] sm:$0xf]
    %v1401 = vld [vmem:[%s1399 + $0x4] sm:$0xf]
    %v1402 = vld [vmem:[%s1399 + $0x8] sm:$0xf]
    %v1403 = vld [vmem:[%s1399 + $0xc] sm:$0xf]
    %v1404 = vld [vmem:[%s1399 + $0x10] sm:$0xf]
    %v1405 = vld [vmem:[%s1399 + $0x14] sm:$0xf]
    %v1406 = vld [vmem:[%s1399 + $0x18] sm:$0xf]
    %v1407 = vld [vmem:[%s1399 + $0x1c] sm:$0xf]
    %v1408 = vld [vmem:[%s1399 + $0x20] sm:$0xf]
    %v1409 = vld [vmem:[%s1399 + $0x24] sm:$0xf]
    %v1410 = vld [vmem:[%s1399 + $0x28] sm:$0xf]
    %v1411 = vld [vmem:[%s1399 + $0x2c] sm:$0xf]
    %v1412 = vld [vmem:[%s1399 + $0x30] sm:$0xf]
    %v1413 = vld [vmem:[%s1399 + $0x34] sm:$0xf]
    %v1414 = vld [vmem:[%s1399 + $0x38] sm:$0xf]
    %v1415 = vld [vmem:[%s1399 + $0x3c] sm:$0xf]
    %s1416 = scalar_lea.vmem %s2, 2
    %v1417 = vld [vmem:[%s1416] sm:$0x1]
    %v1418 = vpack.c.bf16 %v1398, %v1397
    %v1420 = vlaneseq
    %v1421 = vshrl.u32 %v1420, 7
    %v1422 = vsub.s32 0, %v1421
    %v1423 = vrot.slane %v1417, %v1422
    %v1441 = vunpack.c.l.b16 %v1400
    %v1442 = vunpack.c.l.b16 %v1401
    %v1443 = vunpack.c.l.b16 %v1402
    %v1444 = vunpack.c.l.b16 %v1403
    %v1445 = vunpack.c.l.b16 %v1404
    %v1446 = vunpack.c.l.b16 %v1405
    %v1447 = vunpack.c.l.b16 %v1406
    %v1448 = vunpack.c.l.b16 %v1407
    %v1449 = vunpack.c.l.b16 %v1408
    %v1450 = vunpack.c.l.b16 %v1409
    %v1451 = vunpack.c.l.b16 %v1410
    %v1452 = vunpack.c.l.b16 %v1411
    %v1453 = vunpack.c.l.b16 %v1412
    %v1454 = vunpack.c.l.b16 %v1413
    %v1455 = vunpack.c.l.b16 %v1414
    %v1456 = vunpack.c.l.b16 %v1415
    %v1457 = vpack.c.b16 %v1442, %v1441
    %v1458 = vpack.c.b16 %v1444, %v1443
    %v1459 = vpack.c.b16 %v1446, %v1445
    %v1460 = vpack.c.b16 %v1448, %v1447
    %v1461 = vpack.c.b16 %v1450, %v1449
    %v1462 = vpack.c.b16 %v1452, %v1451
    %v1463 = vpack.c.b16 %v1454, %v1453
    %v1464 = vpack.c.b16 %v1456, %v1455
    %1473 = vmatprep.subr.bf16.mxu0 0
    %1474 = vmatpush1.bf16.msra.mxu0 %v1457
    %1475 = vmatprep.subr.bf16.mxu0 0
    %1476 = vmatpush1.bf16.msra.mxu0 %v1458
    %1477 = vmatprep.subr.bf16.mxu0 0
    %1478 = vmatpush1.bf16.msra.mxu0 %v1459
    %1479 = vmatprep.subr.bf16.mxu0 0
    %1480 = vmatpush1.bf16.msra.mxu0 %v1460
    %1481 = vmatprep.subr.bf16.mxu0 0
    %1482 = vmatpush1.bf16.msra.mxu0 %v1461
    %1483 = vmatprep.subr.bf16.mxu0 0
    %1484 = vmatpush1.bf16.msra.mxu0 %v1462
    %1485 = vmatprep.subr.bf16.mxu0 0
    %1486 = vmatpush1.bf16.msra.mxu0 %v1463
    %1487 = vmatprep.subr.bf16.mxu0 0
    %1488 = vmatpush1.bf16.msra.mxu0 %v1464
    %1489 = vmatprep.subr.bf16.mxu0 0
    %1490 = vmatpush1.bf16.msra.mxu0 0
    %1491 = vmatprep.subr.bf16.mxu0 0
    %1492 = vmatpush1.bf16.msra.mxu0 0
    %1493 = vmatprep.subr.bf16.mxu0 0
    %1494 = vmatpush1.bf16.msra.mxu0 0
    %1495 = vmatprep.subr.bf16.mxu0 0
    %1496 = vmatpush1.bf16.msra.mxu0 0
    %1497 = vmatprep.subr.bf16.mxu0 0
    %1498 = vmatpush1.bf16.msra.mxu0 0
    %1499 = vmatprep.subr.bf16.mxu0 0
    %1500 = vmatpush1.bf16.msra.mxu0 0
    %1501 = vmatprep.subr.bf16.mxu0 0
    %1502 = vmatpush1.bf16.msra.mxu0 0
    %1503 = vmatprep.subr.bf16.mxu0 0
    %1504 = vmatpush1.bf16.msra.mxu0 0
    %1505 = vmatprep.mubr.bf16.mxu0 0
    %1506 = vmatmul.mubr.bf16.gmra.mrb[0].mxu0 %v1418
    %v1507 = vpop.f32.mrb[0].mxu0
    %v1508 = vadd.f32 %v1423, %v1507
    %v1509 = vpop.f32.mrb[0].mxu0
    %v1510 = vpop.f32.mrb[0].mxu0
    %v1511 = vadd.f32 %v1423, %v1510
    %v1512 = vpop.f32.mrb[0].mxu0
    %1513 = vdwg.mxu0
    %vm1514 = vcmp.gt.f32.partialorder %v1508, 0.0
    %vm1515 = vcmp.gt.f32.partialorder %v1511, 0.0
    %v1516 = vmin.f32 %v1508, 0.0
    %v1517 = vmin.f32 %v1511, 0.0
    %v1518 = vmul.f32 %v1516, 1.442695
    %v1519 = vpow.pop %v1518
    %v1520 = vmul.f32 %v1517, 1.442695
    %v1521 = vpow.pop %v1520
    %v1522 = vsub.f32 %v1519, 1.0
    %v1523 = vsub.f32 %v1521, 1.0
    %v1524 = vsel %vm1514, %v1508, %v1522
    %v1525 = vsel %vm1515, %v1511, %v1523
    %s1526 = scalar_lea.vmem %s3, 2
    %v1527 = vld [vmem:[%s1526] sm:$0x1]
    %s1528 = scalar_lea.vmem %s4, 2
    %v1529 = vld [vmem:[%s1528] sm:$0x1]
    %1531 = vset.pattern.permute.xlu0 0
    %1532 = vperm.xlu0 %1531, %v1529
    %v1533 = vpop.permute.xlu0 %1532
    %v1535 = vlaneseq
    %v1536 = vshrl.u32 %v1535, 7
    %v1537 = vsub.s32 0, %v1536
    %v1538 = vrot.slane %v1533, %v1537
    %1539 = vmatprep.subr.mxu0 0.0
    %1540 = vmatpush1.xpose.msra.mxu0 %v1524
    %1541 = vmatprep.subr.mxu0 0.0
    %1542 = vmatpush1.xpose.msra.mxu0 %v1525
    %1543 = vmatprep.subr.mxu0 0.0
    %1544 = vmatpush1.xpose.msra.mxu0 0.0
    %1545 = vmatprep.subr.mxu0 0.0
    %1546 = vmatpush1.xpose.msra.mxu0 0.0
    %1547 = vmatprep.subr.mxu0 0.0
    %1548 = vmatpush1.xpose.msra.mxu0 0.0
    %1549 = vmatprep.subr.mxu0 0.0
    %1550 = vmatpush1.xpose.msra.mxu0 0.0
    %1551 = vmatprep.subr.mxu0 0.0
    %1552 = vmatpush1.xpose.msra.mxu0 0.0
    %1553 = vmatprep.subr.mxu0 0.0
    %1554 = vmatpush1.xpose.msra.mxu0 0.0
    %1555 = vmatprep.subr.mxu0 0.0
    %1556 = vmatpush1.xpose.msra.mxu0 0.0
    %1557 = vmatprep.subr.mxu0 0.0
    %1558 = vmatpush1.xpose.msra.mxu0 0.0
    %1559 = vmatprep.subr.mxu0 0.0
    %1560 = vmatpush1.xpose.msra.mxu0 0.0
    %1561 = vmatprep.subr.mxu0 0.0
    %1562 = vmatpush1.xpose.msra.mxu0 0.0
    %1563 = vmatprep.subr.mxu0 0.0
    %1564 = vmatpush1.xpose.msra.mxu0 0.0
    %1565 = vmatprep.subr.mxu0 0.0
    %1566 = vmatpush1.xpose.msra.mxu0 0.0
    %1567 = vmatprep.subr.mxu0 0.0
    %1568 = vmatpush1.xpose.msra.mxu0 0.0
    %1569 = vmatprep.subr.mxu0 0.0
    %1570 = vmatpush1.xpose.msra.mxu0 0.0
    %1571 = vmatprep.subr.mxu0 0.0
    %1572 = vmatpush1.xpose.msra.mxu0 0.0
    %1573 = vmatprep.subr.mxu0 0.0
    %1574 = vmatpush1.xpose.msra.mxu0 0.0
    %1575 = vmatprep.subr.mxu0 0.0
    %1576 = vmatpush1.xpose.msra.mxu0 0.0
    %1577 = vmatprep.subr.mxu0 0.0
    %1578 = vmatpush1.xpose.msra.mxu0 0.0
    %1579 = vmatprep.subr.mxu0 0.0
    %1580 = vmatpush1.xpose.msra.mxu0 0.0
    %1581 = vmatprep.subr.mxu0 0.0
    %1582 = vmatpush1.xpose.msra.mxu0 0.0
    %1583 = vmatprep.subr.mxu0 0.0
    %1584 = vmatpush1.xpose.msra.mxu0 0.0
    %1585 = vmatprep.subr.mxu0 0.0
    %1586 = vmatpush1.xpose.msra.mxu0 0.0
    %1587 = vmatprep.subr.mxu0 0.0
    %1588 = vmatpush1.xpose.msra.mxu0 0.0
    %1589 = vmatprep.subr.mxu0 0.0
    %1590 = vmatpush1.xpose.msra.mxu0 0.0
    %1591 = vmatprep.subr.mxu0 0.0
    %1592 = vmatpush1.xpose.msra.mxu0 0.0
    %1593 = vmatprep.subr.mxu0 0.0
    %1594 = vmatpush1.xpose.msra.mxu0 0.0
    %1595 = vmatprep.subr.mxu0 0.0
    %1596 = vmatpush1.xpose.msra.mxu0 0.0
    %1597 = vmatprep.subr.mxu0 0.0
    %1598 = vmatpush1.xpose.msra.mxu0 0.0
    %1599 = vmatprep.subr.mxu0 0.0
    %1600 = vmatpush1.xpose.msra.mxu0 0.0
    %1601 = vmatprep.subr.mxu0 0.0
    %1602 = vmatpush1.xpose.msra.mxu0 0.0
    %1603 = vmatprep.mubr.f32.mxu0 0.0
    %1604 = vmatmul.mubr.f32.gmra.mrb[0].mxu0 %v1527
    %v1605 = vpop.f32.mrb[0].mxu0
    %v1606 = vadd.f32 %v1538, %v1605
    %v1607 = vpop.f32.mrb[0].mxu0
    %1608 = vdwg.mxu0
    %v1609 = vsub.f32 0.0, %v1606
    %v1610 = vmul.f32 %v1609, 1.442695
    %v1611 = vpow.pop %v1610
    %v1612 = vadd.f32 %v1611, 1.0
    %v1613 = vrcp.pop %v1612
    %v1614 = vmul.f32 1.0, %v1613
    %vm1615 = vcmask 81920
    %v1616 = vsel %vm1615, %v1614, -inf
    %1617 = vmax.xlane.f32.xlu0 %v1616
    %v1618 = vpop.xlane.xlu0 %1617
    %vm1619 = vcmp.ge.f32.partialorder %v1614, %v1618
    %v1620 = vsel %vm1619, %v284, 11.0
    %v1621 = vsel %vm1615, %v1620, inf
    %1622 = vmin.xlane.f32.xlu0 %v1621
    %v1623 = vpop.xlane.xlu0 %1622
    %vm1624 = vcmp.eq.f32.partialorder %v284, %v1623
    %v1625 = vsel %vm1624, 1, 0
    %v1626 = vcvt.s32.f32 %v1625
    %v1627 = vlaneseq
    %v1628 = vshrl.u32 %v1627, 7
    %v1629 = vsub.s32 0, %v1628
    %v1630 = vrot.slane %v1626, %v1629
    %v1631 = vsel %vm302, %v1630, 0.0
    %v1632 = vlaneseq
    %v1633 = vshrl.u32 %v1632, 7
    %v1634 = vsub.s32 0, %v1633
    %v1635 = vrot.slane %v1623, %v1634
    %vm1636 = vcmp.eq.f32.partialorder %v288, %v1635
    %vm1637 = vcmp.eq.f32.partialorder %v289, %v1635
    %vm1638 = vmand %vm310, %vm1636
    %vm1639 = vmand %vm310, %vm1637
    %v1640 = vsel %vm1638, 1.0, 0.0
    %v1641 = vsel %vm1639, 1.0, 0.0
    %vm1642 = vcmp.gt.f32.partialorder %v1626, 0.5
    %v1643 = vsel %vm1642, -1e+30, %v1614
    %v1644 = vsel %vm1615, %v1643, -inf
    %1645 = vmax.xlane.f32.xlu0 %v1644
    %v1646 = vpop.xlane.xlu0 %1645
    %vm1647 = vcmp.ge.f32.partialorder %v1643, %v1646
    %v1648 = vsel %vm1647, %v284, 11.0
    %v1649 = vsel %vm1615, %v1648, inf
    %1650 = vmin.xlane.f32.xlu0 %v1649
    %v1651 = vpop.xlane.xlu0 %1650
    %vm1652 = vcmp.eq.f32.partialorder %v284, %v1651
    %v1653 = vsel %vm1652, 1, 0
    %v1654 = vcvt.s32.f32 %v1653
    %v1655 = vlaneseq
    %v1656 = vshrl.u32 %v1655, 7
    %v1657 = vsub.s32 0, %v1656
    %v1658 = vrot.slane %v1654, %v1657
    %v1659 = vsel %vm334, %v1658, %v1631
    %v1660 = vlaneseq
    %v1661 = vshrl.u32 %v1660, 7
    %v1662 = vsub.s32 0, %v1661
    %v1663 = vrot.slane %v1651, %v1662
    %vm1664 = vcmp.eq.f32.partialorder %v288, %v1663
    %vm1665 = vcmp.eq.f32.partialorder %v289, %v1663
    %vm1666 = vmand %vm342, %vm1664
    %vm1667 = vmand %vm342, %vm1665
    %v1668 = vsel %vm1666, 1.0, %v1640
    %v1669 = vsel %vm1667, 1.0, %v1641
    %vm1670 = vcmp.gt.f32.partialorder %v1654, 0.5
    %v1671 = vsel %vm1670, -1e+30, %v1643
    %v1672 = vsel %vm1615, %v1671, -inf
    %1673 = vmax.xlane.f32.xlu0 %v1672
    %v1674 = vpop.xlane.xlu0 %1673
    %vm1675 = vcmp.ge.f32.partialorder %v1671, %v1674
    %v1676 = vsel %vm1675, %v284, 11.0
    %v1677 = vsel %vm1615, %v1676, inf
    %1678 = vmin.xlane.f32.xlu0 %v1677
    %v1679 = vpop.xlane.xlu0 %1678
    %vm1680 = vcmp.eq.f32.partialorder %v284, %v1679
    %v1681 = vsel %vm1680, 1, 0
    %v1682 = vcvt.s32.f32 %v1681
    %v1683 = vlaneseq
    %v1684 = vshrl.u32 %v1683, 7
    %v1685 = vsub.s32 0, %v1684
    %v1686 = vrot.slane %v1682, %v1685
    %v1687 = vsel %vm366, %v1686, %v1659
    %v1688 = vlaneseq
    %v1689 = vshrl.u32 %v1688, 7
    %v1690 = vsub.s32 0, %v1689
    %v1691 = vrot.slane %v1679, %v1690
    %vm1692 = vcmp.eq.f32.partialorder %v288, %v1691
    %vm1693 = vcmp.eq.f32.partialorder %v289, %v1691
    %vm1694 = vmand %vm374, %vm1692
    %vm1695 = vmand %vm374, %vm1693
    %v1696 = vsel %vm1694, 1.0, %v1668
    %v1697 = vsel %vm1695, 1.0, %v1669
    %vm1698 = vcmp.gt.f32.partialorder %v1682, 0.5
    %v1699 = vsel %vm1698, -1e+30, %v1671
    %v1700 = vsel %vm1615, %v1699, -inf
    %1701 = vmax.xlane.f32.xlu0 %v1700
    %v1702 = vpop.xlane.xlu0 %1701
    %vm1703 = vcmp.ge.f32.partialorder %v1699, %v1702
    %v1704 = vsel %vm1703, %v284, 11.0
    %v1705 = vsel %vm1615, %v1704, inf
    %1706 = vmin.xlane.f32.xlu0 %v1705
    %v1707 = vpop.xlane.xlu0 %1706
    %vm1708 = vcmp.eq.f32.partialorder %v284, %v1707
    %v1709 = vsel %vm1708, 1, 0
    %v1710 = vcvt.s32.f32 %v1709
    %v1711 = vlaneseq
    %v1712 = vshrl.u32 %v1711, 7
    %v1713 = vsub.s32 0, %v1712
    %v1714 = vrot.slane %v1710, %v1713
    %v1715 = vsel %vm398, %v1714, %v1687
    %v1716 = vlaneseq
    %v1717 = vshrl.u32 %v1716, 7
    %v1718 = vsub.s32 0, %v1717
    %v1719 = vrot.slane %v1707, %v1718
    %vm1720 = vcmp.eq.f32.partialorder %v288, %v1719
    %vm1721 = vcmp.eq.f32.partialorder %v289, %v1719
    %vm1722 = vmand %vm406, %vm1720
    %vm1723 = vmand %vm406, %vm1721
    %v1724 = vsel %vm1722, 1.0, %v1696
    %v1725 = vsel %vm1723, 1.0, %v1697
    %vm1726 = vcmp.gt.f32.partialorder %v1710, 0.5
    %v1727 = vsel %vm1726, -1e+30, %v1699
    %v1728 = vsel %vm1615, %v1727, -inf
    %1729 = vmax.xlane.f32.xlu0 %v1728
    %v1730 = vpop.xlane.xlu0 %1729
    %vm1731 = vcmp.ge.f32.partialorder %v1727, %v1730
    %v1732 = vsel %vm1731, %v284, 11.0
    %v1733 = vsel %vm1615, %v1732, inf
    %1734 = vmin.xlane.f32.xlu0 %v1733
    %v1735 = vpop.xlane.xlu0 %1734
    %vm1736 = vcmp.eq.f32.partialorder %v284, %v1735
    %v1737 = vsel %vm1736, 1, 0
    %v1738 = vcvt.s32.f32 %v1737
    %v1739 = vlaneseq
    %v1740 = vshrl.u32 %v1739, 7
    %v1741 = vsub.s32 0, %v1740
    %v1742 = vrot.slane %v1738, %v1741
    %v1743 = vsel %vm430, %v1742, %v1715
    %v1744 = vlaneseq
    %v1745 = vshrl.u32 %v1744, 7
    %v1746 = vsub.s32 0, %v1745
    %v1747 = vrot.slane %v1735, %v1746
    %vm1748 = vcmp.eq.f32.partialorder %v288, %v1747
    %vm1749 = vcmp.eq.f32.partialorder %v289, %v1747
    %vm1750 = vmand %vm438, %vm1748
    %vm1751 = vmand %vm438, %vm1749
    %v1752 = vsel %vm1750, 1.0, %v1724
    %v1753 = vsel %vm1751, 1.0, %v1725
    %vm1754 = vcmp.gt.f32.partialorder %v1738, 0.5
    %v1755 = vsel %vm1754, -1e+30, %v1727
    %v1756 = vsel %vm1615, %v1755, -inf
    %1757 = vmax.xlane.f32.xlu0 %v1756
    %v1758 = vpop.xlane.xlu0 %1757
    %vm1759 = vcmp.ge.f32.partialorder %v1755, %v1758
    %v1760 = vsel %vm1759, %v284, 11.0
    %v1761 = vsel %vm1615, %v1760, inf
    %1762 = vmin.xlane.f32.xlu0 %v1761
    %v1763 = vpop.xlane.xlu0 %1762
    %vm1764 = vcmp.eq.f32.partialorder %v284, %v1763
    %v1765 = vsel %vm1764, 1, 0
    %v1766 = vcvt.s32.f32 %v1765
    %v1767 = vlaneseq
    %v1768 = vshrl.u32 %v1767, 7
    %v1769 = vsub.s32 0, %v1768
    %v1770 = vrot.slane %v1766, %v1769
    %v1771 = vsel %vm462, %v1770, %v1743
    %v1772 = vlaneseq
    %v1773 = vshrl.u32 %v1772, 7
    %v1774 = vsub.s32 0, %v1773
    %v1775 = vrot.slane %v1763, %v1774
    %vm1776 = vcmp.eq.f32.partialorder %v288, %v1775
    %vm1777 = vcmp.eq.f32.partialorder %v289, %v1775
    %vm1778 = vmand %vm470, %vm1776
    %vm1779 = vmand %vm470, %vm1777
    %v1780 = vsel %vm1778, 1.0, %v1752
    %v1781 = vsel %vm1779, 1.0, %v1753
    %vm1782 = vcmp.gt.f32.partialorder %v1766, 0.5
    %v1783 = vsel %vm1782, -1e+30, %v1755
    %v1784 = vsel %vm1615, %v1783, -inf
    %1785 = vmax.xlane.f32.xlu0 %v1784
    %v1786 = vpop.xlane.xlu0 %1785
    %vm1787 = vcmp.ge.f32.partialorder %v1783, %v1786
    %v1788 = vsel %vm1787, %v284, 11.0
    %v1789 = vsel %vm1615, %v1788, inf
    %1790 = vmin.xlane.f32.xlu0 %v1789
    %v1791 = vpop.xlane.xlu0 %1790
    %vm1792 = vcmp.eq.f32.partialorder %v284, %v1791
    %v1793 = vsel %vm1792, 1, 0
    %v1794 = vcvt.s32.f32 %v1793
    %v1795 = vlaneseq
    %v1796 = vshrl.u32 %v1795, 7
    %v1797 = vsub.s32 0, %v1796
    %v1798 = vrot.slane %v1794, %v1797
    %v1799 = vsel %vm494, %v1798, %v1771
    %v1800 = vlaneseq
    %v1801 = vshrl.u32 %v1800, 7
    %v1802 = vsub.s32 0, %v1801
    %v1803 = vrot.slane %v1791, %v1802
    %vm1804 = vcmp.eq.f32.partialorder %v288, %v1803
    %vm1805 = vcmp.eq.f32.partialorder %v289, %v1803
    %vm1806 = vmand %vm502, %vm1804
    %vm1807 = vmand %vm502, %vm1805
    %v1808 = vsel %vm1806, 1.0, %v1780
    %v1809 = vsel %vm1807, 1.0, %v1781
    %v1810 = vlaneseq
    %v1811 = vshrl.u32 %v1810, 7
    %v1812 = vsub.s32 0, %v1811
    %v1813 = vrot.slane %v1614, %v1812
    %v1814 = vmul.f32 %v1799, %v1813
    %vm1815 = vcmask 88064
    %v1816 = vsel %vm1815, %v1814, 0.0
    %1817 = vadd.xlane.f32.xlu0 %v1816
    %v1818 = vpop.xlane.xlu0 %1817
    %v1819 = vpack.c.bf16 %v1799, %v1799
    %v1820 = vpack.c.bf16 %v1525, %v1524
    %vm1821 = vcmask 89088
    %v1823 = vsel %vm1821, %v1819, 0
    %vm1825 = vcmask 1044480
    %vm1826 = vcmask 1045504
    %v1827 = vsel %vm1825, 4294967295, 65535
    %v1828 = vsel %vm1826, %v1827, 0
    %v1830 = vand.u32 %v1820, %v1828
    %1832 = vmatprep.subr.bf16.mxu0 0
    %1833 = vmatpush1.bf16.msra.mxu0 %v1830
    %1834 = vmatprep.subr.bf16.mxu0 0
    %1835 = vmatpush1.bf16.msra.mxu0 0
    %1836 = vmatprep.subr.bf16.mxu0 0
    %1837 = vmatpush1.bf16.msra.mxu0 0
    %1838 = vmatprep.subr.bf16.mxu0 0
    %1839 = vmatpush1.bf16.msra.mxu0 0
    %1840 = vmatprep.subr.bf16.mxu0 0
    %1841 = vmatpush1.bf16.msra.mxu0 0
    %1842 = vmatprep.subr.bf16.mxu0 0
    %1843 = vmatpush1.bf16.msra.mxu0 0
    %1844 = vmatprep.subr.bf16.mxu0 0
    %1845 = vmatpush1.bf16.msra.mxu0 0
    %1846 = vmatprep.subr.bf16.mxu0 0
    %1847 = vmatpush1.bf16.msra.mxu0 0
    %1848 = vmatprep.subr.bf16.mxu0 0
    %1849 = vmatpush1.bf16.msra.mxu0 0
    %1850 = vmatprep.subr.bf16.mxu0 0
    %1851 = vmatpush1.bf16.msra.mxu0 0
    %1852 = vmatprep.subr.bf16.mxu0 0
    %1853 = vmatpush1.bf16.msra.mxu0 0
    %1854 = vmatprep.subr.bf16.mxu0 0
    %1855 = vmatpush1.bf16.msra.mxu0 0
    %1856 = vmatprep.subr.bf16.mxu0 0
    %1857 = vmatpush1.bf16.msra.mxu0 0
    %1858 = vmatprep.subr.bf16.mxu0 0
    %1859 = vmatpush1.bf16.msra.mxu0 0
    %1860 = vmatprep.subr.bf16.mxu0 0
    %1861 = vmatpush1.bf16.msra.mxu0 0
    %1862 = vmatprep.subr.bf16.mxu0 0
    %1863 = vmatpush1.bf16.msra.mxu0 0
    %1864 = vmatprep.mubr.bf16.mxu0 0
    %1865 = vmatmul.mubr.bf16.gmra.mrb[0].mxu0 %v1823
    %v1866 = vpop.f32.mrb[0].mxu0
    %v1867 = vadd.f32 0.0, %v1866
    %v1868 = vpop.f32.mrb[0].mxu0
    %v1869 = vpop.f32.mrb[0].mxu0
    %v1870 = vpop.f32.mrb[0].mxu0
    %1871 = vdwg.mxu0
    %v1872 = vmul.f32 %v1867, %v1818
    %v1873 = vld [vmem:[%s7] sm:$0xf]
    %v1874 = vld [vmem:[%s7 + $0x4] sm:$0xf]
    %v1875 = vld [vmem:[%s7 + $0x8] sm:$0xf]
    %v1876 = vld [vmem:[%s7 + $0xc] sm:$0xf]
    %v1877 = vld [vmem:[%s7 + $0x10] sm:$0xf]
    %v1878 = vld [vmem:[%s7 + $0x14] sm:$0xf]
    %v1879 = vld [vmem:[%s7 + $0x18] sm:$0xf]
    %v1880 = vld [vmem:[%s7 + $0x1c] sm:$0xf]
    %v1881 = vld [vmem:[%s7 + $0x20] sm:$0xf]
    %v1882 = vld [vmem:[%s7 + $0x24] sm:$0xf]
    %v1883 = vld [vmem:[%s7 + $0x28] sm:$0xf]
    %v1884 = vld [vmem:[%s7 + $0x2c] sm:$0xf]
    %v1885 = vld [vmem:[%s7 + $0x30] sm:$0xf]
    %v1886 = vld [vmem:[%s7 + $0x34] sm:$0xf]
    %v1887 = vld [vmem:[%s7 + $0x38] sm:$0xf]
    %v1888 = vld [vmem:[%s7 + $0x3c] sm:$0xf]
    %v1889 = vld [vmem:[%s8] sm:$0x1]
    %v1890 = vpack.c.bf16 %v1872, %v1872
    %v1892 = vlaneseq
    %v1893 = vshrl.u32 %v1892, 7
    %v1894 = vsub.s32 0, %v1893
    %v1895 = vrot.slane %v1889, %v1894
    %v1913 = vunpack.c.l.b16 %v1873
    %v1914 = vunpack.c.l.b16 %v1874
    %v1915 = vunpack.c.l.b16 %v1875
    %v1916 = vunpack.c.l.b16 %v1876
    %v1917 = vunpack.c.l.b16 %v1877
    %v1918 = vunpack.c.l.b16 %v1878
    %v1919 = vunpack.c.l.b16 %v1879
    %v1920 = vunpack.c.l.b16 %v1880
    %v1921 = vunpack.c.l.b16 %v1881
    %v1922 = vunpack.c.l.b16 %v1882
    %v1923 = vunpack.c.l.b16 %v1883
    %v1924 = vunpack.c.l.b16 %v1884
    %v1925 = vunpack.c.l.b16 %v1885
    %v1926 = vunpack.c.l.b16 %v1886
    %v1927 = vunpack.c.l.b16 %v1887
    %v1928 = vunpack.c.l.b16 %v1888
    %v1929 = vpack.c.b16 %v1914, %v1913
    %v1930 = vpack.c.b16 %v1916, %v1915
    %v1931 = vpack.c.b16 %v1918, %v1917
    %v1932 = vpack.c.b16 %v1920, %v1919
    %v1933 = vpack.c.b16 %v1922, %v1921
    %v1934 = vpack.c.b16 %v1924, %v1923
    %v1935 = vpack.c.b16 %v1926, %v1925
    %v1936 = vpack.c.b16 %v1928, %v1927
    %1945 = vmatprep.subr.bf16.mxu0 0
    %1946 = vmatpush1.bf16.msra.mxu0 %v1929
    %1947 = vmatprep.subr.bf16.mxu0 0
    %1948 = vmatpush1.bf16.msra.mxu0 %v1930
    %1949 = vmatprep.subr.bf16.mxu0 0
    %1950 = vmatpush1.bf16.msra.mxu0 %v1931
    %1951 = vmatprep.subr.bf16.mxu0 0
    %1952 = vmatpush1.bf16.msra.mxu0 %v1932
    %1953 = vmatprep.subr.bf16.mxu0 0
    %1954 = vmatpush1.bf16.msra.mxu0 %v1933
    %1955 = vmatprep.subr.bf16.mxu0 0
    %1956 = vmatpush1.bf16.msra.mxu0 %v1934
    %1957 = vmatprep.subr.bf16.mxu0 0
    %1958 = vmatpush1.bf16.msra.mxu0 %v1935
    %1959 = vmatprep.subr.bf16.mxu0 0
    %1960 = vmatpush1.bf16.msra.mxu0 %v1936
    %1961 = vmatprep.subr.bf16.mxu0 0
    %1962 = vmatpush1.bf16.msra.mxu0 0
    %1963 = vmatprep.subr.bf16.mxu0 0
    %1964 = vmatpush1.bf16.msra.mxu0 0
    %1965 = vmatprep.subr.bf16.mxu0 0
    %1966 = vmatpush1.bf16.msra.mxu0 0
    %1967 = vmatprep.subr.bf16.mxu0 0
    %1968 = vmatpush1.bf16.msra.mxu0 0
    %1969 = vmatprep.subr.bf16.mxu0 0
    %1970 = vmatpush1.bf16.msra.mxu0 0
    %1971 = vmatprep.subr.bf16.mxu0 0
    %1972 = vmatpush1.bf16.msra.mxu0 0
    %1973 = vmatprep.subr.bf16.mxu0 0
    %1974 = vmatpush1.bf16.msra.mxu0 0
    %1975 = vmatprep.subr.bf16.mxu0 0
    %1976 = vmatpush1.bf16.msra.mxu0 0
    %1977 = vmatprep.mubr.bf16.mxu0 0
    %1978 = vmatmul.mubr.bf16.gmra.mrb[0].mxu0 %v1890
    %v1979 = vpop.f32.mrb[0].mxu0
    %v1980 = vadd.f32 %v1895, %v1979
    %v1981 = vpop.f32.mrb[0].mxu0
    %v1982 = vpop.f32.mrb[0].mxu0
    %v1983 = vpop.f32.mrb[0].mxu0
    %1984 = vdwg.mxu0
    %vm1985 = vcmp.gt.f32.partialorder %v1980, 0.0
    %v1986 = vmin.f32 %v1980, 0.0
    %v1987 = vmul.f32 %v1986, 1.442695
    %v1988 = vpow.pop %v1987
    %v1989 = vsub.f32 %v1988, 1.0
    %v1990 = vsel %vm1985, %v1980, %v1989
    %v1991 = vpack.c.bf16 %v1809, %v1808
    %v1992 = vpack.c.bf16 %v1990, %v1990
    %vm1993 = vcmask 56320
    %v1995 = vsel %vm1993, %v1991, 0
    %vm1997 = vcmask 1042432
    %vm1998 = vcmask 1043456
    %v1999 = vsel %vm1997, 4294967295, 65535
    %v2000 = vsel %vm1998, %v1999, 0
    %v2002 = vand.u32 %v1992, %v2000
    %2004 = vmatprep.subr.bf16.mxu0 0
    %2005 = vmatpush1.bf16.msra.mxu0 %v2002
    %2006 = vmatprep.subr.bf16.mxu0 0
    %2007 = vmatpush1.bf16.msra.mxu0 0
    %2008 = vmatprep.subr.bf16.mxu0 0
    %2009 = vmatpush1.bf16.msra.mxu0 0
    %2010 = vmatprep.subr.bf16.mxu0 0
    %2011 = vmatpush1.bf16.msra.mxu0 0
    %2012 = vmatprep.subr.bf16.mxu0 0
    %2013 = vmatpush1.bf16.msra.mxu0 0
    %2014 = vmatprep.subr.bf16.mxu0 0
    %2015 = vmatpush1.bf16.msra.mxu0 0
    %2016 = vmatprep.subr.bf16.mxu0 0
    %2017 = vmatpush1.bf16.msra.mxu0 0
    %2018 = vmatprep.subr.bf16.mxu0 0
    %2019 = vmatpush1.bf16.msra.mxu0 0
    %2020 = vmatprep.subr.bf16.mxu0 0
    %2021 = vmatpush1.bf16.msra.mxu0 0
    %2022 = vmatprep.subr.bf16.mxu0 0
    %2023 = vmatpush1.bf16.msra.mxu0 0
    %2024 = vmatprep.subr.bf16.mxu0 0
    %2025 = vmatpush1.bf16.msra.mxu0 0
    %2026 = vmatprep.subr.bf16.mxu0 0
    %2027 = vmatpush1.bf16.msra.mxu0 0
    %2028 = vmatprep.subr.bf16.mxu0 0
    %2029 = vmatpush1.bf16.msra.mxu0 0
    %2030 = vmatprep.subr.bf16.mxu0 0
    %2031 = vmatpush1.bf16.msra.mxu0 0
    %2032 = vmatprep.subr.bf16.mxu0 0
    %2033 = vmatpush1.bf16.msra.mxu0 0
    %2034 = vmatprep.subr.bf16.mxu0 0
    %2035 = vmatpush1.bf16.msra.mxu0 0
    %2036 = vmatprep.mubr.bf16.mxu0 0
    %2037 = vmatmul.mubr.bf16.gmra.mrb[0].mxu0 %v1995
    %v2038 = vpop.f32.mrb[0].mxu0
    %v2039 = vadd.f32 0.0, %v2038
    %v2040 = vpop.f32.mrb[0].mxu0
    %v2041 = vpop.f32.mrb[0].mxu0
    %v2042 = vadd.f32 0.0, %v2041
    %v2043 = vpop.f32.mrb[0].mxu0
    %2044 = vdwg.mxu0
    %v2045 = vld [vmem:[#allocation5] sm:$0xf]
    %v2046 = vld [vmem:[#allocation5 + $0x4] sm:$0xf]
    %v2047 = vld [vmem:[#allocation5 + $0x8] sm:$0xf]
    %v2048 = vld [vmem:[#allocation5 + $0xc] sm:$0xf]
    %v2049 = vld [vmem:[#allocation5 + $0x10] sm:$0xf]
    %v2050 = vld [vmem:[#allocation5 + $0x14] sm:$0xf]
    %v2051 = vld [vmem:[#allocation5 + $0x18] sm:$0xf]
    %v2052 = vld [vmem:[#allocation5 + $0x1c] sm:$0xf]
    %v2053 = vld [vmem:[#allocation5 + $0x20] sm:$0xf]
    %v2054 = vld [vmem:[#allocation5 + $0x24] sm:$0xf]
    %v2055 = vld [vmem:[#allocation5 + $0x28] sm:$0xf]
    %v2056 = vld [vmem:[#allocation5 + $0x2c] sm:$0xf]
    %v2057 = vld [vmem:[#allocation5 + $0x30] sm:$0xf]
    %v2058 = vld [vmem:[#allocation5 + $0x34] sm:$0xf]
    %v2059 = vld [vmem:[#allocation5 + $0x38] sm:$0xf]
    %v2060 = vld [vmem:[#allocation5 + $0x3c] sm:$0xf]
    %v2061 = vld [vmem:[%s6] sm:$0x1]
    %v2062 = vpack.c.bf16 %v2042, %v2039
    %v2064 = vlaneseq
    %v2065 = vshrl.u32 %v2064, 7
    %v2066 = vsub.s32 0, %v2065
    %v2067 = vrot.slane %v2061, %v2066
    %v2085 = vunpack.c.l.b16 %v2045
    %v2086 = vunpack.c.l.b16 %v2046
    %v2087 = vunpack.c.l.b16 %v2047
    %v2088 = vunpack.c.l.b16 %v2048
    %v2089 = vunpack.c.l.b16 %v2049
    %v2090 = vunpack.c.l.b16 %v2050
    %v2091 = vunpack.c.l.b16 %v2051
    %v2092 = vunpack.c.l.b16 %v2052
    %v2093 = vunpack.c.l.b16 %v2053
    %v2094 = vunpack.c.l.b16 %v2054
    %v2095 = vunpack.c.l.b16 %v2055
    %v2096 = vunpack.c.l.b16 %v2056
    %v2097 = vunpack.c.l.b16 %v2057
    %v2098 = vunpack.c.l.b16 %v2058
    %v2099 = vunpack.c.l.b16 %v2059
    %v2100 = vunpack.c.l.b16 %v2060
    %v2101 = vpack.c.b16 %v2086, %v2085
    %v2102 = vpack.c.b16 %v2088, %v2087
    %v2103 = vpack.c.b16 %v2090, %v2089
    %v2104 = vpack.c.b16 %v2092, %v2091
    %v2105 = vpack.c.b16 %v2094, %v2093
    %v2106 = vpack.c.b16 %v2096, %v2095
    %v2107 = vpack.c.b16 %v2098, %v2097
    %v2108 = vpack.c.b16 %v2100, %v2099
    %2117 = vmatprep.subr.bf16.mxu0 0
    %2118 = vmatpush1.bf16.msra.mxu0 %v2101
    %2119 = vmatprep.subr.bf16.mxu0 0
    %2120 = vmatpush1.bf16.msra.mxu0 %v2102
    %2121 = vmatprep.subr.bf16.mxu0 0
    %2122 = vmatpush1.bf16.msra.mxu0 %v2103
    %2123 = vmatprep.subr.bf16.mxu0 0
    %2124 = vmatpush1.bf16.msra.mxu0 %v2104
    %2125 = vmatprep.subr.bf16.mxu0 0
    %2126 = vmatpush1.bf16.msra.mxu0 %v2105
    %2127 = vmatprep.subr.bf16.mxu0 0
    %2128 = vmatpush1.bf16.msra.mxu0 %v2106
    %2129 = vmatprep.subr.bf16.mxu0 0
    %2130 = vmatpush1.bf16.msra.mxu0 %v2107
    %2131 = vmatprep.subr.bf16.mxu0 0
    %2132 = vmatpush1.bf16.msra.mxu0 %v2108
    %2133 = vmatprep.subr.bf16.mxu0 0
    %2134 = vmatpush1.bf16.msra.mxu0 0
    %2135 = vmatprep.subr.bf16.mxu0 0
    %2136 = vmatpush1.bf16.msra.mxu0 0
    %2137 = vmatprep.subr.bf16.mxu0 0
    %2138 = vmatpush1.bf16.msra.mxu0 0
    %2139 = vmatprep.subr.bf16.mxu0 0
    %2140 = vmatpush1.bf16.msra.mxu0 0
    %2141 = vmatprep.subr.bf16.mxu0 0
    %2142 = vmatpush1.bf16.msra.mxu0 0
    %2143 = vmatprep.subr.bf16.mxu0 0
    %2144 = vmatpush1.bf16.msra.mxu0 0
    %2145 = vmatprep.subr.bf16.mxu0 0
    %2146 = vmatpush1.bf16.msra.mxu0 0
    %2147 = vmatprep.subr.bf16.mxu0 0
    %2148 = vmatpush1.bf16.msra.mxu0 0
    %2149 = vmatprep.mubr.bf16.mxu0 0
    %2150 = vmatmul.mubr.bf16.gmra.mrb[0].mxu0 %v2062
    %v2151 = vpop.f32.mrb[0].mxu0
    %v2152 = vadd.f32 %v2067, %v2151
    %v2153 = vpop.f32.mrb[0].mxu0
    %v2154 = vpop.f32.mrb[0].mxu0
    %v2155 = vadd.f32 %v2067, %v2154
    %v2156 = vpop.f32.mrb[0].mxu0
    %2157 = vdwg.mxu0
    %vm2158 = vcmp.gt.f32.partialorder %v2152, 0.0
    %vm2159 = vcmp.gt.f32.partialorder %v2155, 0.0
    %v2160 = vmin.f32 %v2152, 0.0
    %v2161 = vmin.f32 %v2155, 0.0
    %v2162 = vmul.f32 %v2160, 1.442695
    %v2163 = vpow.pop %v2162
    %v2164 = vmul.f32 %v2161, 1.442695
    %v2165 = vpow.pop %v2164
    %v2166 = vsub.f32 %v2163, 1.0
    %v2167 = vsub.f32 %v2165, 1.0
    %v2168 = vsel %vm2158, %v2152, %v2166
    %v2169 = vsel %vm2159, %v2155, %v2167
    %v2170 = vadd.f32 %v2168, %v1524
    %v2171 = vadd.f32 %v2169, %v1525
    %2172 = vst [vmem:[#allocation7] sm:$0xff] %v2170
    %2173 = vst [vmem:[#allocation7 + $0x8] sm:$0x7] %v2171
    %v2174 = vpack.c.bf16 %v1332, %v1331
    %v2175 = vpack.c.bf16 %v2171, %v2170
    %v2177 = vsel %vm1821, %v2174, 0
    %v2180 = vand.u32 %v2175, %v1828
    %2182 = vmatprep.subr.bf16.mxu0 0
    %2183 = vmatpush1.bf16.msra.mxu0 %v2180
    %2184 = vmatprep.subr.bf16.mxu0 0
    %2185 = vmatpush1.bf16.msra.mxu0 0
    %2186 = vmatprep.subr.bf16.mxu0 0
    %2187 = vmatpush1.bf16.msra.mxu0 0
    %2188 = vmatprep.subr.bf16.mxu0 0
    %2189 = vmatpush1.bf16.msra.mxu0 0
    %2190 = vmatprep.subr.bf16.mxu0 0
    %2191 = vmatpush1.bf16.msra.mxu0 0
    %2192 = vmatprep.subr.bf16.mxu0 0
    %2193 = vmatpush1.bf16.msra.mxu0 0
    %2194 = vmatprep.subr.bf16.mxu0 0
    %2195 = vmatpush1.bf16.msra.mxu0 0
    %2196 = vmatprep.subr.bf16.mxu0 0
    %2197 = vmatpush1.bf16.msra.mxu0 0
    %2198 = vmatprep.subr.bf16.mxu0 0
    %2199 = vmatpush1.bf16.msra.mxu0 0
    %2200 = vmatprep.subr.bf16.mxu0 0
    %2201 = vmatpush1.bf16.msra.mxu0 0
    %2202 = vmatprep.subr.bf16.mxu0 0
    %2203 = vmatpush1.bf16.msra.mxu0 0
    %2204 = vmatprep.subr.bf16.mxu0 0
    %2205 = vmatpush1.bf16.msra.mxu0 0
    %2206 = vmatprep.subr.bf16.mxu0 0
    %2207 = vmatpush1.bf16.msra.mxu0 0
    %2208 = vmatprep.subr.bf16.mxu0 0
    %2209 = vmatpush1.bf16.msra.mxu0 0
    %2210 = vmatprep.subr.bf16.mxu0 0
    %2211 = vmatpush1.bf16.msra.mxu0 0
    %2212 = vmatprep.subr.bf16.mxu0 0
    %2213 = vmatpush1.bf16.msra.mxu0 0
    %2214 = vmatprep.mubr.bf16.mxu0 0
    %2215 = vmatmul.mubr.bf16.gmra.mrb[0].mxu0 %v2177
    %v2216 = vpop.f32.mrb[0].mxu0
    %v2217 = vadd.f32 0.0, %v2216
    %v2218 = vpop.f32.mrb[0].mxu0
    %v2219 = vpop.f32.mrb[0].mxu0
    %v2220 = vadd.f32 0.0, %v2219
    %v2221 = vpop.f32.mrb[0].mxu0
    %2222 = vdwg.mxu0
    %s2223 = scalar_lea.vmem [#allocation5], 64
    %v2224 = vld [vmem:[%s2223] sm:$0xf]
    %v2225 = vld [vmem:[%s2223 + $0x4] sm:$0xf]
    %v2226 = vld [vmem:[%s2223 + $0x8] sm:$0xf]
    %v2227 = vld [vmem:[%s2223 + $0xc] sm:$0xf]
    %v2228 = vld [vmem:[%s2223 + $0x10] sm:$0xf]
    %v2229 = vld [vmem:[%s2223 + $0x14] sm:$0xf]
    %v2230 = vld [vmem:[%s2223 + $0x18] sm:$0xf]
    %v2231 = vld [vmem:[%s2223 + $0x1c] sm:$0xf]
    %v2232 = vld [vmem:[%s2223 + $0x20] sm:$0xf]
    %v2233 = vld [vmem:[%s2223 + $0x24] sm:$0xf]
    %v2234 = vld [vmem:[%s2223 + $0x28] sm:$0xf]
    %v2235 = vld [vmem:[%s2223 + $0x2c] sm:$0xf]
    %v2236 = vld [vmem:[%s2223 + $0x30] sm:$0xf]
    %v2237 = vld [vmem:[%s2223 + $0x34] sm:$0xf]
    %v2238 = vld [vmem:[%s2223 + $0x38] sm:$0xf]
    %v2239 = vld [vmem:[%s2223 + $0x3c] sm:$0xf]
    %s2240 = scalar_lea.vmem %s6, 1
    %v2241 = vld [vmem:[%s2240] sm:$0x1]
    %v2242 = vpack.c.bf16 %v2220, %v2217
    %v2244 = vlaneseq
    %v2245 = vshrl.u32 %v2244, 7
    %v2246 = vsub.s32 0, %v2245
    %v2247 = vrot.slane %v2241, %v2246
    %v2265 = vunpack.c.l.b16 %v2224
    %v2266 = vunpack.c.l.b16 %v2225
    %v2267 = vunpack.c.l.b16 %v2226
    %v2268 = vunpack.c.l.b16 %v2227
    %v2269 = vunpack.c.l.b16 %v2228
    %v2270 = vunpack.c.l.b16 %v2229
    %v2271 = vunpack.c.l.b16 %v2230
    %v2272 = vunpack.c.l.b16 %v2231
    %v2273 = vunpack.c.l.b16 %v2232
    %v2274 = vunpack.c.l.b16 %v2233
    %v2275 = vunpack.c.l.b16 %v2234
    %v2276 = vunpack.c.l.b16 %v2235
    %v2277 = vunpack.c.l.b16 %v2236
    %v2278 = vunpack.c.l.b16 %v2237
    %v2279 = vunpack.c.l.b16 %v2238
    %v2280 = vunpack.c.l.b16 %v2239
    %v2281 = vpack.c.b16 %v2266, %v2265
    %v2282 = vpack.c.b16 %v2268, %v2267
    %v2283 = vpack.c.b16 %v2270, %v2269
    %v2284 = vpack.c.b16 %v2272, %v2271
    %v2285 = vpack.c.b16 %v2274, %v2273
    %v2286 = vpack.c.b16 %v2276, %v2275
    %v2287 = vpack.c.b16 %v2278, %v2277
    %v2288 = vpack.c.b16 %v2280, %v2279
    %2297 = vmatprep.subr.bf16.mxu0 0
    %2298 = vmatpush1.bf16.msra.mxu0 %v2281
    %2299 = vmatprep.subr.bf16.mxu0 0
    %2300 = vmatpush1.bf16.msra.mxu0 %v2282
    %2301 = vmatprep.subr.bf16.mxu0 0
    %2302 = vmatpush1.bf16.msra.mxu0 %v2283
    %2303 = vmatprep.subr.bf16.mxu0 0
    %2304 = vmatpush1.bf16.msra.mxu0 %v2284
    %2305 = vmatprep.subr.bf16.mxu0 0
    %2306 = vmatpush1.bf16.msra.mxu0 %v2285
    %2307 = vmatprep.subr.bf16.mxu0 0
    %2308 = vmatpush1.bf16.msra.mxu0 %v2286
    %2309 = vmatprep.subr.bf16.mxu0 0
    %2310 = vmatpush1.bf16.msra.mxu0 %v2287
    %2311 = vmatprep.subr.bf16.mxu0 0
    %2312 = vmatpush1.bf16.msra.mxu0 %v2288
    %2313 = vmatprep.subr.bf16.mxu0 0
    %2314 = vmatpush1.bf16.msra.mxu0 0
    %2315 = vmatprep.subr.bf16.mxu0 0
    %2316 = vmatpush1.bf16.msra.mxu0 0
    %2317 = vmatprep.subr.bf16.mxu0 0
    %2318 = vmatpush1.bf16.msra.mxu0 0
    %2319 = vmatprep.subr.bf16.mxu0 0
    %2320 = vmatpush1.bf16.msra.mxu0 0
    %2321 = vmatprep.subr.bf16.mxu0 0
    %2322 = vmatpush1.bf16.msra.mxu0 0
    %2323 = vmatprep.subr.bf16.mxu0 0
    %2324 = vmatpush1.bf16.msra.mxu0 0
    %2325 = vmatprep.subr.bf16.mxu0 0
    %2326 = vmatpush1.bf16.msra.mxu0 0
    %2327 = vmatprep.subr.bf16.mxu0 0
    %2328 = vmatpush1.bf16.msra.mxu0 0
    %2329 = vmatprep.mubr.bf16.mxu0 0
    %2330 = vmatmul.mubr.bf16.gmra.mrb[0].mxu0 %v2242
    %v2331 = vpop.f32.mrb[0].mxu0
    %v2332 = vadd.f32 %v2247, %v2331
    %v2333 = vpop.f32.mrb[0].mxu0
    %v2334 = vpop.f32.mrb[0].mxu0
    %v2335 = vadd.f32 %v2247, %v2334
    %v2336 = vpop.f32.mrb[0].mxu0
    %2337 = vdwg.mxu0
    %vm2338 = vcmp.gt.f32.partialorder %v2332, 0.0
    %vm2339 = vcmp.gt.f32.partialorder %v2335, 0.0
    %v2340 = vmin.f32 %v2332, 0.0
    %v2341 = vmin.f32 %v2335, 0.0
    %v2342 = vmul.f32 %v2340, 1.442695
    %v2343 = vpow.pop %v2342
    %v2344 = vmul.f32 %v2341, 1.442695
    %v2345 = vpow.pop %v2344
    %v2346 = vsub.f32 %v2343, 1.0
    %v2347 = vsub.f32 %v2345, 1.0
    %v2348 = vsel %vm2338, %v2332, %v2346
    %v2349 = vsel %vm2339, %v2335, %v2347
    %v2350 = vadd.f32 %v2348, %v924
    %v2351 = vadd.f32 %v2349, %v925
    %2352 = vst [vmem:[#allocation8] sm:$0xff] %v2350
    %2353 = vst [vmem:[#allocation8 + $0x8] sm:$0x3f] %v2351
    %v2354 = vpack.c.bf16 %v736, %v735
    %v2355 = vpack.c.bf16 %v2351, %v2350
    %v2357 = vsel %vm1339, %v2354, 0
    %v2360 = vsel %vm1352, %v2355, 0
    %2362 = vmatprep.subr.bf16.mxu0 0
    %2363 = vmatpush1.bf16.msra.mxu0 %v2360
    %2364 = vmatprep.subr.bf16.mxu0 0
    %2365 = vmatpush1.bf16.msra.mxu0 0
    %2366 = vmatprep.subr.bf16.mxu0 0
    %2367 = vmatpush1.bf16.msra.mxu0 0
    %2368 = vmatprep.subr.bf16.mxu0 0
    %2369 = vmatpush1.bf16.msra.mxu0 0
    %2370 = vmatprep.subr.bf16.mxu0 0
    %2371 = vmatpush1.bf16.msra.mxu0 0
    %2372 = vmatprep.subr.bf16.mxu0 0
    %2373 = vmatpush1.bf16.msra.mxu0 0
    %2374 = vmatprep.subr.bf16.mxu0 0
    %2375 = vmatpush1.bf16.msra.mxu0 0
    %2376 = vmatprep.subr.bf16.mxu0 0
    %2377 = vmatpush1.bf16.msra.mxu0 0
    %2378 = vmatprep.subr.bf16.mxu0 0
    %2379 = vmatpush1.bf16.msra.mxu0 0
    %2380 = vmatprep.subr.bf16.mxu0 0
    %2381 = vmatpush1.bf16.msra.mxu0 0
    %2382 = vmatprep.subr.bf16.mxu0 0
    %2383 = vmatpush1.bf16.msra.mxu0 0
    %2384 = vmatprep.subr.bf16.mxu0 0
    %2385 = vmatpush1.bf16.msra.mxu0 0
    %2386 = vmatprep.subr.bf16.mxu0 0
    %2387 = vmatpush1.bf16.msra.mxu0 0
    %2388 = vmatprep.subr.bf16.mxu0 0
    %2389 = vmatpush1.bf16.msra.mxu0 0
    %2390 = vmatprep.subr.bf16.mxu0 0
    %2391 = vmatpush1.bf16.msra.mxu0 0
    %2392 = vmatprep.subr.bf16.mxu0 0
    %2393 = vmatpush1.bf16.msra.mxu0 0
    %2394 = vmatprep.mubr.bf16.mxu0 0
    %2395 = vmatmul.mubr.bf16.gmra.mrb[0].mxu0 %v2357
    %v2396 = vpop.f32.mrb[0].mxu0
    %v2397 = vadd.f32 0.0, %v2396
    %v2398 = vpop.f32.mrb[0].mxu0
    %v2399 = vpop.f32.mrb[0].mxu0
    %v2400 = vadd.f32 0.0, %v2399
    %v2401 = vpop.f32.mrb[0].mxu0
    %2402 = vdwg.mxu0
    %s2403 = scalar_lea.vmem [#allocation5], 128
    %v2404 = vld [vmem:[%s2403] sm:$0xf]
    %v2405 = vld [vmem:[%s2403 + $0x4] sm:$0xf]
    %v2406 = vld [vmem:[%s2403 + $0x8] sm:$0xf]
    %v2407 = vld [vmem:[%s2403 + $0xc] sm:$0xf]
    %v2408 = vld [vmem:[%s2403 + $0x10] sm:$0xf]
    %v2409 = vld [vmem:[%s2403 + $0x14] sm:$0xf]
    %v2410 = vld [vmem:[%s2403 + $0x18] sm:$0xf]
    %v2411 = vld [vmem:[%s2403 + $0x1c] sm:$0xf]
    %v2412 = vld [vmem:[%s2403 + $0x20] sm:$0xf]
    %v2413 = vld [vmem:[%s2403 + $0x24] sm:$0xf]
    %v2414 = vld [vmem:[%s2403 + $0x28] sm:$0xf]
    %v2415 = vld [vmem:[%s2403 + $0x2c] sm:$0xf]
    %v2416 = vld [vmem:[%s2403 + $0x30] sm:$0xf]
    %v2417 = vld [vmem:[%s2403 + $0x34] sm:$0xf]
    %v2418 = vld [vmem:[%s2403 + $0x38] sm:$0xf]
    %v2419 = vld [vmem:[%s2403 + $0x3c] sm:$0xf]
    %s2420 = scalar_lea.vmem %s6, 2
    %v2421 = vld [vmem:[%s2420] sm:$0x1]
    %v2422 = vpack.c.bf16 %v2400, %v2397
    %v2424 = vlaneseq
    %v2425 = vshrl.u32 %v2424, 7
    %v2426 = vsub.s32 0, %v2425
    %v2427 = vrot.slane %v2421, %v2426
    %v2445 = vunpack.c.l.b16 %v2404
    %v2446 = vunpack.c.l.b16 %v2405
    %v2447 = vunpack.c.l.b16 %v2406
    %v2448 = vunpack.c.l.b16 %v2407
    %v2449 = vunpack.c.l.b16 %v2408
    %v2450 = vunpack.c.l.b16 %v2409
    %v2451 = vunpack.c.l.b16 %v2410
    %v2452 = vunpack.c.l.b16 %v2411
    %v2453 = vunpack.c.l.b16 %v2412
    %v2454 = vunpack.c.l.b16 %v2413
    %v2455 = vunpack.c.l.b16 %v2414
    %v2456 = vunpack.c.l.b16 %v2415
    %v2457 = vunpack.c.l.b16 %v2416
    %v2458 = vunpack.c.l.b16 %v2417
    %v2459 = vunpack.c.l.b16 %v2418
    %v2460 = vunpack.c.l.b16 %v2419
    %v2461 = vpack.c.b16 %v2446, %v2445
    %v2462 = vpack.c.b16 %v2448, %v2447
    %v2463 = vpack.c.b16 %v2450, %v2449
    %v2464 = vpack.c.b16 %v2452, %v2451
    %v2465 = vpack.c.b16 %v2454, %v2453
    %v2466 = vpack.c.b16 %v2456, %v2455
    %v2467 = vpack.c.b16 %v2458, %v2457
    %v2468 = vpack.c.b16 %v2460, %v2459
    %2477 = vmatprep.subr.bf16.mxu0 0
    %2478 = vmatpush1.bf16.msra.mxu0 %v2461
    %2479 = vmatprep.subr.bf16.mxu0 0
    %2480 = vmatpush1.bf16.msra.mxu0 %v2462
    %2481 = vmatprep.subr.bf16.mxu0 0
    %2482 = vmatpush1.bf16.msra.mxu0 %v2463
    %2483 = vmatprep.subr.bf16.mxu0 0
    %2484 = vmatpush1.bf16.msra.mxu0 %v2464
    %2485 = vmatprep.subr.bf16.mxu0 0
    %2486 = vmatpush1.bf16.msra.mxu0 %v2465
    %2487 = vmatprep.subr.bf16.mxu0 0
    %2488 = vmatpush1.bf16.msra.mxu0 %v2466
    %2489 = vmatprep.subr.bf16.mxu0 0
    %2490 = vmatpush1.bf16.msra.mxu0 %v2467
    %2491 = vmatprep.subr.bf16.mxu0 0
    %2492 = vmatpush1.bf16.msra.mxu0 %v2468
    %2493 = vmatprep.subr.bf16.mxu0 0
    %2494 = vmatpush1.bf16.msra.mxu0 0
    %2495 = vmatprep.subr.bf16.mxu0 0
    %2496 = vmatpush1.bf16.msra.mxu0 0
    %2497 = vmatprep.subr.bf16.mxu0 0
    %2498 = vmatpush1.bf16.msra.mxu0 0
    %2499 = vmatprep.subr.bf16.mxu0 0
    %2500 = vmatpush1.bf16.msra.mxu0 0
    %2501 = vmatprep.subr.bf16.mxu0 0
    %2502 = vmatpush1.bf16.msra.mxu0 0
    %2503 = vmatprep.subr.bf16.mxu0 0
    %2504 = vmatpush1.bf16.msra.mxu0 0
    %2505 = vmatprep.subr.bf16.mxu0 0
    %2506 = vmatpush1.bf16.msra.mxu0 0
    %2507 = vmatprep.subr.bf16.mxu0 0
    %2508 = vmatpush1.bf16.msra.mxu0 0
    %2509 = vmatprep.mubr.bf16.mxu0 0
    %2510 = vmatmul.mubr.bf16.gmra.mrb[0].mxu0 %v2422
    %v2511 = vpop.f32.mrb[0].mxu0
    %v2512 = vadd.f32 %v2427, %v2511
    %v2513 = vpop.f32.mrb[0].mxu0
    %v2514 = vpop.f32.mrb[0].mxu0
    %v2515 = vadd.f32 %v2427, %v2514
    %v2516 = vpop.f32.mrb[0].mxu0
    %2517 = vdwg.mxu0
    %vm2518 = vcmp.gt.f32.partialorder %v2512, 0.0
    %vm2519 = vcmp.gt.f32.partialorder %v2515, 0.0
    %v2520 = vmin.f32 %v2512, 0.0
    %v2521 = vmin.f32 %v2515, 0.0
    %v2522 = vmul.f32 %v2520, 1.442695
    %v2523 = vpow.pop %v2522
    %v2524 = vmul.f32 %v2521, 1.442695
    %v2525 = vpow.pop %v2524
    %v2526 = vsub.f32 %v2523, 1.0
    %v2527 = vsub.f32 %v2525, 1.0
    %v2528 = vsel %vm2518, %v2512, %v2526
    %v2529 = vsel %vm2519, %v2515, %v2527
    %v2530 = vadd.f32 %v2528, %v193
    %v2531 = vadd.f32 %v2529, %v194
    %2532 = vst [vmem:[#allocation10] sm:$0xff] %v2530
    %2533 = vst [vmem:[#allocation10 + $0x8] sm:$0xff] %v2531
    %v2534 = vadd.f32 %v2530, %v68
    %v2535 = vadd.f32 %v2531, %v69
    %2536 = vst [vmem:[#allocation11] sm:$0xff] %v2534
    %2537 = vst [vmem:[#allocation11 + $0x8] sm:$0xff] %v2535
    // Predicated region
    $region46: #{graph_unet_forward.1} parent=1 // pred_check
      _
    $region47: #{graph_unet_forward.1} parent=1 // pred_check_branch
      %2539 = sbr.rel (0) target = $region49
    $region48: #{graph_unet_forward.1} parent=1 // pred_region
      %s2541 = ssub.s32 256, 256
      %2542 = vsyncadd [#allocation4], %s2541
      %s2543 = sshll.u32 [#allocation7], 4
      %s2544 = int_to_ptr.vmem [resolvable:$true] %s2543
      %2549 = dma.vmem_to_hbm [thread:$0]  %s2544, 256, %s9, [#allocation4], 128, 128, 8
    $region49: #{graph_unet_forward.1} parent=1 // pred_fallthru
      _
    // Predicated region
    $region50: #{graph_unet_forward.1} parent=1 // pred_check
      _
    $region51: #{graph_unet_forward.1} parent=1 // pred_check_branch
      %2551 = sbr.rel (0) target = $region53
    $region52: #{graph_unet_forward.1} parent=1 // pred_region
      %s2553 = ssub.s32 256, 256
      %2554 = vsyncadd [#allocation9], %s2553
      %s2555 = sshll.u32 [#allocation8], 4
      %s2556 = int_to_ptr.vmem [resolvable:$true] %s2555
      %2561 = dma.vmem_to_hbm [thread:$0]  %s2556, 256, %s10, [#allocation9], 128, 128, 8
    $region53: #{graph_unet_forward.1} parent=1 // pred_fallthru
      _
    // Predicated region
    $region54: #{graph_unet_forward.1} parent=1 // pred_check
      _
    $region55: #{graph_unet_forward.1} parent=1 // pred_check_branch
      %2563 = sbr.rel (0) target = $region57
    $region56: #{graph_unet_forward.1} parent=1 // pred_region
      %s2565 = ssub.s32 256, 256
      %2566 = vsyncadd [#allocation9], %s2565
      %s2567 = sshll.u32 [#allocation10], 4
      %s2568 = int_to_ptr.vmem [resolvable:$true] %s2567
      %2573 = dma.vmem_to_hbm [thread:$0]  %s2568, 256, %s11, [#allocation9], 128, 128, 8
    $region57: #{graph_unet_forward.1} parent=1 // pred_fallthru
      _
    // Predicated region
    $region58: #{graph_unet_forward.1} parent=1 // pred_check
      _
    $region59: #{graph_unet_forward.1} parent=1 // pred_check_branch
      %2575 = sbr.rel (0) target = $region61
    $region60: #{graph_unet_forward.1} parent=1 // pred_region
      %s2577 = ssub.s32 256, 256
      %2578 = vsyncadd [#allocation12], %s2577
      %s2579 = sshll.u32 [#allocation11], 4
      %s2580 = int_to_ptr.vmem [resolvable:$true] %s2579
      %2585 = dma.vmem_to_hbm [thread:$0]  %s2580, 256, %s12, [#allocation12], 128, 128, 8
    $region61: #{graph_unet_forward.1} parent=1 // pred_fallthru
      _
    // Predicated region
    $region62: #{graph_unet_forward.1} parent=1 // pred_check
      _
    $region63: #{graph_unet_forward.1} parent=1 // pred_check_branch
      %2587 = sbr.rel (0) target = $region65
    $region64: #{graph_unet_forward.1} parent=1 // pred_region
      %2588 = dma.done [#allocation4], 256
    $region65: #{graph_unet_forward.1} parent=1 // pred_fallthru
      _
    // Predicated region
    $region66: #{graph_unet_forward.1} parent=1 // pred_check
      _
    $region67: #{graph_unet_forward.1} parent=1 // pred_check_branch
      %2590 = sbr.rel (0) target = $region69
    $region68: #{graph_unet_forward.1} parent=1 // pred_region
      %2591 = dma.done [#allocation9], 256
    $region69: #{graph_unet_forward.1} parent=1 // pred_fallthru
      _
    // Predicated region
    $region70: #{graph_unet_forward.1} parent=1 // pred_check
      _
    $region71: #{graph_unet_forward.1} parent=1 // pred_check_branch
      %2593 = sbr.rel (0) target = $region73
    $region72: #{graph_unet_forward.1} parent=1 // pred_region
      %2594 = dma.done [#allocation9], 256
    $region73: #{graph_unet_forward.1} parent=1 // pred_fallthru
      _
    // Predicated region
    $region74: #{graph_unet_forward.1} parent=1 // pred_check
      _
    $region75: #{graph_unet_forward.1} parent=1 // pred_check_branch
      %2596 = sbr.rel (0) target = $region77
    $region76: #{graph_unet_forward.1} parent=1 // pred_region
      %2597 = dma.done [#allocation12], 256
    $region77: #{graph_unet_forward.1} parent=1 // pred_fallthru
      _
    %2598 = vsyncpa [#allocation3], 1
    %2599 = vsyncpa [#allocation6], 1
    %2600 = vsyncpa [#allocation4], 1
    %2601 = vsyncpa [#allocation9], 1
    %2602 = vsyncpa [#allocation12], 1

</llo_original>
